<compile_context>
chip_gen: v7x
topology: tpu7x:2x2x1
jax: 0.10.0
libtpu: 0.0.40
codegen_flags: <defaults>
</compile_context>

<pallas_src>
import jax
import jax.numpy as jnp
from jax import lax
from jax.experimental import pallas as pl
from jax.experimental.pallas import tpu as pltpu

N_SUBSTEPS = 8  # fixed RK4 substeps per [vt[i], vt[i+1]] interval


def _round_up(x, m):
    return (x + m - 1) // m * m


def ode_block_forward(vt, x, g, w, b, *, n_substeps=N_SUBSTEPS):
    """ODEBlock.forward(vt, x): returns the trajectory of shape (len(vt), N, D)."""
    t_steps = vt.shape[0]
    n, d = x.shape
    out_dtype = x.dtype

    # Keep the time grid / step-size math in f32 even if the state is bf16.
    vt32 = vt.astype(jnp.float32)

    # Lane-dense padding: lane (last) dim -> multiple of 128, sublane -> multiple of 8.
    dp = _round_up(d, 128)
    np_ = _round_up(n, 8)
    x_p = jnp.pad(x, ((0, np_ - n), (0, dp - d)))
    g_p = jnp.pad(g, ((0, np_ - n), (0, np_ - n)))
    w_p = jnp.pad(w, ((0, dp - d), (0, dp - d)))
    b_p = jnp.pad(b, ((0, 0), (0, dp - d)))
    # Zero padding is exact: padded lanes of the state stay identically zero, and
    # padded rows never contaminate real rows (real rows of G are zero there).

    def kernel(vt_ref, x0_ref, g_ref, w_ref, b_ref, out_ref):
        # Hoist loop-invariant operands once per kernel: G/W as bf16 MXU inputs,
        # bias pre-broadcast to the full tile in f32 (done once, not per stage).
        g_bf = g_ref[...].astype(jnp.bfloat16)
        w_bf = w_ref[...].astype(jnp.bfloat16)
        bias = jnp.broadcast_to(b_ref[...].astype(jnp.float32), (np_, dp))

        def f(x_f32):
            # odefunc: X' = tanh(G @ X @ W + b)   (autonomous; t unused)
            gx = jnp.dot(g_bf, x_f32.astype(jnp.bfloat16),
                         preferred_element_type=jnp.float32)
            gxw = jnp.dot(gx.astype(jnp.bfloat16), w_bf,
                          preferred_element_type=jnp.float32)
            return jnp.tanh(gxw + bias)

        state0 = x0_ref[...].astype(jnp.float32)
        out_ref[0] = state0.astype(out_ref.dtype)   # odeint: trajectory starts at x0

        def interval(t, state):
            # Integrate from vt[t] to vt[t + 1] with n_substeps RK4 steps.
            t0 = vt_ref[t]
            t1 = vt_ref[t + 1]
            h = (t1 - t0) / jnp.float32(n_substeps)
            half_h = 0.5 * h
            h_over_6 = h / 6.0

            def rk4_step(_, xs):
                k1 = f(xs)
                k2 = f(xs + half_h * k1)
                k3 = f(xs + half_h * k2)
                k4 = f(xs + h * k3)
                return xs + h_over_6 * (k1 + 2.0 * (k2 + k3) + k4)

            # Short fixed trip count -> unroll for LLO scheduler visibility.
            state = lax.fori_loop(0, n_substeps, rk4_step, state, unroll=True)
            out_ref[t + 1] = state.astype(out_ref.dtype)
            return state

        lax.fori_loop(0, t_steps - 1, interval, state0)

    out_padded = pl.pallas_call(
        kernel,
        out_shape=jax.ShapeDtypeStruct((t_steps, np_, dp), out_dtype),
        grid_spec=pltpu.PrefetchScalarGridSpec(
            num_scalar_prefetch=1,          # vt lives in SMEM
            grid=(1,),                      # single invocation: time loop is in-kernel
            in_specs=[
                pl.BlockSpec((np_, dp), lambda i, vt: (0, 0)),    # x0
                pl.BlockSpec((np_, np_), lambda i, vt: (0, 0)),   # G
                pl.BlockSpec((dp, dp), lambda i, vt: (0, 0)),     # W
                pl.BlockSpec((1, dp), lambda i, vt: (0, 0)),      # b
            ],
            out_specs=pl.BlockSpec((t_steps, np_, dp), lambda i, vt: (0, 0, 0)),
        ),
        compiler_params=pltpu.CompilerParams(
            dimension_semantics=("arbitrary",)),
    )(vt32, x_p, g_p, w_p, b_p)

    # Strip the lane/sublane padding.
    return out_padded[:, :n, :d]


def _reference_trajectory(vt, x, g, w, b, n_substeps=N_SUBSTEPS):
    """Pure-JAX f32 fixed-step RK4 reference (same discretization)."""
    def f(xx):
        return jnp.tanh(g @ xx @ w + b)

    outs = [x]
    state = x
    for i in range(vt.shape[0] - 1):
        h = (vt[i + 1] - vt[i]) / n_substeps
        for _ in range(n_substeps):
            k1 = f(state)
            k2 = f(state + 0.5 * h * k1)
            k3 = f(state + 0.5 * h * k2)
            k4 = f(state + h * k3)
            state = state + (h / 6.0) * (k1 + 2.0 * k2 + 2.0 * k3 + k4)
        outs.append(state)
    return jnp.stack(outs)


if __name__ == "__main__":
    key = jax.random.PRNGKey(0)
    k1, k2, k3, k4 = jax.random.split(key, 4)

    N, D, T = 16, 32, 8                       # nodes, hidden dim, time points
    x = jax.random.normal(k1, (N, D), jnp.float32)
    vt = jnp.linspace(0.0, 1.0, T).astype(jnp.float32)

    # Deterministic graph operator: row-normalized random adjacency + self-loops.
    adj = (jax.random.uniform(k2, (N, N)) < 0.3).astype(jnp.float32)
    adj = adj + jnp.eye(N, dtype=jnp.float32)
    g = adj / jnp.sum(adj, axis=1, keepdims=True)

    w = jax.random.normal(k3, (D, D), jnp.float32) * (1.0 / jnp.sqrt(D))
    b = jax.random.normal(k4, (1, D), jnp.float32) * 0.1

    out = ode_block_forward(vt, x, g, w, b)
    out = jax.block_until_ready(out)

    assert out.shape == (T, N, D), out.shape
    # odeint semantics: trajectory starts at the initial condition.
    assert jnp.allclose(out[0], x, atol=1e-5), "out[0] must equal x0"
    assert bool(jnp.all(jnp.isfinite(out)))

    # Tolerance-check the bf16-MXU kernel against a pure f32 reference.
    ref = _reference_trajectory(vt, x, g, w, b)
    max_err = float(jnp.max(jnp.abs(out - ref)))
    assert max_err < 5e-2, f"kernel deviates from f32 reference: {max_err}"

    print("KERNEL_OK")
</pallas_src>

<mosaic_0001>
module attributes {stable_mosaic.version = 11 : i64} {
  func.func @kernel(%arg0: i32, %arg1: memref<8xf32, #tpu.memory_space<smem>>, %arg2: memref<16x128xf32, #tpu.memory_space<vmem>>, %arg3: memref<16x16xf32, #tpu.memory_space<vmem>>, %arg4: memref<128x128xf32, #tpu.memory_space<vmem>>, %arg5: memref<1x128xf32, #tpu.memory_space<vmem>>, %arg6: memref<8x16x128xf32, #tpu.memory_space<vmem>>) attributes {dimension_semantics = [#tpu.dimension_semantics<arbitrary>], iteration_bounds = array<i64: 1>, scalar_prefetch = 1 : i64, scratch_operands = 0 : i64, tpu.core_type = #tpu.core_type<tc>, window_params = [{pipeline_mode = #tpu.pipeline_mode<synchronous>, transform_indices = @transform_0, window_bounds = array<i64: 16, 128>}, {pipeline_mode = #tpu.pipeline_mode<synchronous>, transform_indices = @transform_1, window_bounds = array<i64: 16, 16>}, {pipeline_mode = #tpu.pipeline_mode<synchronous>, transform_indices = @transform_2, window_bounds = array<i64: 128, 128>}, {pipeline_mode = #tpu.pipeline_mode<synchronous>, transform_indices = @transform_3, window_bounds = array<i64: 1, 128>}, {pipeline_mode = #tpu.pipeline_mode<synchronous>, transform_indices = @transform_4, window_bounds = array<i64: 8, 16, 128>}]} {
    %c0 = arith.constant 0 : index
    %c0_0 = arith.constant 0 : index
    %0 = vector.load %arg3[%c0, %c0_0] : memref<16x16xf32, #tpu.memory_space<vmem>>, vector<16x16xf32>
    %1 = arith.truncf %0 : vector<16x16xf32> to vector<16x16xbf16>
    %c0_1 = arith.constant 0 : index
    %c0_2 = arith.constant 0 : index
    %2 = vector.load %arg4[%c0_1, %c0_2] : memref<128x128xf32, #tpu.memory_space<vmem>>, vector<128x128xf32>
    %3 = arith.truncf %2 : vector<128x128xf32> to vector<128x128xbf16>
    %c0_3 = arith.constant 0 : index
    %c0_4 = arith.constant 0 : index
    %4 = vector.load %arg5[%c0_3, %c0_4] : memref<1x128xf32, #tpu.memory_space<vmem>>, vector<1x128xf32>
    %5 = vector.shape_cast %4 : vector<1x128xf32> to vector<1x128xf32>
    %6 = vector.broadcast %5 : vector<1x128xf32> to vector<16x128xf32>
    %c0_5 = arith.constant 0 : index
    %c0_6 = arith.constant 0 : index
    %7 = vector.load %arg2[%c0_5, %c0_6] : memref<16x128xf32, #tpu.memory_space<vmem>>, vector<16x128xf32>
    %c0_7 = arith.constant 0 : index
    %c0_8 = arith.constant 0 : index
    %c0_9 = arith.constant 0 : index
    %8 = vector.load %arg6[%c0_7, %c0_8, %c0_9] : memref<8x16x128xf32, #tpu.memory_space<vmem>>, vector<1x16x128xf32>
    %9 = vector.shape_cast %8 : vector<1x16x128xf32> to vector<16x128xf32>
    %10 = vector.shape_cast %7 : vector<16x128xf32> to vector<1x16x128xf32>
    tpu.vector_store %arg6[%c0_7, %c0_8, %c0_9], %10 {strides = array<i32>} : memref<8x16x128xf32, #tpu.memory_space<vmem>>, vector<1x16x128xf32>,
    %c0_i32 = arith.constant 0 : i32
    %c7_i32 = arith.constant 7 : i32
    %11 = arith.addi %c0_i32, %c7_i32 : i32
    %c1_i32 = arith.constant 1 : i32
    %12 = scf.for %arg7 = %c0_i32 to %11 step %c1_i32 iter_args(%arg8 = %7) -> (vector<16x128xf32>)  : i32 {
      %13 = arith.index_cast %arg7 : i32 to index
      %14 = memref.load %arg1[%13] : memref<8xf32, #tpu.memory_space<smem>>
      %c1_i32_11 = arith.constant 1 : i32
      %15 = arith.addi %arg7, %c1_i32_11 : i32
      %16 = arith.index_cast %15 : i32 to index
      %17 = memref.load %arg1[%16] : memref<8xf32, #tpu.memory_space<smem>>
      %18 = arith.subf %17, %14 : f32
      %cst = arith.constant 8.000000e+00 : f32
      %19 = arith.divf %18, %cst : f32
      %cst_12 = arith.constant 5.000000e-01 : f32
      %20 = arith.mulf %cst_12, %19 : f32
      %cst_13 = arith.constant 6.000000e+00 : f32
      %21 = arith.divf %19, %cst_13 : f32
      %c0_i32_14 = arith.constant 0 : i32
      %22 = arith.truncf %arg8 : vector<16x128xf32> to vector<16x128xbf16>
      %cst_15 = arith.constant dense<0.000000e+00> : vector<16x128xf32>
      %23 = tpu.matmul %1, %22, %cst_15 {dimension_numbers = #tpu.dot_dimension_numbers<[1], [0], [0], [1], [0, 0, 1, 1], [], []>} : vector<16x16xbf16>, vector<16x128xbf16>, vector<16x128xf32> -> vector<16x128xf32>
      %24 = arith.truncf %23 : vector<16x128xf32> to vector<16x128xbf16>
      %cst_16 = arith.constant dense<0.000000e+00> : vector<16x128xf32>
      %25 = tpu.matmul %24, %3, %cst_16 {dimension_numbers = #tpu.dot_dimension_numbers<[1], [0], [0], [1], [0, 0, 1, 1], [], []>} : vector<16x128xbf16>, vector<128x128xbf16>, vector<16x128xf32> -> vector<16x128xf32>
      %26 = arith.addf %25, %6 : vector<16x128xf32>
      %27 = math.tanh %26 : vector<16x128xf32>
      %28 = vector.broadcast %20 : f32 to vector<16x128xf32>
      %29 = arith.mulf %28, %27 : vector<16x128xf32>
      %30 = arith.addf %arg8, %29 : vector<16x128xf32>
      %31 = arith.truncf %30 : vector<16x128xf32> to vector<16x128xbf16>
      %cst_17 = arith.constant dense<0.000000e+00> : vector<16x128xf32>
      %32 = tpu.matmul %1, %31, %cst_17 {dimension_numbers = #tpu.dot_dimension_numbers<[1], [0], [0], [1], [0, 0, 1, 1], [], []>} : vector<16x16xbf16>, vector<16x128xbf16>, vector<16x128xf32> -> vector<16x128xf32>
      %33 = arith.truncf %32 : vector<16x128xf32> to vector<16x128xbf16>
      %cst_18 = arith.constant dense<0.000000e+00> : vector<16x128xf32>
      %34 = tpu.matmul %33, %3, %cst_18 {dimension_numbers = #tpu.dot_dimension_numbers<[1], [0], [0], [1], [0, 0, 1, 1], [], []>} : vector<16x128xbf16>, vector<128x128xbf16>, vector<16x128xf32> -> vector<16x128xf32>
      %35 = arith.addf %34, %6 : vector<16x128xf32>
      %36 = math.tanh %35 : vector<16x128xf32>
      %37 = vector.broadcast %20 : f32 to vector<16x128xf32>
      %38 = arith.mulf %37, %36 : vector<16x128xf32>
      %39 = arith.addf %arg8, %38 : vector<16x128xf32>
      %40 = arith.truncf %39 : vector<16x128xf32> to vector<16x128xbf16>
      %cst_19 = arith.constant dense<0.000000e+00> : vector<16x128xf32>
      %41 = tpu.matmul %1, %40, %cst_19 {dimension_numbers = #tpu.dot_dimension_numbers<[1], [0], [0], [1], [0, 0, 1, 1], [], []>} : vector<16x16xbf16>, vector<16x128xbf16>, vector<16x128xf32> -> vector<16x128xf32>
      %42 = arith.truncf %41 : vector<16x128xf32> to vector<16x128xbf16>
      %cst_20 = arith.constant dense<0.000000e+00> : vector<16x128xf32>
      %43 = tpu.matmul %42, %3, %cst_20 {dimension_numbers = #tpu.dot_dimension_numbers<[1], [0], [0], [1], [0, 0, 1, 1], [], []>} : vector<16x128xbf16>, vector<128x128xbf16>, vector<16x128xf32> -> vector<16x128xf32>
      %44 = arith.addf %43, %6 : vector<16x128xf32>
      %45 = math.tanh %44 : vector<16x128xf32>
      %46 = vector.broadcast %19 : f32 to vector<16x128xf32>
      %47 = arith.mulf %46, %45 : vector<16x128xf32>
      %48 = arith.addf %arg8, %47 : vector<16x128xf32>
      %49 = arith.truncf %48 : vector<16x128xf32> to vector<16x128xbf16>
      %cst_21 = arith.constant dense<0.000000e+00> : vector<16x128xf32>
      %50 = tpu.matmul %1, %49, %cst_21 {dimension_numbers = #tpu.dot_dimension_numbers<[1], [0], [0], [1], [0, 0, 1, 1], [], []>} : vector<16x16xbf16>, vector<16x128xbf16>, vector<16x128xf32> -> vector<16x128xf32>
      %51 = arith.truncf %50 : vector<16x128xf32> to vector<16x128xbf16>
      %cst_22 = arith.constant dense<0.000000e+00> : vector<16x128xf32>
      %52 = tpu.matmul %51, %3, %cst_22 {dimension_numbers = #tpu.dot_dimension_numbers<[1], [0], [0], [1], [0, 0, 1, 1], [], []>} : vector<16x128xbf16>, vector<128x128xbf16>, vector<16x128xf32> -> vector<16x128xf32>
      %53 = arith.addf %52, %6 : vector<16x128xf32>
      %54 = math.tanh %53 : vector<16x128xf32>
      %55 = arith.addf %36, %45 : vector<16x128xf32>
      %cst_23 = arith.constant 2.000000e+00 : f32
      %56 = vector.broadcast %cst_23 : f32 to vector<16x128xf32>
      %57 = arith.mulf %56, %55 : vector<16x128xf32>
      %58 = arith.addf %27, %57 : vector<16x128xf32>
      %59 = arith.addf %58, %54 : vector<16x128xf32>
      %60 = vector.broadcast %21 : f32 to vector<16x128xf32>
      %61 = arith.mulf %60, %59 : vector<16x128xf32>
      %62 = arith.addf %arg8, %61 : vector<16x128xf32>
      %c1_i32_24 = arith.constant 1 : i32
      %63 = arith.truncf %62 : vector<16x128xf32> to vector<16x128xbf16>
      %cst_25 = arith.constant dense<0.000000e+00> : vector<16x128xf32>
      %64 = tpu.matmul %1, %63, %cst_25 {dimension_numbers = #tpu.dot_dimension_numbers<[1], [0], [0], [1], [0, 0, 1, 1], [], []>} : vector<16x16xbf16>, vector<16x128xbf16>, vector<16x128xf32> -> vector<16x128xf32>
      %65 = arith.truncf %64 : vector<16x128xf32> to vector<16x128xbf16>
      %cst_26 = arith.constant dense<0.000000e+00> : vector<16x128xf32>
      %66 = tpu.matmul %65, %3, %cst_26 {dimension_numbers = #tpu.dot_dimension_numbers<[1], [0], [0], [1], [0, 0, 1, 1], [], []>} : vector<16x128xbf16>, vector<128x128xbf16>, vector<16x128xf32> -> vector<16x128xf32>
      %67 = arith.addf %66, %6 : vector<16x128xf32>
      %68 = math.tanh %67 : vector<16x128xf32>
      %69 = vector.broadcast %20 : f32 to vector<16x128xf32>
      %70 = arith.mulf %69, %68 : vector<16x128xf32>
      %71 = arith.addf %62, %70 : vector<16x128xf32>
      %72 = arith.truncf %71 : vector<16x128xf32> to vector<16x128xbf16>
      %cst_27 = arith.constant dense<0.000000e+00> : vector<16x128xf32>
      %73 = tpu.matmul %1, %72, %cst_27 {dimension_numbers = #tpu.dot_dimension_numbers<[1], [0], [0], [1], [0, 0, 1, 1], [], []>} : vector<16x16xbf16>, vector<16x128xbf16>, vector<16x128xf32> -> vector<16x128xf32>
      %74 = arith.truncf %73 : vector<16x128xf32> to vector<16x128xbf16>
      %cst_28 = arith.constant dense<0.000000e+00> : vector<16x128xf32>
      %75 = tpu.matmul %74, %3, %cst_28 {dimension_numbers = #tpu.dot_dimension_numbers<[1], [0], [0], [1], [0, 0, 1, 1], [], []>} : vector<16x128xbf16>, vector<128x128xbf16>, vector<16x128xf32> -> vector<16x128xf32>
      %76 = arith.addf %75, %6 : vector<16x128xf32>
      %77 = math.tanh %76 : vector<16x128xf32>
      %78 = vector.broadcast %20 : f32 to vector<16x128xf32>
      %79 = arith.mulf %78, %77 : vector<16x128xf32>
      %80 = arith.addf %62, %79 : vector<16x128xf32>
      %81 = arith.truncf %80 : vector<16x128xf32> to vector<16x128xbf16>
      %cst_29 = arith.constant dense<0.000000e+00> : vector<16x128xf32>
      %82 = tpu.matmul %1, %81, %cst_29 {dimension_numbers = #tpu.dot_dimension_numbers<[1], [0], [0], [1], [0, 0, 1, 1], [], []>} : vector<16x16xbf16>, vector<16x128xbf16>, vector<16x128xf32> -> vector<16x128xf32>
      %83 = arith.truncf %82 : vector<16x128xf32> to vector<16x128xbf16>
      %cst_30 = arith.constant dense<0.000000e+00> : vector<16x128xf32>
      %84 = tpu.matmul %83, %3, %cst_30 {dimension_numbers = #tpu.dot_dimension_numbers<[1], [0], [0], [1], [0, 0, 1, 1], [], []>} : vector<16x128xbf16>, vector<128x128xbf16>, vector<16x128xf32> -> vector<16x128xf32>
      %85 = arith.addf %84, %6 : vector<16x128xf32>
      %86 = math.tanh %85 : vector<16x128xf32>
      %87 = vector.broadcast %19 : f32 to vector<16x128xf32>
      %88 = arith.mulf %87, %86 : vector<16x128xf32>
      %89 = arith.addf %62, %88 : vector<16x128xf32>
      %90 = arith.truncf %89 : vector<16x128xf32> to vector<16x128xbf16>
      %cst_31 = arith.constant dense<0.000000e+00> : vector<16x128xf32>
      %91 = tpu.matmul %1, %90, %cst_31 {dimension_numbers = #tpu.dot_dimension_numbers<[1], [0], [0], [1], [0, 0, 1, 1], [], []>} : vector<16x16xbf16>, vector<16x128xbf16>, vector<16x128xf32> -> vector<16x128xf32>
      %92 = arith.truncf %91 : vector<16x128xf32> to vector<16x128xbf16>
      %cst_32 = arith.constant dense<0.000000e+00> : vector<16x128xf32>
      %93 = tpu.matmul %92, %3, %cst_32 {dimension_numbers = #tpu.dot_dimension_numbers<[1], [0], [0], [1], [0, 0, 1, 1], [], []>} : vector<16x128xbf16>, vector<128x128xbf16>, vector<16x128xf32> -> vector<16x128xf32>
      %94 = arith.addf %93, %6 : vector<16x128xf32>
      %95 = math.tanh %94 : vector<16x128xf32>
      %96 = arith.addf %77, %86 : vector<16x128xf32>
      %cst_33 = arith.constant 2.000000e+00 : f32
      %97 = vector.broadcast %cst_33 : f32 to vector<16x128xf32>
      %98 = arith.mulf %97, %96 : vector<16x128xf32>
      %99 = arith.addf %68, %98 : vector<16x128xf32>
      %100 = arith.addf %99, %95 : vector<16x128xf32>
      %101 = vector.broadcast %21 : f32 to vector<16x128xf32>
      %102 = arith.mulf %101, %100 : vector<16x128xf32>
      %103 = arith.addf %62, %102 : vector<16x128xf32>
      %c2_i32 = arith.constant 2 : i32
      %104 = arith.truncf %103 : vector<16x128xf32> to vector<16x128xbf16>
      %cst_34 = arith.constant dense<0.000000e+00> : vector<16x128xf32>
      %105 = tpu.matmul %1, %104, %cst_34 {dimension_numbers = #tpu.dot_dimension_numbers<[1], [0], [0], [1], [0, 0, 1, 1], [], []>} : vector<16x16xbf16>, vector<16x128xbf16>, vector<16x128xf32> -> vector<16x128xf32>
      %106 = arith.truncf %105 : vector<16x128xf32> to vector<16x128xbf16>
      %cst_35 = arith.constant dense<0.000000e+00> : vector<16x128xf32>
      %107 = tpu.matmul %106, %3, %cst_35 {dimension_numbers = #tpu.dot_dimension_numbers<[1], [0], [0], [1], [0, 0, 1, 1], [], []>} : vector<16x128xbf16>, vector<128x128xbf16>, vector<16x128xf32> -> vector<16x128xf32>
      %108 = arith.addf %107, %6 : vector<16x128xf32>
      %109 = math.tanh %108 : vector<16x128xf32>
      %110 = vector.broadcast %20 : f32 to vector<16x128xf32>
      %111 = arith.mulf %110, %109 : vector<16x128xf32>
      %112 = arith.addf %103, %111 : vector<16x128xf32>
      %113 = arith.truncf %112 : vector<16x128xf32> to vector<16x128xbf16>
      %cst_36 = arith.constant dense<0.000000e+00> : vector<16x128xf32>
      %114 = tpu.matmul %1, %113, %cst_36 {dimension_numbers = #tpu.dot_dimension_numbers<[1], [0], [0], [1], [0, 0, 1, 1], [], []>} : vector<16x16xbf16>, vector<16x128xbf16>, vector<16x128xf32> -> vector<16x128xf32>
      %115 = arith.truncf %114 : vector<16x128xf32> to vector<16x128xbf16>
      %cst_37 = arith.constant dense<0.000000e+00> : vector<16x128xf32>
      %116 = tpu.matmul %115, %3, %cst_37 {dimension_numbers = #tpu.dot_dimension_numbers<[1], [0], [0], [1], [0, 0, 1, 1], [], []>} : vector<16x128xbf16>, vector<128x128xbf16>, vector<16x128xf32> -> vector<16x128xf32>
      %117 = arith.addf %116, %6 : vector<16x128xf32>
      %118 = math.tanh %117 : vector<16x128xf32>
      %119 = vector.broadcast %20 : f32 to vector<16x128xf32>
      %120 = arith.mulf %119, %118 : vector<16x128xf32>
      %121 = arith.addf %103, %120 : vector<16x128xf32>
      %122 = arith.truncf %121 : vector<16x128xf32> to vector<16x128xbf16>
      %cst_38 = arith.constant dense<0.000000e+00> : vector<16x128xf32>
      %123 = tpu.matmul %1, %122, %cst_38 {dimension_numbers = #tpu.dot_dimension_numbers<[1], [0], [0], [1], [0, 0, 1, 1], [], []>} : vector<16x16xbf16>, vector<16x128xbf16>, vector<16x128xf32> -> vector<16x128xf32>
      %124 = arith.truncf %123 : vector<16x128xf32> to vector<16x128xbf16>
      %cst_39 = arith.constant dense<0.000000e+00> : vector<16x128xf32>
      %125 = tpu.matmul %124, %3, %cst_39 {dimension_numbers = #tpu.dot_dimension_numbers<[1], [0], [0], [1], [0, 0, 1, 1], [], []>} : vector<16x128xbf16>, vector<128x128xbf16>, vector<16x128xf32> -> vector<16x128xf32>
      %126 = arith.addf %125, %6 : vector<16x128xf32>
      %127 = math.tanh %126 : vector<16x128xf32>
      %128 = vector.broadcast %19 : f32 to vector<16x128xf32>
      %129 = arith.mulf %128, %127 : vector<16x128xf32>
      %130 = arith.addf %103, %129 : vector<16x128xf32>
      %131 = arith.truncf %130 : vector<16x128xf32> to vector<16x128xbf16>
      %cst_40 = arith.constant dense<0.000000e+00> : vector<16x128xf32>
      %132 = tpu.matmul %1, %131, %cst_40 {dimension_numbers = #tpu.dot_dimension_numbers<[1], [0], [0], [1], [0, 0, 1, 1], [], []>} : vector<16x16xbf16>, vector<16x128xbf16>, vector<16x128xf32> -> vector<16x128xf32>
      %133 = arith.truncf %132 : vector<16x128xf32> to vector<16x128xbf16>
      %cst_41 = arith.constant dense<0.000000e+00> : vector<16x128xf32>
      %134 = tpu.matmul %133, %3, %cst_41 {dimension_numbers = #tpu.dot_dimension_numbers<[1], [0], [0], [1], [0, 0, 1, 1], [], []>} : vector<16x128xbf16>, vector<128x128xbf16>, vector<16x128xf32> -> vector<16x128xf32>
      %135 = arith.addf %134, %6 : vector<16x128xf32>
      %136 = math.tanh %135 : vector<16x128xf32>
      %137 = arith.addf %118, %127 : vector<16x128xf32>
      %cst_42 = arith.constant 2.000000e+00 : f32
      %138 = vector.broadcast %cst_42 : f32 to vector<16x128xf32>
      %139 = arith.mulf %138, %137 : vector<16x128xf32>
      %140 = arith.addf %109, %139 : vector<16x128xf32>
      %141 = arith.addf %140, %136 : vector<16x128xf32>
      %142 = vector.broadcast %21 : f32 to vector<16x128xf32>
      %143 = arith.mulf %142, %141 : vector<16x128xf32>
      %144 = arith.addf %103, %143 : vector<16x128xf32>
      %c3_i32 = arith.constant 3 : i32
      %145 = arith.truncf %144 : vector<16x128xf32> to vector<16x128xbf16>
      %cst_43 = arith.constant dense<0.000000e+00> : vector<16x128xf32>
      %146 = tpu.matmul %1, %145, %cst_43 {dimension_numbers = #tpu.dot_dimension_numbers<[1], [0], [0], [1], [0, 0, 1, 1], [], []>} : vector<16x16xbf16>, vector<16x128xbf16>, vector<16x128xf32> -> vector<16x128xf32>
      %147 = arith.truncf %146 : vector<16x128xf32> to vector<16x128xbf16>
      %cst_44 = arith.constant dense<0.000000e+00> : vector<16x128xf32>
      %148 = tpu.matmul %147, %3, %cst_44 {dimension_numbers = #tpu.dot_dimension_numbers<[1], [0], [0], [1], [0, 0, 1, 1], [], []>} : vector<16x128xbf16>, vector<128x128xbf16>, vector<16x128xf32> -> vector<16x128xf32>
      %149 = arith.addf %148, %6 : vector<16x128xf32>
      %150 = math.tanh %149 : vector<16x128xf32>
      %151 = vector.broadcast %20 : f32 to vector<16x128xf32>
      %152 = arith.mulf %151, %150 : vector<16x128xf32>
      %153 = arith.addf %144, %152 : vector<16x128xf32>
      %154 = arith.truncf %153 : vector<16x128xf32> to vector<16x128xbf16>
      %cst_45 = arith.constant dense<0.000000e+00> : vector<16x128xf32>
      %155 = tpu.matmul %1, %154, %cst_45 {dimension_numbers = #tpu.dot_dimension_numbers<[1], [0], [0], [1], [0, 0, 1, 1], [], []>} : vector<16x16xbf16>, vector<16x128xbf16>, vector<16x128xf32> -> vector<16x128xf32>
      %156 = arith.truncf %155 : vector<16x128xf32> to vector<16x128xbf16>
      %cst_46 = arith.constant dense<0.000000e+00> : vector<16x128xf32>
      %157 = tpu.matmul %156, %3, %cst_46 {dimension_numbers = #tpu.dot_dimension_numbers<[1], [0], [0], [1], [0, 0, 1, 1], [], []>} : vector<16x128xbf16>, vector<128x128xbf16>, vector<16x128xf32> -> vector<16x128xf32>
      %158 = arith.addf %157, %6 : vector<16x128xf32>
      %159 = math.tanh %158 : vector<16x128xf32>
      %160 = vector.broadcast %20 : f32 to vector<16x128xf32>
      %161 = arith.mulf %160, %159 : vector<16x128xf32>
      %162 = arith.addf %144, %161 : vector<16x128xf32>
      %163 = arith.truncf %162 : vector<16x128xf32> to vector<16x128xbf16>
      %cst_47 = arith.constant dense<0.000000e+00> : vector<16x128xf32>
      %164 = tpu.matmul %1, %163, %cst_47 {dimension_numbers = #tpu.dot_dimension_numbers<[1], [0], [0], [1], [0, 0, 1, 1], [], []>} : vector<16x16xbf16>, vector<16x128xbf16>, vector<16x128xf32> -> vector<16x128xf32>
      %165 = arith.truncf %164 : vector<16x128xf32> to vector<16x128xbf16>
      %cst_48 = arith.constant dense<0.000000e+00> : vector<16x128xf32>
      %166 = tpu.matmul %165, %3, %cst_48 {dimension_numbers = #tpu.dot_dimension_numbers<[1], [0], [0], [1], [0, 0, 1, 1], [], []>} : vector<16x128xbf16>, vector<128x128xbf16>, vector<16x128xf32> -> vector<16x128xf32>
      %167 = arith.addf %166, %6 : vector<16x128xf32>
      %168 = math.tanh %167 : vector<16x128xf32>
      %169 = vector.broadcast %19 : f32 to vector<16x128xf32>
      %170 = arith.mulf %169, %168 : vector<16x128xf32>
      %171 = arith.addf %144, %170 : vector<16x128xf32>
      %172 = arith.truncf %171 : vector<16x128xf32> to vector<16x128xbf16>
      %cst_49 = arith.constant dense<0.000000e+00> : vector<16x128xf32>
      %173 = tpu.matmul %1, %172, %cst_49 {dimension_numbers = #tpu.dot_dimension_numbers<[1], [0], [0], [1], [0, 0, 1, 1], [], []>} : vector<16x16xbf16>, vector<16x128xbf16>, vector<16x128xf32> -> vector<16x128xf32>
      %174 = arith.truncf %173 : vector<16x128xf32> to vector<16x128xbf16>
      %cst_50 = arith.constant dense<0.000000e+00> : vector<16x128xf32>
      %175 = tpu.matmul %174, %3, %cst_50 {dimension_numbers = #tpu.dot_dimension_numbers<[1], [0], [0], [1], [0, 0, 1, 1], [], []>} : vector<16x128xbf16>, vector<128x128xbf16>, vector<16x128xf32> -> vector<16x128xf32>
      %176 = arith.addf %175, %6 : vector<16x128xf32>
      %177 = math.tanh %176 : vector<16x128xf32>
      %178 = arith.addf %159, %168 : vector<16x128xf32>
      %cst_51 = arith.constant 2.000000e+00 : f32
      %179 = vector.broadcast %cst_51 : f32 to vector<16x128xf32>
      %180 = arith.mulf %179, %178 : vector<16x128xf32>
      %181 = arith.addf %150, %180 : vector<16x128xf32>
      %182 = arith.addf %181, %177 : vector<16x128xf32>
      %183 = vector.broadcast %21 : f32 to vector<16x128xf32>
      %184 = arith.mulf %183, %182 : vector<16x128xf32>
      %185 = arith.addf %144, %184 : vector<16x128xf32>
      %c4_i32 = arith.constant 4 : i32
      %186 = arith.truncf %185 : vector<16x128xf32> to vector<16x128xbf16>
      %cst_52 = arith.constant dense<0.000000e+00> : vector<16x128xf32>
      %187 = tpu.matmul %1, %186, %cst_52 {dimension_numbers = #tpu.dot_dimension_numbers<[1], [0], [0], [1], [0, 0, 1, 1], [], []>} : vector<16x16xbf16>, vector<16x128xbf16>, vector<16x128xf32> -> vector<16x128xf32>
      %188 = arith.truncf %187 : vector<16x128xf32> to vector<16x128xbf16>
      %cst_53 = arith.constant dense<0.000000e+00> : vector<16x128xf32>
      %189 = tpu.matmul %188, %3, %cst_53 {dimension_numbers = #tpu.dot_dimension_numbers<[1], [0], [0], [1], [0, 0, 1, 1], [], []>} : vector<16x128xbf16>, vector<128x128xbf16>, vector<16x128xf32> -> vector<16x128xf32>
      %190 = arith.addf %189, %6 : vector<16x128xf32>
      %191 = math.tanh %190 : vector<16x128xf32>
      %192 = vector.broadcast %20 : f32 to vector<16x128xf32>
      %193 = arith.mulf %192, %191 : vector<16x128xf32>
      %194 = arith.addf %185, %193 : vector<16x128xf32>
      %195 = arith.truncf %194 : vector<16x128xf32> to vector<16x128xbf16>
      %cst_54 = arith.constant dense<0.000000e+00> : vector<16x128xf32>
      %196 = tpu.matmul %1, %195, %cst_54 {dimension_numbers = #tpu.dot_dimension_numbers<[1], [0], [0], [1], [0, 0, 1, 1], [], []>} : vector<16x16xbf16>, vector<16x128xbf16>, vector<16x128xf32> -> vector<16x128xf32>
      %197 = arith.truncf %196 : vector<16x128xf32> to vector<16x128xbf16>
      %cst_55 = arith.constant dense<0.000000e+00> : vector<16x128xf32>
      %198 = tpu.matmul %197, %3, %cst_55 {dimension_numbers = #tpu.dot_dimension_numbers<[1], [0], [0], [1], [0, 0, 1, 1], [], []>} : vector<16x128xbf16>, vector<128x128xbf16>, vector<16x128xf32> -> vector<16x128xf32>
      %199 = arith.addf %198, %6 : vector<16x128xf32>
      %200 = math.tanh %199 : vector<16x128xf32>
      %201 = vector.broadcast %20 : f32 to vector<16x128xf32>
      %202 = arith.mulf %201, %200 : vector<16x128xf32>
      %203 = arith.addf %185, %202 : vector<16x128xf32>
      %204 = arith.truncf %203 : vector<16x128xf32> to vector<16x128xbf16>
      %cst_56 = arith.constant dense<0.000000e+00> : vector<16x128xf32>
      %205 = tpu.matmul %1, %204, %cst_56 {dimension_numbers = #tpu.dot_dimension_numbers<[1], [0], [0], [1], [0, 0, 1, 1], [], []>} : vector<16x16xbf16>, vector<16x128xbf16>, vector<16x128xf32> -> vector<16x128xf32>
      %206 = arith.truncf %205 : vector<16x128xf32> to vector<16x128xbf16>
      %cst_57 = arith.constant dense<0.000000e+00> : vector<16x128xf32>
      %207 = tpu.matmul %206, %3, %cst_57 {dimension_numbers = #tpu.dot_dimension_numbers<[1], [0], [0], [1], [0, 0, 1, 1], [], []>} : vector<16x128xbf16>, vector<128x128xbf16>, vector<16x128xf32> -> vector<16x128xf32>
      %208 = arith.addf %207, %6 : vector<16x128xf32>
      %209 = math.tanh %208 : vector<16x128xf32>
      %210 = vector.broadcast %19 : f32 to vector<16x128xf32>
      %211 = arith.mulf %210, %209 : vector<16x128xf32>
      %212 = arith.addf %185, %211 : vector<16x128xf32>
      %213 = arith.truncf %212 : vector<16x128xf32> to vector<16x128xbf16>
      %cst_58 = arith.constant dense<0.000000e+00> : vector<16x128xf32>
      %214 = tpu.matmul %1, %213, %cst_58 {dimension_numbers = #tpu.dot_dimension_numbers<[1], [0], [0], [1], [0, 0, 1, 1], [], []>} : vector<16x16xbf16>, vector<16x128xbf16>, vector<16x128xf32> -> vector<16x128xf32>
      %215 = arith.truncf %214 : vector<16x128xf32> to vector<16x128xbf16>
      %cst_59 = arith.constant dense<0.000000e+00> : vector<16x128xf32>
      %216 = tpu.matmul %215, %3, %cst_59 {dimension_numbers = #tpu.dot_dimension_numbers<[1], [0], [0], [1], [0, 0, 1, 1], [], []>} : vector<16x128xbf16>, vector<128x128xbf16>, vector<16x128xf32> -> vector<16x128xf32>
      %217 = arith.addf %216, %6 : vector<16x128xf32>
      %218 = math.tanh %217 : vector<16x128xf32>
      %219 = arith.addf %200, %209 : vector<16x128xf32>
      %cst_60 = arith.constant 2.000000e+00 : f32
      %220 = vector.broadcast %cst_60 : f32 to vector<16x128xf32>
      %221 = arith.mulf %220, %219 : vector<16x128xf32>
      %222 = arith.addf %191, %221 : vector<16x128xf32>
      %223 = arith.addf %222, %218 : vector<16x128xf32>
      %224 = vector.broadcast %21 : f32 to vector<16x128xf32>
      %225 = arith.mulf %224, %223 : vector<16x128xf32>
      %226 = arith.addf %185, %225 : vector<16x128xf32>
      %c5_i32 = arith.constant 5 : i32
      %227 = arith.truncf %226 : vector<16x128xf32> to vector<16x128xbf16>
      %cst_61 = arith.constant dense<0.000000e+00> : vector<16x128xf32>
      %228 = tpu.matmul %1, %227, %cst_61 {dimension_numbers = #tpu.dot_dimension_numbers<[1], [0], [0], [1], [0, 0, 1, 1], [], []>} : vector<16x16xbf16>, vector<16x128xbf16>, vector<16x128xf32> -> vector<16x128xf32>
      %229 = arith.truncf %228 : vector<16x128xf32> to vector<16x128xbf16>
      %cst_62 = arith.constant dense<0.000000e+00> : vector<16x128xf32>
      %230 = tpu.matmul %229, %3, %cst_62 {dimension_numbers = #tpu.dot_dimension_numbers<[1], [0], [0], [1], [0, 0, 1, 1], [], []>} : vector<16x128xbf16>, vector<128x128xbf16>, vector<16x128xf32> -> vector<16x128xf32>
      %231 = arith.addf %230, %6 : vector<16x128xf32>
      %232 = math.tanh %231 : vector<16x128xf32>
      %233 = vector.broadcast %20 : f32 to vector<16x128xf32>
      %234 = arith.mulf %233, %232 : vector<16x128xf32>
      %235 = arith.addf %226, %234 : vector<16x128xf32>
      %236 = arith.truncf %235 : vector<16x128xf32> to vector<16x128xbf16>
      %cst_63 = arith.constant dense<0.000000e+00> : vector<16x128xf32>
      %237 = tpu.matmul %1, %236, %cst_63 {dimension_numbers = #tpu.dot_dimension_numbers<[1], [0], [0], [1], [0, 0, 1, 1], [], []>} : vector<16x16xbf16>, vector<16x128xbf16>, vector<16x128xf32> -> vector<16x128xf32>
      %238 = arith.truncf %237 : vector<16x128xf32> to vector<16x128xbf16>
      %cst_64 = arith.constant dense<0.000000e+00> : vector<16x128xf32>
      %239 = tpu.matmul %238, %3, %cst_64 {dimension_numbers = #tpu.dot_dimension_numbers<[1], [0], [0], [1], [0, 0, 1, 1], [], []>} : vector<16x128xbf16>, vector<128x128xbf16>, vector<16x128xf32> -> vector<16x128xf32>
      %240 = arith.addf %239, %6 : vector<16x128xf32>
      %241 = math.tanh %240 : vector<16x128xf32>
      %242 = vector.broadcast %20 : f32 to vector<16x128xf32>
      %243 = arith.mulf %242, %241 : vector<16x128xf32>
      %244 = arith.addf %226, %243 : vector<16x128xf32>
      %245 = arith.truncf %244 : vector<16x128xf32> to vector<16x128xbf16>
      %cst_65 = arith.constant dense<0.000000e+00> : vector<16x128xf32>
      %246 = tpu.matmul %1, %245, %cst_65 {dimension_numbers = #tpu.dot_dimension_numbers<[1], [0], [0], [1], [0, 0, 1, 1], [], []>} : vector<16x16xbf16>, vector<16x128xbf16>, vector<16x128xf32> -> vector<16x128xf32>
      %247 = arith.truncf %246 : vector<16x128xf32> to vector<16x128xbf16>
      %cst_66 = arith.constant dense<0.000000e+00> : vector<16x128xf32>
      %248 = tpu.matmul %247, %3, %cst_66 {dimension_numbers = #tpu.dot_dimension_numbers<[1], [0], [0], [1], [0, 0, 1, 1], [], []>} : vector<16x128xbf16>, vector<128x128xbf16>, vector<16x128xf32> -> vector<16x128xf32>
      %249 = arith.addf %248, %6 : vector<16x128xf32>
      %250 = math.tanh %249 : vector<16x128xf32>
      %251 = vector.broadcast %19 : f32 to vector<16x128xf32>
      %252 = arith.mulf %251, %250 : vector<16x128xf32>
      %253 = arith.addf %226, %252 : vector<16x128xf32>
      %254 = arith.truncf %253 : vector<16x128xf32> to vector<16x128xbf16>
      %cst_67 = arith.constant dense<0.000000e+00> : vector<16x128xf32>
      %255 = tpu.matmul %1, %254, %cst_67 {dimension_numbers = #tpu.dot_dimension_numbers<[1], [0], [0], [1], [0, 0, 1, 1], [], []>} : vector<16x16xbf16>, vector<16x128xbf16>, vector<16x128xf32> -> vector<16x128xf32>
      %256 = arith.truncf %255 : vector<16x128xf32> to vector<16x128xbf16>
      %cst_68 = arith.constant dense<0.000000e+00> : vector<16x128xf32>
      %257 = tpu.matmul %256, %3, %cst_68 {dimension_numbers = #tpu.dot_dimension_numbers<[1], [0], [0], [1], [0, 0, 1, 1], [], []>} : vector<16x128xbf16>, vector<128x128xbf16>, vector<16x128xf32> -> vector<16x128xf32>
      %258 = arith.addf %257, %6 : vector<16x128xf32>
      %259 = math.tanh %258 : vector<16x128xf32>
      %260 = arith.addf %241, %250 : vector<16x128xf32>
      %cst_69 = arith.constant 2.000000e+00 : f32
      %261 = vector.broadcast %cst_69 : f32 to vector<16x128xf32>
      %262 = arith.mulf %261, %260 : vector<16x128xf32>
      %263 = arith.addf %232, %262 : vector<16x128xf32>
      %264 = arith.addf %263, %259 : vector<16x128xf32>
      %265 = vector.broadcast %21 : f32 to vector<16x128xf32>
      %266 = arith.mulf %265, %264 : vector<16x128xf32>
      %267 = arith.addf %226, %266 : vector<16x128xf32>
      %c6_i32 = arith.constant 6 : i32
      %268 = arith.truncf %267 : vector<16x128xf32> to vector<16x128xbf16>
      %cst_70 = arith.constant dense<0.000000e+00> : vector<16x128xf32>
      %269 = tpu.matmul %1, %268, %cst_70 {dimension_numbers = #tpu.dot_dimension_numbers<[1], [0], [0], [1], [0, 0, 1, 1], [], []>} : vector<16x16xbf16>, vector<16x128xbf16>, vector<16x128xf32> -> vector<16x128xf32>
      %270 = arith.truncf %269 : vector<16x128xf32> to vector<16x128xbf16>
      %cst_71 = arith.constant dense<0.000000e+00> : vector<16x128xf32>
      %271 = tpu.matmul %270, %3, %cst_71 {dimension_numbers = #tpu.dot_dimension_numbers<[1], [0], [0], [1], [0, 0, 1, 1], [], []>} : vector<16x128xbf16>, vector<128x128xbf16>, vector<16x128xf32> -> vector<16x128xf32>
      %272 = arith.addf %271, %6 : vector<16x128xf32>
      %273 = math.tanh %272 : vector<16x128xf32>
      %274 = vector.broadcast %20 : f32 to vector<16x128xf32>
      %275 = arith.mulf %274, %273 : vector<16x128xf32>
      %276 = arith.addf %267, %275 : vector<16x128xf32>
      %277 = arith.truncf %276 : vector<16x128xf32> to vector<16x128xbf16>
      %cst_72 = arith.constant dense<0.000000e+00> : vector<16x128xf32>
      %278 = tpu.matmul %1, %277, %cst_72 {dimension_numbers = #tpu.dot_dimension_numbers<[1], [0], [0], [1], [0, 0, 1, 1], [], []>} : vector<16x16xbf16>, vector<16x128xbf16>, vector<16x128xf32> -> vector<16x128xf32>
      %279 = arith.truncf %278 : vector<16x128xf32> to vector<16x128xbf16>
      %cst_73 = arith.constant dense<0.000000e+00> : vector<16x128xf32>
      %280 = tpu.matmul %279, %3, %cst_73 {dimension_numbers = #tpu.dot_dimension_numbers<[1], [0], [0], [1], [0, 0, 1, 1], [], []>} : vector<16x128xbf16>, vector<128x128xbf16>, vector<16x128xf32> -> vector<16x128xf32>
      %281 = arith.addf %280, %6 : vector<16x128xf32>
      %282 = math.tanh %281 : vector<16x128xf32>
      %283 = vector.broadcast %20 : f32 to vector<16x128xf32>
      %284 = arith.mulf %283, %282 : vector<16x128xf32>
      %285 = arith.addf %267, %284 : vector<16x128xf32>
      %286 = arith.truncf %285 : vector<16x128xf32> to vector<16x128xbf16>
      %cst_74 = arith.constant dense<0.000000e+00> : vector<16x128xf32>
      %287 = tpu.matmul %1, %286, %cst_74 {dimension_numbers = #tpu.dot_dimension_numbers<[1], [0], [0], [1], [0, 0, 1, 1], [], []>} : vector<16x16xbf16>, vector<16x128xbf16>, vector<16x128xf32> -> vector<16x128xf32>
      %288 = arith.truncf %287 : vector<16x128xf32> to vector<16x128xbf16>
      %cst_75 = arith.constant dense<0.000000e+00> : vector<16x128xf32>
      %289 = tpu.matmul %288, %3, %cst_75 {dimension_numbers = #tpu.dot_dimension_numbers<[1], [0], [0], [1], [0, 0, 1, 1], [], []>} : vector<16x128xbf16>, vector<128x128xbf16>, vector<16x128xf32> -> vector<16x128xf32>
      %290 = arith.addf %289, %6 : vector<16x128xf32>
      %291 = math.tanh %290 : vector<16x128xf32>
      %292 = vector.broadcast %19 : f32 to vector<16x128xf32>
      %293 = arith.mulf %292, %291 : vector<16x128xf32>
      %294 = arith.addf %267, %293 : vector<16x128xf32>
      %295 = arith.truncf %294 : vector<16x128xf32> to vector<16x128xbf16>
      %cst_76 = arith.constant dense<0.000000e+00> : vector<16x128xf32>
      %296 = tpu.matmul %1, %295, %cst_76 {dimension_numbers = #tpu.dot_dimension_numbers<[1], [0], [0], [1], [0, 0, 1, 1], [], []>} : vector<16x16xbf16>, vector<16x128xbf16>, vector<16x128xf32> -> vector<16x128xf32>
      %297 = arith.truncf %296 : vector<16x128xf32> to vector<16x128xbf16>
      %cst_77 = arith.constant dense<0.000000e+00> : vector<16x128xf32>
      %298 = tpu.matmul %297, %3, %cst_77 {dimension_numbers = #tpu.dot_dimension_numbers<[1], [0], [0], [1], [0, 0, 1, 1], [], []>} : vector<16x128xbf16>, vector<128x128xbf16>, vector<16x128xf32> -> vector<16x128xf32>
      %299 = arith.addf %298, %6 : vector<16x128xf32>
      %300 = math.tanh %299 : vector<16x128xf32>
      %301 = arith.addf %282, %291 : vector<16x128xf32>
      %cst_78 = arith.constant 2.000000e+00 : f32
      %302 = vector.broadcast %cst_78 : f32 to vector<16x128xf32>
      %303 = arith.mulf %302, %301 : vector<16x128xf32>
      %304 = arith.addf %273, %303 : vector<16x128xf32>
      %305 = arith.addf %304, %300 : vector<16x128xf32>
      %306 = vector.broadcast %21 : f32 to vector<16x128xf32>
      %307 = arith.mulf %306, %305 : vector<16x128xf32>
      %308 = arith.addf %267, %307 : vector<16x128xf32>
      %c7_i32_79 = arith.constant 7 : i32
      %309 = arith.truncf %308 : vector<16x128xf32> to vector<16x128xbf16>
      %cst_80 = arith.constant dense<0.000000e+00> : vector<16x128xf32>
      %310 = tpu.matmul %1, %309, %cst_80 {dimension_numbers = #tpu.dot_dimension_numbers<[1], [0], [0], [1], [0, 0, 1, 1], [], []>} : vector<16x16xbf16>, vector<16x128xbf16>, vector<16x128xf32> -> vector<16x128xf32>
      %311 = arith.truncf %310 : vector<16x128xf32> to vector<16x128xbf16>
      %cst_81 = arith.constant dense<0.000000e+00> : vector<16x128xf32>
      %312 = tpu.matmul %311, %3, %cst_81 {dimension_numbers = #tpu.dot_dimension_numbers<[1], [0], [0], [1], [0, 0, 1, 1], [], []>} : vector<16x128xbf16>, vector<128x128xbf16>, vector<16x128xf32> -> vector<16x128xf32>
      %313 = arith.addf %312, %6 : vector<16x128xf32>
      %314 = math.tanh %313 : vector<16x128xf32>
      %315 = vector.broadcast %20 : f32 to vector<16x128xf32>
      %316 = arith.mulf %315, %314 : vector<16x128xf32>
      %317 = arith.addf %308, %316 : vector<16x128xf32>
      %318 = arith.truncf %317 : vector<16x128xf32> to vector<16x128xbf16>
      %cst_82 = arith.constant dense<0.000000e+00> : vector<16x128xf32>
      %319 = tpu.matmul %1, %318, %cst_82 {dimension_numbers = #tpu.dot_dimension_numbers<[1], [0], [0], [1], [0, 0, 1, 1], [], []>} : vector<16x16xbf16>, vector<16x128xbf16>, vector<16x128xf32> -> vector<16x128xf32>
      %320 = arith.truncf %319 : vector<16x128xf32> to vector<16x128xbf16>
      %cst_83 = arith.constant dense<0.000000e+00> : vector<16x128xf32>
      %321 = tpu.matmul %320, %3, %cst_83 {dimension_numbers = #tpu.dot_dimension_numbers<[1], [0], [0], [1], [0, 0, 1, 1], [], []>} : vector<16x128xbf16>, vector<128x128xbf16>, vector<16x128xf32> -> vector<16x128xf32>
      %322 = arith.addf %321, %6 : vector<16x128xf32>
      %323 = math.tanh %322 : vector<16x128xf32>
      %324 = vector.broadcast %20 : f32 to vector<16x128xf32>
      %325 = arith.mulf %324, %323 : vector<16x128xf32>
      %326 = arith.addf %308, %325 : vector<16x128xf32>
      %327 = arith.truncf %326 : vector<16x128xf32> to vector<16x128xbf16>
      %cst_84 = arith.constant dense<0.000000e+00> : vector<16x128xf32>
      %328 = tpu.matmul %1, %327, %cst_84 {dimension_numbers = #tpu.dot_dimension_numbers<[1], [0], [0], [1], [0, 0, 1, 1], [], []>} : vector<16x16xbf16>, vector<16x128xbf16>, vector<16x128xf32> -> vector<16x128xf32>
      %329 = arith.truncf %328 : vector<16x128xf32> to vector<16x128xbf16>
      %cst_85 = arith.constant dense<0.000000e+00> : vector<16x128xf32>
      %330 = tpu.matmul %329, %3, %cst_85 {dimension_numbers = #tpu.dot_dimension_numbers<[1], [0], [0], [1], [0, 0, 1, 1], [], []>} : vector<16x128xbf16>, vector<128x128xbf16>, vector<16x128xf32> -> vector<16x128xf32>
      %331 = arith.addf %330, %6 : vector<16x128xf32>
      %332 = math.tanh %331 : vector<16x128xf32>
      %333 = vector.broadcast %19 : f32 to vector<16x128xf32>
      %334 = arith.mulf %333, %332 : vector<16x128xf32>
      %335 = arith.addf %308, %334 : vector<16x128xf32>
      %336 = arith.truncf %335 : vector<16x128xf32> to vector<16x128xbf16>
      %cst_86 = arith.constant dense<0.000000e+00> : vector<16x128xf32>
      %337 = tpu.matmul %1, %336, %cst_86 {dimension_numbers = #tpu.dot_dimension_numbers<[1], [0], [0], [1], [0, 0, 1, 1], [], []>} : vector<16x16xbf16>, vector<16x128xbf16>, vector<16x128xf32> -> vector<16x128xf32>
      %338 = arith.truncf %337 : vector<16x128xf32> to vector<16x128xbf16>
      %cst_87 = arith.constant dense<0.000000e+00> : vector<16x128xf32>
      %339 = tpu.matmul %338, %3, %cst_87 {dimension_numbers = #tpu.dot_dimension_numbers<[1], [0], [0], [1], [0, 0, 1, 1], [], []>} : vector<16x128xbf16>, vector<128x128xbf16>, vector<16x128xf32> -> vector<16x128xf32>
      %340 = arith.addf %339, %6 : vector<16x128xf32>
      %341 = math.tanh %340 : vector<16x128xf32>
      %342 = arith.addf %323, %332 : vector<16x128xf32>
      %cst_88 = arith.constant 2.000000e+00 : f32
      %343 = vector.broadcast %cst_88 : f32 to vector<16x128xf32>
      %344 = arith.mulf %343, %342 : vector<16x128xf32>
      %345 = arith.addf %314, %344 : vector<16x128xf32>
      %346 = arith.addf %345, %341 : vector<16x128xf32>
      %347 = vector.broadcast %21 : f32 to vector<16x128xf32>
      %348 = arith.mulf %347, %346 : vector<16x128xf32>
      %349 = arith.addf %308, %348 : vector<16x128xf32>
      %c1_i32_89 = arith.constant 1 : i32
      %350 = arith.addi %arg7, %c1_i32_89 : i32
      %351 = arith.index_cast %350 : i32 to index
      %c0_90 = arith.constant 0 : index
      %c0_91 = arith.constant 0 : index
      %352 = vector.load %arg6[%351, %c0_90, %c0_91] : memref<8x16x128xf32, #tpu.memory_space<vmem>>, vector<1x16x128xf32>
      %353 = vector.shape_cast %352 : vector<1x16x128xf32> to vector<16x128xf32>
      %354 = vector.shape_cast %349 : vector<16x128xf32> to vector<1x16x128xf32>
      tpu.vector_store %arg6[%351, %c0_90, %c0_91], %354 {strides = array<i32>} : memref<8x16x128xf32, #tpu.memory_space<vmem>>, vector<1x16x128xf32>,
      scf.yield %349 : vector<16x128xf32>
    }
    %c7_i32_10 = arith.constant 7 : i32
    return
  }
  func.func @transform_0(%arg0: i32, %arg1: memref<8xf32, #tpu.memory_space<smem>>) -> (i32, i32) {
    %c0_i32 = arith.constant 0 : i32
    %c0_i32_0 = arith.constant 0 : i32
    %c0_i32_1 = arith.constant 0 : i32
    return %c0_i32, %c0_i32_0 : i32, i32
  }
  func.func @transform_1(%arg0: i32, %arg1: memref<8xf32, #tpu.memory_space<smem>>) -> (i32, i32) {
    %c0_i32 = arith.constant 0 : i32
    %c0_i32_0 = arith.constant 0 : i32
    %c0_i32_1 = arith.constant 0 : i32
    return %c0_i32, %c0_i32_0 : i32, i32
  }
  func.func @transform_2(%arg0: i32, %arg1: memref<8xf32, #tpu.memory_space<smem>>) -> (i32, i32) {
    %c0_i32 = arith.constant 0 : i32
    %c0_i32_0 = arith.constant 0 : i32
    %c0_i32_1 = arith.constant 0 : i32
    return %c0_i32, %c0_i32_0 : i32, i32
  }
  func.func @transform_3(%arg0: i32, %arg1: memref<8xf32, #tpu.memory_space<smem>>) -> (i32, i32) {
    %c0_i32 = arith.constant 0 : i32
    %c0_i32_0 = arith.constant 0 : i32
    %c0_i32_1 = arith.constant 0 : i32
    return %c0_i32, %c0_i32_0 : i32, i32
  }
  func.func @transform_4(%arg0: i32, %arg1: memref<8xf32, #tpu.memory_space<smem>>) -> (i32, i32, i32) {
    %c0_i32 = arith.constant 0 : i32
    %c0_i32_0 = arith.constant 0 : i32
    %c0_i32_1 = arith.constant 0 : i32
    %c0_i32_2 = arith.constant 0 : i32
    return %c0_i32, %c0_i32_0, %c0_i32_1 : i32, i32, i32
  }
}

</mosaic_0001>

<llo_original>
// kernel: tpu_custom_call.1
$region0: #{tpu_custom_call.1}
  #allocation0 [shape = 'u32[]', space=smem, size = 0x4, offset = 0x4, fixed_abs, tag = 'smem constant byte address 0x4 - core index']
  #allocation1 [shape = 'u32[144,128]{1,0:T(1,128)}', space=vmem, size = 0x12000, scoped, tag = 'internal scratch']
  #allocation2 [shape = 's32[1]{0}', space=sflag, size = 0x4, scoped, tag = 'scoped memory for tpu_custom_call.1']
  #allocation3 [shape = 'u8[512]{0}', space=smem, size = 0x200, scoped, tag = 'prefetched SMEM operand 0']
  %s0 = inlined_call_operand.hbm [shape: f32[8], index: 0, kind: input, shape index: {}]
  %s1 = inlined_call_operand.hbm [shape: f32[16,128], index: 1, kind: input, shape index: {}]
  %s2 = inlined_call_operand.hbm [shape: f32[16,16], index: 2, kind: input, shape index: {}]
  %s3 = inlined_call_operand.hbm [shape: f32[128,128], index: 3, kind: input, shape index: {}]
  %s4 = inlined_call_operand.vmem [shape: f32[1,128], index: 4, kind: input, shape index: {}]
  %s5 = inlined_call_operand.hbm [shape: f32[8,16,128], index: 5, kind: output, shape index: {}]
  %s6 = sld [smem:[#allocation0]]
  $region45: #{tpu_custom_call.1} parent=0
    _
  %s8 = ssub.s32 1, %s6
  %s9 = scalar_select 0, %s8, %s6
  %11 = dma.hbm_to_smem %s0, 16, [#allocation3], [#allocation2]
  %12 = dma.done [#allocation2], 16
  %13 = sfence
  $region1: #{tpu_custom_call.1} parent=0
    #allocation4 [shape = 'u8[8192]{0}', space=vmem, size = 0x2000, scoped, tag = 'input window, operand 1, single buffered']
    #allocation5 [shape = 's32[1]{0}', space=sflag, size = 0x4, scoped, tag = 'scoped memory for tpu_custom_call.1']
    #allocation6 [shape = 's32[1]{0}', space=sflag, size = 0x4, scoped, tag = 'scoped memory for tpu_custom_call.1']
    #allocation7 [shape = 'u8[8192]{0}', space=vmem, size = 0x2000, scoped, tag = 'input window, operand 2, single buffered']
    #allocation8 [shape = 's32[1]{0}', space=sflag, size = 0x4, scoped, tag = 'scoped memory for tpu_custom_call.1']
    #allocation9 [shape = 'u8[65536]{0}', space=vmem, size = 0x10000, scoped, tag = 'input window, operand 3, single buffered']
    #allocation10 [shape = 'u8[65536]{0}', space=vmem, size = 0x10000, scoped, tag = 'output window, operand 0, single buffered']
    %14 = vsyncpa [#allocation5], 0
    %15 = vsyncpa [#allocation8], 0
    %16 = vsyncpa [#allocation6], 0
    // Predicated region
    $region2: #{tpu_custom_call.1} parent=1 // pred_check
      _
    $region3: #{tpu_custom_call.1} parent=1 // pred_check_branch
      %18 = sbr.rel (0) target = $region5
    $region4: #{tpu_custom_call.1} parent=1 // pred_region
      %s20 = ssub.s32 256, 256
      %21 = vsyncadd [#allocation5], %s20
      %s22 = sshll.u32 [#allocation4], 4
      %s23 = int_to_ptr.vmem [resolvable:$true] %s22
      %28 = dma.hbm_to_vmem [thread:$0]  %s1, 256, %s23, [#allocation5], 128, 128, 8
    $region5: #{tpu_custom_call.1} parent=1 // pred_fallthru
      _
    // Predicated region
    $region6: #{tpu_custom_call.1} parent=1 // pred_check
      _
    $region7: #{tpu_custom_call.1} parent=1 // pred_check_branch
      %30 = sbr.rel (0) target = $region9
    $region8: #{tpu_custom_call.1} parent=1 // pred_region
      %s32 = ssub.s32 256, 256
      %33 = vsyncadd [#allocation8], %s32
      %s34 = sshll.u32 [#allocation7], 4
      %s35 = int_to_ptr.vmem [resolvable:$true] %s34
      %40 = dma.hbm_to_vmem [thread:$0]  %s2, 256, %s35, [#allocation8], 128, 128, 8
    $region9: #{tpu_custom_call.1} parent=1 // pred_fallthru
      _
    // Predicated region
    $region10: #{tpu_custom_call.1} parent=1 // pred_check
      _
    $region11: #{tpu_custom_call.1} parent=1 // pred_check_branch
      %42 = sbr.rel (0) target = $region13
    $region12: #{tpu_custom_call.1} parent=1 // pred_region
      %s44 = ssub.s32 2048, 2048
      %45 = vsyncadd [#allocation8], %s44
      %s46 = sshll.u32 [#allocation9], 4
      %s47 = int_to_ptr.vmem [resolvable:$true] %s46
      %52 = dma.hbm_to_vmem [thread:$0]  %s3, 2048, %s47, [#allocation8], 128, 128, 8
    $region13: #{tpu_custom_call.1} parent=1 // pred_fallthru
      _
    // Predicated region
    $region14: #{tpu_custom_call.1} parent=1 // pred_check
      _
    $region15: #{tpu_custom_call.1} parent=1 // pred_check_branch
      %54 = sbr.rel (0) target = $region17
    $region16: #{tpu_custom_call.1} parent=1 // pred_region
      _
    $region17: #{tpu_custom_call.1} parent=1 // pred_fallthru
      _
    // Predicated region
    $region18: #{tpu_custom_call.1} parent=1 // pred_check
      _
    $region19: #{tpu_custom_call.1} parent=1 // pred_check_branch
      %56 = sbr.rel (0) target = $region21
    $region20: #{tpu_custom_call.1} parent=1 // pred_region
      %57 = dma.done [#allocation5], 256
    $region21: #{tpu_custom_call.1} parent=1 // pred_fallthru
      _
    // Predicated region
    $region22: #{tpu_custom_call.1} parent=1 // pred_check
      _
    $region23: #{tpu_custom_call.1} parent=1 // pred_check_branch
      %59 = sbr.rel (0) target = $region25
    $region24: #{tpu_custom_call.1} parent=1 // pred_region
      %60 = dma.done [#allocation8], 256
    $region25: #{tpu_custom_call.1} parent=1 // pred_fallthru
      _
    // Predicated region
    $region26: #{tpu_custom_call.1} parent=1 // pred_check
      _
    $region27: #{tpu_custom_call.1} parent=1 // pred_check_branch
      %62 = sbr.rel (0) target = $region29
    $region28: #{tpu_custom_call.1} parent=1 // pred_region
      %63 = dma.done [#allocation8], 2048
    $region29: #{tpu_custom_call.1} parent=1 // pred_fallthru
      _
    %v65 = vld [vmem:[#allocation7] sm:$0xff]
    %v66 = vld [vmem:[#allocation7 + $0x8] sm:$0xff]
    %v67 = vpack.c.bf16 %v66, %v65
    %v68 = vld [vmem:[#allocation9] sm:$0xff]
    %v69 = vld [vmem:[#allocation9 + $0x8] sm:$0xff]
    %v70 = vld [vmem:[#allocation9 + $0x10] sm:$0xff]
    %v71 = vld [vmem:[#allocation9 + $0x18] sm:$0xff]
    %v72 = vld [vmem:[#allocation9 + $0x20] sm:$0xff]
    %v73 = vld [vmem:[#allocation9 + $0x28] sm:$0xff]
    %v74 = vld [vmem:[#allocation9 + $0x30] sm:$0xff]
    %v75 = vld [vmem:[#allocation9 + $0x38] sm:$0xff]
    %v76 = vld [vmem:[#allocation9 + $0x40] sm:$0xff]
    %v77 = vld [vmem:[#allocation9 + $0x48] sm:$0xff]
    %v78 = vld [vmem:[#allocation9 + $0x50] sm:$0xff]
    %v79 = vld [vmem:[#allocation9 + $0x58] sm:$0xff]
    %v80 = vld [vmem:[#allocation9 + $0x60] sm:$0xff]
    %v81 = vld [vmem:[#allocation9 + $0x68] sm:$0xff]
    %v82 = vld [vmem:[#allocation9 + $0x70] sm:$0xff]
    %v83 = vld [vmem:[#allocation9 + $0x78] sm:$0xff]
    %v84 = vpack.c.bf16 %v69, %v68
    %v85 = vpack.c.bf16 %v71, %v70
    %v86 = vpack.c.bf16 %v73, %v72
    %v87 = vpack.c.bf16 %v75, %v74
    %v88 = vpack.c.bf16 %v77, %v76
    %v89 = vpack.c.bf16 %v79, %v78
    %v90 = vpack.c.bf16 %v81, %v80
    %v91 = vpack.c.bf16 %v83, %v82
    %v92 = vld [vmem:[%s4] sm:$0x1]
    %v94 = vlaneseq
    %v95 = vshrl.u32 %v94, 7
    %v96 = vsub.s32 0, %v95
    %v97 = vrot.slane %v92, %v96
    %v99 = vld [vmem:[#allocation4] sm:$0xff]
    %v100 = vld [vmem:[#allocation4 + $0x8] sm:$0xff]
    %101 = vst [vmem:[#allocation10] sm:$0xff] %v99
    %102 = vst [vmem:[#allocation10 + $0x8] sm:$0xff] %v100
    loop: start=0, step=1, limit=7
    $region30: #{tpu_custom_call.1} parent=1 // loop_pre_header
      _
    $region31: #{tpu_custom_call.1} parent=1 // loop_header
      %s104 = sphi 0, %s108
      %p105 = scmp.ge.s32.totalorder %s104, 7
      %v109 = vphi %v99, %v3071
      %v110 = vphi %v100, %v3072
    $region32: #{tpu_custom_call.1} parent=1 // loop_header_branch
      %107 = sbr.rel (%p105) target = $region36
    $region33: #{tpu_custom_call.1} parent=1 // loop_body
      %s111 = sld [smem:[#allocation3 + %s104]]
      %s112 = sadd.s32 %s104, 1
      %s113 = sld [smem:[#allocation3 + %s112]]
      %s114 = ssub.f32 %s113, %s111
      %v115 = vrcp.pop 8.0
      %s116 = vtos %v115
      %s117 = smul.f32 %s114, %s116
      %s118 = smul.f32 %s117, 0.5
      %v119 = vrcp.pop 6.0
      %s120 = vtos %v119
      %s121 = smul.f32 %s117, %s120
      %v122 = vpack.c.bf16 %v110, %v109
      %vm123 = vcmask 130048
      %v125 = vsel %vm123, %v67, 0
      %127 = vmatprep.subr.bf16.mxu0 0
      %128 = vmatpush1.bf16.msra.mxu0 %v122
      %129 = vmatprep.subr.bf16.mxu0 0
      %130 = vmatpush1.bf16.msra.mxu0 0
      %131 = vmatprep.subr.bf16.mxu0 0
      %132 = vmatpush1.bf16.msra.mxu0 0
      %133 = vmatprep.subr.bf16.mxu0 0
      %134 = vmatpush1.bf16.msra.mxu0 0
      %135 = vmatprep.subr.bf16.mxu0 0
      %136 = vmatpush1.bf16.msra.mxu0 0
      %137 = vmatprep.subr.bf16.mxu0 0
      %138 = vmatpush1.bf16.msra.mxu0 0
      %139 = vmatprep.subr.bf16.mxu0 0
      %140 = vmatpush1.bf16.msra.mxu0 0
      %141 = vmatprep.subr.bf16.mxu0 0
      %142 = vmatpush1.bf16.msra.mxu0 0
      %143 = vmatprep.subr.bf16.mxu0 0
      %144 = vmatpush1.bf16.msra.mxu0 0
      %145 = vmatprep.subr.bf16.mxu0 0
      %146 = vmatpush1.bf16.msra.mxu0 0
      %147 = vmatprep.subr.bf16.mxu0 0
      %148 = vmatpush1.bf16.msra.mxu0 0
      %149 = vmatprep.subr.bf16.mxu0 0
      %150 = vmatpush1.bf16.msra.mxu0 0
      %151 = vmatprep.subr.bf16.mxu0 0
      %152 = vmatpush1.bf16.msra.mxu0 0
      %153 = vmatprep.subr.bf16.mxu0 0
      %154 = vmatpush1.bf16.msra.mxu0 0
      %155 = vmatprep.subr.bf16.mxu0 0
      %156 = vmatpush1.bf16.msra.mxu0 0
      %157 = vmatprep.subr.bf16.mxu0 0
      %158 = vmatpush1.bf16.msra.mxu0 0
      %159 = vmatprep.mubr.bf16.mxu0 0
      %160 = vmatmul.mubr.bf16.gmra.mrb[0].mxu0 %v125
      %v161 = vpop.f32.mrb[0].mxu0
      %v162 = vadd.f32 0.0, %v161
      %v163 = vpop.f32.mrb[0].mxu0
      %v164 = vpop.f32.mrb[0].mxu0
      %v165 = vadd.f32 0.0, %v164
      %v166 = vpop.f32.mrb[0].mxu0
      %167 = vdwg.mxu0
      %v168 = vpack.c.bf16 %v165, %v162
      %169 = vmatprep.subr.bf16.mxu0 0
      %170 = vmatpush1.bf16.msra.mxu0 %v84
      %171 = vmatprep.subr.bf16.mxu0 0
      %172 = vmatpush1.bf16.msra.mxu0 %v85
      %173 = vmatprep.subr.bf16.mxu0 0
      %174 = vmatpush1.bf16.msra.mxu0 %v86
      %175 = vmatprep.subr.bf16.mxu0 0
      %176 = vmatpush1.bf16.msra.mxu0 %v87
      %177 = vmatprep.subr.bf16.mxu0 0
      %178 = vmatpush1.bf16.msra.mxu0 %v88
      %179 = vmatprep.subr.bf16.mxu0 0
      %180 = vmatpush1.bf16.msra.mxu0 %v89
      %181 = vmatprep.subr.bf16.mxu0 0
      %182 = vmatpush1.bf16.msra.mxu0 %v90
      %183 = vmatprep.subr.bf16.mxu0 0
      %184 = vmatpush1.bf16.msra.mxu0 %v91
      %185 = vmatprep.subr.bf16.mxu0 0
      %186 = vmatpush1.bf16.msra.mxu0 0
      %187 = vmatprep.subr.bf16.mxu0 0
      %188 = vmatpush1.bf16.msra.mxu0 0
      %189 = vmatprep.subr.bf16.mxu0 0
      %190 = vmatpush1.bf16.msra.mxu0 0
      %191 = vmatprep.subr.bf16.mxu0 0
      %192 = vmatpush1.bf16.msra.mxu0 0
      %193 = vmatprep.subr.bf16.mxu0 0
      %194 = vmatpush1.bf16.msra.mxu0 0
      %195 = vmatprep.subr.bf16.mxu0 0
      %196 = vmatpush1.bf16.msra.mxu0 0
      %197 = vmatprep.subr.bf16.mxu0 0
      %198 = vmatpush1.bf16.msra.mxu0 0
      %199 = vmatprep.subr.bf16.mxu0 0
      %200 = vmatpush1.bf16.msra.mxu0 0
      %201 = vmatprep.mubr.bf16.mxu0 0
      %202 = vmatmul.mubr.bf16.gmra.mrb[0].mxu0 %v168
      %v203 = vpop.f32.mrb[0].mxu0
      %v204 = vadd.f32 %v97, %v203
      %v205 = vpop.f32.mrb[0].mxu0
      %v206 = vpop.f32.mrb[0].mxu0
      %v207 = vadd.f32 %v97, %v206
      %v208 = vpop.f32.mrb[0].mxu0
      %209 = vdwg.mxu0
      %v210 = vtanh.pop %v204
      %v211 = vtanh.pop %v207
      %v212 = vstv %s118
      %v213 = vmul.f32 %v212, %v210
      %v214 = vmul.f32 %v212, %v211
      %v215 = vadd.f32 %v109, %v213
      %v216 = vadd.f32 %v110, %v214
      %v217 = vpack.c.bf16 %v216, %v215
      %218 = vmatprep.subr.bf16.mxu0 0
      %219 = vmatpush1.bf16.msra.mxu0 %v217
      %220 = vmatprep.subr.bf16.mxu0 0
      %221 = vmatpush1.bf16.msra.mxu0 0
      %222 = vmatprep.subr.bf16.mxu0 0
      %223 = vmatpush1.bf16.msra.mxu0 0
      %224 = vmatprep.subr.bf16.mxu0 0
      %225 = vmatpush1.bf16.msra.mxu0 0
      %226 = vmatprep.subr.bf16.mxu0 0
      %227 = vmatpush1.bf16.msra.mxu0 0
      %228 = vmatprep.subr.bf16.mxu0 0
      %229 = vmatpush1.bf16.msra.mxu0 0
      %230 = vmatprep.subr.bf16.mxu0 0
      %231 = vmatpush1.bf16.msra.mxu0 0
      %232 = vmatprep.subr.bf16.mxu0 0
      %233 = vmatpush1.bf16.msra.mxu0 0
      %234 = vmatprep.subr.bf16.mxu0 0
      %235 = vmatpush1.bf16.msra.mxu0 0
      %236 = vmatprep.subr.bf16.mxu0 0
      %237 = vmatpush1.bf16.msra.mxu0 0
      %238 = vmatprep.subr.bf16.mxu0 0
      %239 = vmatpush1.bf16.msra.mxu0 0
      %240 = vmatprep.subr.bf16.mxu0 0
      %241 = vmatpush1.bf16.msra.mxu0 0
      %242 = vmatprep.subr.bf16.mxu0 0
      %243 = vmatpush1.bf16.msra.mxu0 0
      %244 = vmatprep.subr.bf16.mxu0 0
      %245 = vmatpush1.bf16.msra.mxu0 0
      %246 = vmatprep.subr.bf16.mxu0 0
      %247 = vmatpush1.bf16.msra.mxu0 0
      %248 = vmatprep.subr.bf16.mxu0 0
      %249 = vmatpush1.bf16.msra.mxu0 0
      %250 = vmatprep.mubr.bf16.mxu0 0
      %251 = vmatmul.mubr.bf16.gmra.mrb[0].mxu0 %v125
      %v252 = vpop.f32.mrb[0].mxu0
      %v253 = vadd.f32 0.0, %v252
      %v254 = vpop.f32.mrb[0].mxu0
      %v255 = vpop.f32.mrb[0].mxu0
      %v256 = vadd.f32 0.0, %v255
      %v257 = vpop.f32.mrb[0].mxu0
      %258 = vdwg.mxu0
      %v259 = vpack.c.bf16 %v256, %v253
      %260 = vmatprep.subr.bf16.mxu0 0
      %261 = vmatpush1.bf16.msra.mxu0 %v84
      %262 = vmatprep.subr.bf16.mxu0 0
      %263 = vmatpush1.bf16.msra.mxu0 %v85
      %264 = vmatprep.subr.bf16.mxu0 0
      %265 = vmatpush1.bf16.msra.mxu0 %v86
      %266 = vmatprep.subr.bf16.mxu0 0
      %267 = vmatpush1.bf16.msra.mxu0 %v87
      %268 = vmatprep.subr.bf16.mxu0 0
      %269 = vmatpush1.bf16.msra.mxu0 %v88
      %270 = vmatprep.subr.bf16.mxu0 0
      %271 = vmatpush1.bf16.msra.mxu0 %v89
      %272 = vmatprep.subr.bf16.mxu0 0
      %273 = vmatpush1.bf16.msra.mxu0 %v90
      %274 = vmatprep.subr.bf16.mxu0 0
      %275 = vmatpush1.bf16.msra.mxu0 %v91
      %276 = vmatprep.subr.bf16.mxu0 0
      %277 = vmatpush1.bf16.msra.mxu0 0
      %278 = vmatprep.subr.bf16.mxu0 0
      %279 = vmatpush1.bf16.msra.mxu0 0
      %280 = vmatprep.subr.bf16.mxu0 0
      %281 = vmatpush1.bf16.msra.mxu0 0
      %282 = vmatprep.subr.bf16.mxu0 0
      %283 = vmatpush1.bf16.msra.mxu0 0
      %284 = vmatprep.subr.bf16.mxu0 0
      %285 = vmatpush1.bf16.msra.mxu0 0
      %286 = vmatprep.subr.bf16.mxu0 0
      %287 = vmatpush1.bf16.msra.mxu0 0
      %288 = vmatprep.subr.bf16.mxu0 0
      %289 = vmatpush1.bf16.msra.mxu0 0
      %290 = vmatprep.subr.bf16.mxu0 0
      %291 = vmatpush1.bf16.msra.mxu0 0
      %292 = vmatprep.mubr.bf16.mxu0 0
      %293 = vmatmul.mubr.bf16.gmra.mrb[0].mxu0 %v259
      %v294 = vpop.f32.mrb[0].mxu0
      %v295 = vadd.f32 %v97, %v294
      %v296 = vpop.f32.mrb[0].mxu0
      %v297 = vpop.f32.mrb[0].mxu0
      %v298 = vadd.f32 %v97, %v297
      %v299 = vpop.f32.mrb[0].mxu0
      %300 = vdwg.mxu0
      %v301 = vtanh.pop %v295
      %v302 = vtanh.pop %v298
      %v303 = vmul.f32 %v212, %v301
      %v304 = vmul.f32 %v212, %v302
      %v305 = vadd.f32 %v109, %v303
      %v306 = vadd.f32 %v110, %v304
      %v307 = vpack.c.bf16 %v306, %v305
      %308 = vmatprep.subr.bf16.mxu0 0
      %309 = vmatpush1.bf16.msra.mxu0 %v307
      %310 = vmatprep.subr.bf16.mxu0 0
      %311 = vmatpush1.bf16.msra.mxu0 0
      %312 = vmatprep.subr.bf16.mxu0 0
      %313 = vmatpush1.bf16.msra.mxu0 0
      %314 = vmatprep.subr.bf16.mxu0 0
      %315 = vmatpush1.bf16.msra.mxu0 0
      %316 = vmatprep.subr.bf16.mxu0 0
      %317 = vmatpush1.bf16.msra.mxu0 0
      %318 = vmatprep.subr.bf16.mxu0 0
      %319 = vmatpush1.bf16.msra.mxu0 0
      %320 = vmatprep.subr.bf16.mxu0 0
      %321 = vmatpush1.bf16.msra.mxu0 0
      %322 = vmatprep.subr.bf16.mxu0 0
      %323 = vmatpush1.bf16.msra.mxu0 0
      %324 = vmatprep.subr.bf16.mxu0 0
      %325 = vmatpush1.bf16.msra.mxu0 0
      %326 = vmatprep.subr.bf16.mxu0 0
      %327 = vmatpush1.bf16.msra.mxu0 0
      %328 = vmatprep.subr.bf16.mxu0 0
      %329 = vmatpush1.bf16.msra.mxu0 0
      %330 = vmatprep.subr.bf16.mxu0 0
      %331 = vmatpush1.bf16.msra.mxu0 0
      %332 = vmatprep.subr.bf16.mxu0 0
      %333 = vmatpush1.bf16.msra.mxu0 0
      %334 = vmatprep.subr.bf16.mxu0 0
      %335 = vmatpush1.bf16.msra.mxu0 0
      %336 = vmatprep.subr.bf16.mxu0 0
      %337 = vmatpush1.bf16.msra.mxu0 0
      %338 = vmatprep.subr.bf16.mxu0 0
      %339 = vmatpush1.bf16.msra.mxu0 0
      %340 = vmatprep.mubr.bf16.mxu0 0
      %341 = vmatmul.mubr.bf16.gmra.mrb[0].mxu0 %v125
      %v342 = vpop.f32.mrb[0].mxu0
      %v343 = vadd.f32 0.0, %v342
      %v344 = vpop.f32.mrb[0].mxu0
      %v345 = vpop.f32.mrb[0].mxu0
      %v346 = vadd.f32 0.0, %v345
      %v347 = vpop.f32.mrb[0].mxu0
      %348 = vdwg.mxu0
      %v349 = vpack.c.bf16 %v346, %v343
      %350 = vmatprep.subr.bf16.mxu0 0
      %351 = vmatpush1.bf16.msra.mxu0 %v84
      %352 = vmatprep.subr.bf16.mxu0 0
      %353 = vmatpush1.bf16.msra.mxu0 %v85
      %354 = vmatprep.subr.bf16.mxu0 0
      %355 = vmatpush1.bf16.msra.mxu0 %v86
      %356 = vmatprep.subr.bf16.mxu0 0
      %357 = vmatpush1.bf16.msra.mxu0 %v87
      %358 = vmatprep.subr.bf16.mxu0 0
      %359 = vmatpush1.bf16.msra.mxu0 %v88
      %360 = vmatprep.subr.bf16.mxu0 0
      %361 = vmatpush1.bf16.msra.mxu0 %v89
      %362 = vmatprep.subr.bf16.mxu0 0
      %363 = vmatpush1.bf16.msra.mxu0 %v90
      %364 = vmatprep.subr.bf16.mxu0 0
      %365 = vmatpush1.bf16.msra.mxu0 %v91
      %366 = vmatprep.subr.bf16.mxu0 0
      %367 = vmatpush1.bf16.msra.mxu0 0
      %368 = vmatprep.subr.bf16.mxu0 0
      %369 = vmatpush1.bf16.msra.mxu0 0
      %370 = vmatprep.subr.bf16.mxu0 0
      %371 = vmatpush1.bf16.msra.mxu0 0
      %372 = vmatprep.subr.bf16.mxu0 0
      %373 = vmatpush1.bf16.msra.mxu0 0
      %374 = vmatprep.subr.bf16.mxu0 0
      %375 = vmatpush1.bf16.msra.mxu0 0
      %376 = vmatprep.subr.bf16.mxu0 0
      %377 = vmatpush1.bf16.msra.mxu0 0
      %378 = vmatprep.subr.bf16.mxu0 0
      %379 = vmatpush1.bf16.msra.mxu0 0
      %380 = vmatprep.subr.bf16.mxu0 0
      %381 = vmatpush1.bf16.msra.mxu0 0
      %382 = vmatprep.mubr.bf16.mxu0 0
      %383 = vmatmul.mubr.bf16.gmra.mrb[0].mxu0 %v349
      %v384 = vpop.f32.mrb[0].mxu0
      %v385 = vadd.f32 %v97, %v384
      %v386 = vpop.f32.mrb[0].mxu0
      %v387 = vpop.f32.mrb[0].mxu0
      %v388 = vadd.f32 %v97, %v387
      %v389 = vpop.f32.mrb[0].mxu0
      %390 = vdwg.mxu0
      %v391 = vtanh.pop %v385
      %v392 = vtanh.pop %v388
      %v393 = vstv %s117
      %v394 = vmul.f32 %v393, %v391
      %v395 = vmul.f32 %v393, %v392
      %v396 = vadd.f32 %v109, %v394
      %v397 = vadd.f32 %v110, %v395
      %v398 = vpack.c.bf16 %v397, %v396
      %399 = vmatprep.subr.bf16.mxu0 0
      %400 = vmatpush1.bf16.msra.mxu0 %v398
      %401 = vmatprep.subr.bf16.mxu0 0
      %402 = vmatpush1.bf16.msra.mxu0 0
      %403 = vmatprep.subr.bf16.mxu0 0
      %404 = vmatpush1.bf16.msra.mxu0 0
      %405 = vmatprep.subr.bf16.mxu0 0
      %406 = vmatpush1.bf16.msra.mxu0 0
      %407 = vmatprep.subr.bf16.mxu0 0
      %408 = vmatpush1.bf16.msra.mxu0 0
      %409 = vmatprep.subr.bf16.mxu0 0
      %410 = vmatpush1.bf16.msra.mxu0 0
      %411 = vmatprep.subr.bf16.mxu0 0
      %412 = vmatpush1.bf16.msra.mxu0 0
      %413 = vmatprep.subr.bf16.mxu0 0
      %414 = vmatpush1.bf16.msra.mxu0 0
      %415 = vmatprep.subr.bf16.mxu0 0
      %416 = vmatpush1.bf16.msra.mxu0 0
      %417 = vmatprep.subr.bf16.mxu0 0
      %418 = vmatpush1.bf16.msra.mxu0 0
      %419 = vmatprep.subr.bf16.mxu0 0
      %420 = vmatpush1.bf16.msra.mxu0 0
      %421 = vmatprep.subr.bf16.mxu0 0
      %422 = vmatpush1.bf16.msra.mxu0 0
      %423 = vmatprep.subr.bf16.mxu0 0
      %424 = vmatpush1.bf16.msra.mxu0 0
      %425 = vmatprep.subr.bf16.mxu0 0
      %426 = vmatpush1.bf16.msra.mxu0 0
      %427 = vmatprep.subr.bf16.mxu0 0
      %428 = vmatpush1.bf16.msra.mxu0 0
      %429 = vmatprep.subr.bf16.mxu0 0
      %430 = vmatpush1.bf16.msra.mxu0 0
      %431 = vmatprep.mubr.bf16.mxu0 0
      %432 = vmatmul.mubr.bf16.gmra.mrb[0].mxu0 %v125
      %v433 = vpop.f32.mrb[0].mxu0
      %v434 = vadd.f32 0.0, %v433
      %v435 = vpop.f32.mrb[0].mxu0
      %v436 = vpop.f32.mrb[0].mxu0
      %v437 = vadd.f32 0.0, %v436
      %v438 = vpop.f32.mrb[0].mxu0
      %439 = vdwg.mxu0
      %v440 = vpack.c.bf16 %v437, %v434
      %441 = vmatprep.subr.bf16.mxu0 0
      %442 = vmatpush1.bf16.msra.mxu0 %v84
      %443 = vmatprep.subr.bf16.mxu0 0
      %444 = vmatpush1.bf16.msra.mxu0 %v85
      %445 = vmatprep.subr.bf16.mxu0 0
      %446 = vmatpush1.bf16.msra.mxu0 %v86
      %447 = vmatprep.subr.bf16.mxu0 0
      %448 = vmatpush1.bf16.msra.mxu0 %v87
      %449 = vmatprep.subr.bf16.mxu0 0
      %450 = vmatpush1.bf16.msra.mxu0 %v88
      %451 = vmatprep.subr.bf16.mxu0 0
      %452 = vmatpush1.bf16.msra.mxu0 %v89
      %453 = vmatprep.subr.bf16.mxu0 0
      %454 = vmatpush1.bf16.msra.mxu0 %v90
      %455 = vmatprep.subr.bf16.mxu0 0
      %456 = vmatpush1.bf16.msra.mxu0 %v91
      %457 = vmatprep.subr.bf16.mxu0 0
      %458 = vmatpush1.bf16.msra.mxu0 0
      %459 = vmatprep.subr.bf16.mxu0 0
      %460 = vmatpush1.bf16.msra.mxu0 0
      %461 = vmatprep.subr.bf16.mxu0 0
      %462 = vmatpush1.bf16.msra.mxu0 0
      %463 = vmatprep.subr.bf16.mxu0 0
      %464 = vmatpush1.bf16.msra.mxu0 0
      %465 = vmatprep.subr.bf16.mxu0 0
      %466 = vmatpush1.bf16.msra.mxu0 0
      %467 = vmatprep.subr.bf16.mxu0 0
      %468 = vmatpush1.bf16.msra.mxu0 0
      %469 = vmatprep.subr.bf16.mxu0 0
      %470 = vmatpush1.bf16.msra.mxu0 0
      %471 = vmatprep.subr.bf16.mxu0 0
      %472 = vmatpush1.bf16.msra.mxu0 0
      %473 = vmatprep.mubr.bf16.mxu0 0
      %474 = vmatmul.mubr.bf16.gmra.mrb[0].mxu0 %v440
      %v475 = vpop.f32.mrb[0].mxu0
      %v476 = vadd.f32 %v97, %v475
      %v477 = vpop.f32.mrb[0].mxu0
      %v478 = vpop.f32.mrb[0].mxu0
      %v479 = vadd.f32 %v97, %v478
      %v480 = vpop.f32.mrb[0].mxu0
      %481 = vdwg.mxu0
      %v482 = vtanh.pop %v476
      %v483 = vtanh.pop %v479
      %v484 = vadd.f32 %v301, %v391
      %v485 = vadd.f32 %v302, %v392
      %v486 = vmul.f32 %v484, 2.0
      %v487 = vmul.f32 %v485, 2.0
      %v488 = vadd.f32 %v210, %v486
      %v489 = vadd.f32 %v211, %v487
      %v490 = vadd.f32 %v488, %v482
      %v491 = vadd.f32 %v489, %v483
      %v492 = vstv %s121
      %v493 = vmul.f32 %v492, %v490
      %v494 = vmul.f32 %v492, %v491
      %v495 = vadd.f32 %v109, %v493
      %v496 = vadd.f32 %v110, %v494
      %v497 = vpack.c.bf16 %v496, %v495
      %498 = vmatprep.subr.bf16.mxu0 0
      %499 = vmatpush1.bf16.msra.mxu0 %v497
      %500 = vmatprep.subr.bf16.mxu0 0
      %501 = vmatpush1.bf16.msra.mxu0 0
      %502 = vmatprep.subr.bf16.mxu0 0
      %503 = vmatpush1.bf16.msra.mxu0 0
      %504 = vmatprep.subr.bf16.mxu0 0
      %505 = vmatpush1.bf16.msra.mxu0 0
      %506 = vmatprep.subr.bf16.mxu0 0
      %507 = vmatpush1.bf16.msra.mxu0 0
      %508 = vmatprep.subr.bf16.mxu0 0
      %509 = vmatpush1.bf16.msra.mxu0 0
      %510 = vmatprep.subr.bf16.mxu0 0
      %511 = vmatpush1.bf16.msra.mxu0 0
      %512 = vmatprep.subr.bf16.mxu0 0
      %513 = vmatpush1.bf16.msra.mxu0 0
      %514 = vmatprep.subr.bf16.mxu0 0
      %515 = vmatpush1.bf16.msra.mxu0 0
      %516 = vmatprep.subr.bf16.mxu0 0
      %517 = vmatpush1.bf16.msra.mxu0 0
      %518 = vmatprep.subr.bf16.mxu0 0
      %519 = vmatpush1.bf16.msra.mxu0 0
      %520 = vmatprep.subr.bf16.mxu0 0
      %521 = vmatpush1.bf16.msra.mxu0 0
      %522 = vmatprep.subr.bf16.mxu0 0
      %523 = vmatpush1.bf16.msra.mxu0 0
      %524 = vmatprep.subr.bf16.mxu0 0
      %525 = vmatpush1.bf16.msra.mxu0 0
      %526 = vmatprep.subr.bf16.mxu0 0
      %527 = vmatpush1.bf16.msra.mxu0 0
      %528 = vmatprep.subr.bf16.mxu0 0
      %529 = vmatpush1.bf16.msra.mxu0 0
      %530 = vmatprep.mubr.bf16.mxu0 0
      %531 = vmatmul.mubr.bf16.gmra.mrb[0].mxu0 %v125
      %v532 = vpop.f32.mrb[0].mxu0
      %v533 = vadd.f32 0.0, %v532
      %v534 = vpop.f32.mrb[0].mxu0
      %v535 = vpop.f32.mrb[0].mxu0
      %v536 = vadd.f32 0.0, %v535
      %v537 = vpop.f32.mrb[0].mxu0
      %538 = vdwg.mxu0
      %v539 = vpack.c.bf16 %v536, %v533
      %540 = vmatprep.subr.bf16.mxu0 0
      %541 = vmatpush1.bf16.msra.mxu0 %v84
      %542 = vmatprep.subr.bf16.mxu0 0
      %543 = vmatpush1.bf16.msra.mxu0 %v85
      %544 = vmatprep.subr.bf16.mxu0 0
      %545 = vmatpush1.bf16.msra.mxu0 %v86
      %546 = vmatprep.subr.bf16.mxu0 0
      %547 = vmatpush1.bf16.msra.mxu0 %v87
      %548 = vmatprep.subr.bf16.mxu0 0
      %549 = vmatpush1.bf16.msra.mxu0 %v88
      %550 = vmatprep.subr.bf16.mxu0 0
      %551 = vmatpush1.bf16.msra.mxu0 %v89
      %552 = vmatprep.subr.bf16.mxu0 0
      %553 = vmatpush1.bf16.msra.mxu0 %v90
      %554 = vmatprep.subr.bf16.mxu0 0
      %555 = vmatpush1.bf16.msra.mxu0 %v91
      %556 = vmatprep.subr.bf16.mxu0 0
      %557 = vmatpush1.bf16.msra.mxu0 0
      %558 = vmatprep.subr.bf16.mxu0 0
      %559 = vmatpush1.bf16.msra.mxu0 0
      %560 = vmatprep.subr.bf16.mxu0 0
      %561 = vmatpush1.bf16.msra.mxu0 0
      %562 = vmatprep.subr.bf16.mxu0 0
      %563 = vmatpush1.bf16.msra.mxu0 0
      %564 = vmatprep.subr.bf16.mxu0 0
      %565 = vmatpush1.bf16.msra.mxu0 0
      %566 = vmatprep.subr.bf16.mxu0 0
      %567 = vmatpush1.bf16.msra.mxu0 0
      %568 = vmatprep.subr.bf16.mxu0 0
      %569 = vmatpush1.bf16.msra.mxu0 0
      %570 = vmatprep.subr.bf16.mxu0 0
      %571 = vmatpush1.bf16.msra.mxu0 0
      %572 = vmatprep.mubr.bf16.mxu0 0
      %573 = vmatmul.mubr.bf16.gmra.mrb[0].mxu0 %v539
      %v574 = vpop.f32.mrb[0].mxu0
      %v575 = vadd.f32 %v97, %v574
      %v576 = vpop.f32.mrb[0].mxu0
      %v577 = vpop.f32.mrb[0].mxu0
      %v578 = vadd.f32 %v97, %v577
      %v579 = vpop.f32.mrb[0].mxu0
      %580 = vdwg.mxu0
      %v581 = vtanh.pop %v575
      %v582 = vtanh.pop %v578
      %v583 = vmul.f32 %v212, %v581
      %v584 = vmul.f32 %v212, %v582
      %v585 = vadd.f32 %v495, %v583
      %v586 = vadd.f32 %v496, %v584
      %v587 = vpack.c.bf16 %v586, %v585
      %588 = vmatprep.subr.bf16.mxu0 0
      %589 = vmatpush1.bf16.msra.mxu0 %v587
      %590 = vmatprep.subr.bf16.mxu0 0
      %591 = vmatpush1.bf16.msra.mxu0 0
      %592 = vmatprep.subr.bf16.mxu0 0
      %593 = vmatpush1.bf16.msra.mxu0 0
      %594 = vmatprep.subr.bf16.mxu0 0
      %595 = vmatpush1.bf16.msra.mxu0 0
      %596 = vmatprep.subr.bf16.mxu0 0
      %597 = vmatpush1.bf16.msra.mxu0 0
      %598 = vmatprep.subr.bf16.mxu0 0
      %599 = vmatpush1.bf16.msra.mxu0 0
      %600 = vmatprep.subr.bf16.mxu0 0
      %601 = vmatpush1.bf16.msra.mxu0 0
      %602 = vmatprep.subr.bf16.mxu0 0
      %603 = vmatpush1.bf16.msra.mxu0 0
      %604 = vmatprep.subr.bf16.mxu0 0
      %605 = vmatpush1.bf16.msra.mxu0 0
      %606 = vmatprep.subr.bf16.mxu0 0
      %607 = vmatpush1.bf16.msra.mxu0 0
      %608 = vmatprep.subr.bf16.mxu0 0
      %609 = vmatpush1.bf16.msra.mxu0 0
      %610 = vmatprep.subr.bf16.mxu0 0
      %611 = vmatpush1.bf16.msra.mxu0 0
      %612 = vmatprep.subr.bf16.mxu0 0
      %613 = vmatpush1.bf16.msra.mxu0 0
      %614 = vmatprep.subr.bf16.mxu0 0
      %615 = vmatpush1.bf16.msra.mxu0 0
      %616 = vmatprep.subr.bf16.mxu0 0
      %617 = vmatpush1.bf16.msra.mxu0 0
      %618 = vmatprep.subr.bf16.mxu0 0
      %619 = vmatpush1.bf16.msra.mxu0 0
      %620 = vmatprep.mubr.bf16.mxu0 0
      %621 = vmatmul.mubr.bf16.gmra.mrb[0].mxu0 %v125
      %v622 = vpop.f32.mrb[0].mxu0
      %v623 = vadd.f32 0.0, %v622
      %v624 = vpop.f32.mrb[0].mxu0
      %v625 = vpop.f32.mrb[0].mxu0
      %v626 = vadd.f32 0.0, %v625
      %v627 = vpop.f32.mrb[0].mxu0
      %628 = vdwg.mxu0
      %v629 = vpack.c.bf16 %v626, %v623
      %630 = vmatprep.subr.bf16.mxu0 0
      %631 = vmatpush1.bf16.msra.mxu0 %v84
      %632 = vmatprep.subr.bf16.mxu0 0
      %633 = vmatpush1.bf16.msra.mxu0 %v85
      %634 = vmatprep.subr.bf16.mxu0 0
      %635 = vmatpush1.bf16.msra.mxu0 %v86
      %636 = vmatprep.subr.bf16.mxu0 0
      %637 = vmatpush1.bf16.msra.mxu0 %v87
      %638 = vmatprep.subr.bf16.mxu0 0
      %639 = vmatpush1.bf16.msra.mxu0 %v88
      %640 = vmatprep.subr.bf16.mxu0 0
      %641 = vmatpush1.bf16.msra.mxu0 %v89
      %642 = vmatprep.subr.bf16.mxu0 0
      %643 = vmatpush1.bf16.msra.mxu0 %v90
      %644 = vmatprep.subr.bf16.mxu0 0
      %645 = vmatpush1.bf16.msra.mxu0 %v91
      %646 = vmatprep.subr.bf16.mxu0 0
      %647 = vmatpush1.bf16.msra.mxu0 0
      %648 = vmatprep.subr.bf16.mxu0 0
      %649 = vmatpush1.bf16.msra.mxu0 0
      %650 = vmatprep.subr.bf16.mxu0 0
      %651 = vmatpush1.bf16.msra.mxu0 0
      %652 = vmatprep.subr.bf16.mxu0 0
      %653 = vmatpush1.bf16.msra.mxu0 0
      %654 = vmatprep.subr.bf16.mxu0 0
      %655 = vmatpush1.bf16.msra.mxu0 0
      %656 = vmatprep.subr.bf16.mxu0 0
      %657 = vmatpush1.bf16.msra.mxu0 0
      %658 = vmatprep.subr.bf16.mxu0 0
      %659 = vmatpush1.bf16.msra.mxu0 0
      %660 = vmatprep.subr.bf16.mxu0 0
      %661 = vmatpush1.bf16.msra.mxu0 0
      %662 = vmatprep.mubr.bf16.mxu0 0
      %663 = vmatmul.mubr.bf16.gmra.mrb[0].mxu0 %v629
      %v664 = vpop.f32.mrb[0].mxu0
      %v665 = vadd.f32 %v97, %v664
      %v666 = vpop.f32.mrb[0].mxu0
      %v667 = vpop.f32.mrb[0].mxu0
      %v668 = vadd.f32 %v97, %v667
      %v669 = vpop.f32.mrb[0].mxu0
      %670 = vdwg.mxu0
      %v671 = vtanh.pop %v665
      %v672 = vtanh.pop %v668
      %v673 = vmul.f32 %v212, %v671
      %v674 = vmul.f32 %v212, %v672
      %v675 = vadd.f32 %v495, %v673
      %v676 = vadd.f32 %v496, %v674
      %v677 = vpack.c.bf16 %v676, %v675
      %678 = vmatprep.subr.bf16.mxu0 0
      %679 = vmatpush1.bf16.msra.mxu0 %v677
      %680 = vmatprep.subr.bf16.mxu0 0
      %681 = vmatpush1.bf16.msra.mxu0 0
      %682 = vmatprep.subr.bf16.mxu0 0
      %683 = vmatpush1.bf16.msra.mxu0 0
      %684 = vmatprep.subr.bf16.mxu0 0
      %685 = vmatpush1.bf16.msra.mxu0 0
      %686 = vmatprep.subr.bf16.mxu0 0
      %687 = vmatpush1.bf16.msra.mxu0 0
      %688 = vmatprep.subr.bf16.mxu0 0
      %689 = vmatpush1.bf16.msra.mxu0 0
      %690 = vmatprep.subr.bf16.mxu0 0
      %691 = vmatpush1.bf16.msra.mxu0 0
      %692 = vmatprep.subr.bf16.mxu0 0
      %693 = vmatpush1.bf16.msra.mxu0 0
      %694 = vmatprep.subr.bf16.mxu0 0
      %695 = vmatpush1.bf16.msra.mxu0 0
      %696 = vmatprep.subr.bf16.mxu0 0
      %697 = vmatpush1.bf16.msra.mxu0 0
      %698 = vmatprep.subr.bf16.mxu0 0
      %699 = vmatpush1.bf16.msra.mxu0 0
      %700 = vmatprep.subr.bf16.mxu0 0
      %701 = vmatpush1.bf16.msra.mxu0 0
      %702 = vmatprep.subr.bf16.mxu0 0
      %703 = vmatpush1.bf16.msra.mxu0 0
      %704 = vmatprep.subr.bf16.mxu0 0
      %705 = vmatpush1.bf16.msra.mxu0 0
      %706 = vmatprep.subr.bf16.mxu0 0
      %707 = vmatpush1.bf16.msra.mxu0 0
      %708 = vmatprep.subr.bf16.mxu0 0
      %709 = vmatpush1.bf16.msra.mxu0 0
      %710 = vmatprep.mubr.bf16.mxu0 0
      %711 = vmatmul.mubr.bf16.gmra.mrb[0].mxu0 %v125
      %v712 = vpop.f32.mrb[0].mxu0
      %v713 = vadd.f32 0.0, %v712
      %v714 = vpop.f32.mrb[0].mxu0
      %v715 = vpop.f32.mrb[0].mxu0
      %v716 = vadd.f32 0.0, %v715
      %v717 = vpop.f32.mrb[0].mxu0
      %718 = vdwg.mxu0
      %v719 = vpack.c.bf16 %v716, %v713
      %720 = vmatprep.subr.bf16.mxu0 0
      %721 = vmatpush1.bf16.msra.mxu0 %v84
      %722 = vmatprep.subr.bf16.mxu0 0
      %723 = vmatpush1.bf16.msra.mxu0 %v85
      %724 = vmatprep.subr.bf16.mxu0 0
      %725 = vmatpush1.bf16.msra.mxu0 %v86
      %726 = vmatprep.subr.bf16.mxu0 0
      %727 = vmatpush1.bf16.msra.mxu0 %v87
      %728 = vmatprep.subr.bf16.mxu0 0
      %729 = vmatpush1.bf16.msra.mxu0 %v88
      %730 = vmatprep.subr.bf16.mxu0 0
      %731 = vmatpush1.bf16.msra.mxu0 %v89
      %732 = vmatprep.subr.bf16.mxu0 0
      %733 = vmatpush1.bf16.msra.mxu0 %v90
      %734 = vmatprep.subr.bf16.mxu0 0
      %735 = vmatpush1.bf16.msra.mxu0 %v91
      %736 = vmatprep.subr.bf16.mxu0 0
      %737 = vmatpush1.bf16.msra.mxu0 0
      %738 = vmatprep.subr.bf16.mxu0 0
      %739 = vmatpush1.bf16.msra.mxu0 0
      %740 = vmatprep.subr.bf16.mxu0 0
      %741 = vmatpush1.bf16.msra.mxu0 0
      %742 = vmatprep.subr.bf16.mxu0 0
      %743 = vmatpush1.bf16.msra.mxu0 0
      %744 = vmatprep.subr.bf16.mxu0 0
      %745 = vmatpush1.bf16.msra.mxu0 0
      %746 = vmatprep.subr.bf16.mxu0 0
      %747 = vmatpush1.bf16.msra.mxu0 0
      %748 = vmatprep.subr.bf16.mxu0 0
      %749 = vmatpush1.bf16.msra.mxu0 0
      %750 = vmatprep.subr.bf16.mxu0 0
      %751 = vmatpush1.bf16.msra.mxu0 0
      %752 = vmatprep.mubr.bf16.mxu0 0
      %753 = vmatmul.mubr.bf16.gmra.mrb[0].mxu0 %v719
      %v754 = vpop.f32.mrb[0].mxu0
      %v755 = vadd.f32 %v97, %v754
      %v756 = vpop.f32.mrb[0].mxu0
      %v757 = vpop.f32.mrb[0].mxu0
      %v758 = vadd.f32 %v97, %v757
      %v759 = vpop.f32.mrb[0].mxu0
      %760 = vdwg.mxu0
      %v761 = vtanh.pop %v755
      %v762 = vtanh.pop %v758
      %v763 = vmul.f32 %v393, %v761
      %v764 = vmul.f32 %v393, %v762
      %v765 = vadd.f32 %v495, %v763
      %v766 = vadd.f32 %v496, %v764
      %v767 = vpack.c.bf16 %v766, %v765
      %768 = vmatprep.subr.bf16.mxu0 0
      %769 = vmatpush1.bf16.msra.mxu0 %v767
      %770 = vmatprep.subr.bf16.mxu0 0
      %771 = vmatpush1.bf16.msra.mxu0 0
      %772 = vmatprep.subr.bf16.mxu0 0
      %773 = vmatpush1.bf16.msra.mxu0 0
      %774 = vmatprep.subr.bf16.mxu0 0
      %775 = vmatpush1.bf16.msra.mxu0 0
      %776 = vmatprep.subr.bf16.mxu0 0
      %777 = vmatpush1.bf16.msra.mxu0 0
      %778 = vmatprep.subr.bf16.mxu0 0
      %779 = vmatpush1.bf16.msra.mxu0 0
      %780 = vmatprep.subr.bf16.mxu0 0
      %781 = vmatpush1.bf16.msra.mxu0 0
      %782 = vmatprep.subr.bf16.mxu0 0
      %783 = vmatpush1.bf16.msra.mxu0 0
      %784 = vmatprep.subr.bf16.mxu0 0
      %785 = vmatpush1.bf16.msra.mxu0 0
      %786 = vmatprep.subr.bf16.mxu0 0
      %787 = vmatpush1.bf16.msra.mxu0 0
      %788 = vmatprep.subr.bf16.mxu0 0
      %789 = vmatpush1.bf16.msra.mxu0 0
      %790 = vmatprep.subr.bf16.mxu0 0
      %791 = vmatpush1.bf16.msra.mxu0 0
      %792 = vmatprep.subr.bf16.mxu0 0
      %793 = vmatpush1.bf16.msra.mxu0 0
      %794 = vmatprep.subr.bf16.mxu0 0
      %795 = vmatpush1.bf16.msra.mxu0 0
      %796 = vmatprep.subr.bf16.mxu0 0
      %797 = vmatpush1.bf16.msra.mxu0 0
      %798 = vmatprep.subr.bf16.mxu0 0
      %799 = vmatpush1.bf16.msra.mxu0 0
      %800 = vmatprep.mubr.bf16.mxu0 0
      %801 = vmatmul.mubr.bf16.gmra.mrb[0].mxu0 %v125
      %v802 = vpop.f32.mrb[0].mxu0
      %v803 = vadd.f32 0.0, %v802
      %v804 = vpop.f32.mrb[0].mxu0
      %v805 = vpop.f32.mrb[0].mxu0
      %v806 = vadd.f32 0.0, %v805
      %v807 = vpop.f32.mrb[0].mxu0
      %808 = vdwg.mxu0
      %v809 = vpack.c.bf16 %v806, %v803
      %810 = vmatprep.subr.bf16.mxu0 0
      %811 = vmatpush1.bf16.msra.mxu0 %v84
      %812 = vmatprep.subr.bf16.mxu0 0
      %813 = vmatpush1.bf16.msra.mxu0 %v85
      %814 = vmatprep.subr.bf16.mxu0 0
      %815 = vmatpush1.bf16.msra.mxu0 %v86
      %816 = vmatprep.subr.bf16.mxu0 0
      %817 = vmatpush1.bf16.msra.mxu0 %v87
      %818 = vmatprep.subr.bf16.mxu0 0
      %819 = vmatpush1.bf16.msra.mxu0 %v88
      %820 = vmatprep.subr.bf16.mxu0 0
      %821 = vmatpush1.bf16.msra.mxu0 %v89
      %822 = vmatprep.subr.bf16.mxu0 0
      %823 = vmatpush1.bf16.msra.mxu0 %v90
      %824 = vmatprep.subr.bf16.mxu0 0
      %825 = vmatpush1.bf16.msra.mxu0 %v91
      %826 = vmatprep.subr.bf16.mxu0 0
      %827 = vmatpush1.bf16.msra.mxu0 0
      %828 = vmatprep.subr.bf16.mxu0 0
      %829 = vmatpush1.bf16.msra.mxu0 0
      %830 = vmatprep.subr.bf16.mxu0 0
      %831 = vmatpush1.bf16.msra.mxu0 0
      %832 = vmatprep.subr.bf16.mxu0 0
      %833 = vmatpush1.bf16.msra.mxu0 0
      %834 = vmatprep.subr.bf16.mxu0 0
      %835 = vmatpush1.bf16.msra.mxu0 0
      %836 = vmatprep.subr.bf16.mxu0 0
      %837 = vmatpush1.bf16.msra.mxu0 0
      %838 = vmatprep.subr.bf16.mxu0 0
      %839 = vmatpush1.bf16.msra.mxu0 0
      %840 = vmatprep.subr.bf16.mxu0 0
      %841 = vmatpush1.bf16.msra.mxu0 0
      %842 = vmatprep.mubr.bf16.mxu0 0
      %843 = vmatmul.mubr.bf16.gmra.mrb[0].mxu0 %v809
      %v844 = vpop.f32.mrb[0].mxu0
      %v845 = vadd.f32 %v97, %v844
      %v846 = vpop.f32.mrb[0].mxu0
      %v847 = vpop.f32.mrb[0].mxu0
      %v848 = vadd.f32 %v97, %v847
      %v849 = vpop.f32.mrb[0].mxu0
      %850 = vdwg.mxu0
      %v851 = vtanh.pop %v845
      %v852 = vtanh.pop %v848
      %v853 = vadd.f32 %v671, %v761
      %v854 = vadd.f32 %v672, %v762
      %v855 = vmul.f32 %v853, 2.0
      %v856 = vmul.f32 %v854, 2.0
      %v857 = vadd.f32 %v581, %v855
      %v858 = vadd.f32 %v582, %v856
      %v859 = vadd.f32 %v857, %v851
      %v860 = vadd.f32 %v858, %v852
      %v861 = vmul.f32 %v492, %v859
      %v862 = vmul.f32 %v492, %v860
      %v863 = vadd.f32 %v495, %v861
      %v864 = vadd.f32 %v496, %v862
      %v865 = vpack.c.bf16 %v864, %v863
      %866 = vmatprep.subr.bf16.mxu0 0
      %867 = vmatpush1.bf16.msra.mxu0 %v865
      %868 = vmatprep.subr.bf16.mxu0 0
      %869 = vmatpush1.bf16.msra.mxu0 0
      %870 = vmatprep.subr.bf16.mxu0 0
      %871 = vmatpush1.bf16.msra.mxu0 0
      %872 = vmatprep.subr.bf16.mxu0 0
      %873 = vmatpush1.bf16.msra.mxu0 0
      %874 = vmatprep.subr.bf16.mxu0 0
      %875 = vmatpush1.bf16.msra.mxu0 0
      %876 = vmatprep.subr.bf16.mxu0 0
      %877 = vmatpush1.bf16.msra.mxu0 0
      %878 = vmatprep.subr.bf16.mxu0 0
      %879 = vmatpush1.bf16.msra.mxu0 0
      %880 = vmatprep.subr.bf16.mxu0 0
      %881 = vmatpush1.bf16.msra.mxu0 0
      %882 = vmatprep.subr.bf16.mxu0 0
      %883 = vmatpush1.bf16.msra.mxu0 0
      %884 = vmatprep.subr.bf16.mxu0 0
      %885 = vmatpush1.bf16.msra.mxu0 0
      %886 = vmatprep.subr.bf16.mxu0 0
      %887 = vmatpush1.bf16.msra.mxu0 0
      %888 = vmatprep.subr.bf16.mxu0 0
      %889 = vmatpush1.bf16.msra.mxu0 0
      %890 = vmatprep.subr.bf16.mxu0 0
      %891 = vmatpush1.bf16.msra.mxu0 0
      %892 = vmatprep.subr.bf16.mxu0 0
      %893 = vmatpush1.bf16.msra.mxu0 0
      %894 = vmatprep.subr.bf16.mxu0 0
      %895 = vmatpush1.bf16.msra.mxu0 0
      %896 = vmatprep.subr.bf16.mxu0 0
      %897 = vmatpush1.bf16.msra.mxu0 0
      %898 = vmatprep.mubr.bf16.mxu0 0
      %899 = vmatmul.mubr.bf16.gmra.mrb[0].mxu0 %v125
      %v900 = vpop.f32.mrb[0].mxu0
      %v901 = vadd.f32 0.0, %v900
      %v902 = vpop.f32.mrb[0].mxu0
      %v903 = vpop.f32.mrb[0].mxu0
      %v904 = vadd.f32 0.0, %v903
      %v905 = vpop.f32.mrb[0].mxu0
      %906 = vdwg.mxu0
      %v907 = vpack.c.bf16 %v904, %v901
      %908 = vmatprep.subr.bf16.mxu0 0
      %909 = vmatpush1.bf16.msra.mxu0 %v84
      %910 = vmatprep.subr.bf16.mxu0 0
      %911 = vmatpush1.bf16.msra.mxu0 %v85
      %912 = vmatprep.subr.bf16.mxu0 0
      %913 = vmatpush1.bf16.msra.mxu0 %v86
      %914 = vmatprep.subr.bf16.mxu0 0
      %915 = vmatpush1.bf16.msra.mxu0 %v87
      %916 = vmatprep.subr.bf16.mxu0 0
      %917 = vmatpush1.bf16.msra.mxu0 %v88
      %918 = vmatprep.subr.bf16.mxu0 0
      %919 = vmatpush1.bf16.msra.mxu0 %v89
      %920 = vmatprep.subr.bf16.mxu0 0
      %921 = vmatpush1.bf16.msra.mxu0 %v90
      %922 = vmatprep.subr.bf16.mxu0 0
      %923 = vmatpush1.bf16.msra.mxu0 %v91
      %924 = vmatprep.subr.bf16.mxu0 0
      %925 = vmatpush1.bf16.msra.mxu0 0
      %926 = vmatprep.subr.bf16.mxu0 0
      %927 = vmatpush1.bf16.msra.mxu0 0
      %928 = vmatprep.subr.bf16.mxu0 0
      %929 = vmatpush1.bf16.msra.mxu0 0
      %930 = vmatprep.subr.bf16.mxu0 0
      %931 = vmatpush1.bf16.msra.mxu0 0
      %932 = vmatprep.subr.bf16.mxu0 0
      %933 = vmatpush1.bf16.msra.mxu0 0
      %934 = vmatprep.subr.bf16.mxu0 0
      %935 = vmatpush1.bf16.msra.mxu0 0
      %936 = vmatprep.subr.bf16.mxu0 0
      %937 = vmatpush1.bf16.msra.mxu0 0
      %938 = vmatprep.subr.bf16.mxu0 0
      %939 = vmatpush1.bf16.msra.mxu0 0
      %940 = vmatprep.mubr.bf16.mxu0 0
      %941 = vmatmul.mubr.bf16.gmra.mrb[0].mxu0 %v907
      %v942 = vpop.f32.mrb[0].mxu0
      %v943 = vadd.f32 %v97, %v942
      %v944 = vpop.f32.mrb[0].mxu0
      %v945 = vpop.f32.mrb[0].mxu0
      %v946 = vadd.f32 %v97, %v945
      %v947 = vpop.f32.mrb[0].mxu0
      %948 = vdwg.mxu0
      %v949 = vtanh.pop %v943
      %v950 = vtanh.pop %v946
      %v951 = vmul.f32 %v212, %v949
      %v952 = vmul.f32 %v212, %v950
      %v953 = vadd.f32 %v863, %v951
      %v954 = vadd.f32 %v864, %v952
      %v955 = vpack.c.bf16 %v954, %v953
      %956 = vmatprep.subr.bf16.mxu0 0
      %957 = vmatpush1.bf16.msra.mxu0 %v955
      %958 = vmatprep.subr.bf16.mxu0 0
      %959 = vmatpush1.bf16.msra.mxu0 0
      %960 = vmatprep.subr.bf16.mxu0 0
      %961 = vmatpush1.bf16.msra.mxu0 0
      %962 = vmatprep.subr.bf16.mxu0 0
      %963 = vmatpush1.bf16.msra.mxu0 0
      %964 = vmatprep.subr.bf16.mxu0 0
      %965 = vmatpush1.bf16.msra.mxu0 0
      %966 = vmatprep.subr.bf16.mxu0 0
      %967 = vmatpush1.bf16.msra.mxu0 0
      %968 = vmatprep.subr.bf16.mxu0 0
      %969 = vmatpush1.bf16.msra.mxu0 0
      %970 = vmatprep.subr.bf16.mxu0 0
      %971 = vmatpush1.bf16.msra.mxu0 0
      %972 = vmatprep.subr.bf16.mxu0 0
      %973 = vmatpush1.bf16.msra.mxu0 0
      %974 = vmatprep.subr.bf16.mxu0 0
      %975 = vmatpush1.bf16.msra.mxu0 0
      %976 = vmatprep.subr.bf16.mxu0 0
      %977 = vmatpush1.bf16.msra.mxu0 0
      %978 = vmatprep.subr.bf16.mxu0 0
      %979 = vmatpush1.bf16.msra.mxu0 0
      %980 = vmatprep.subr.bf16.mxu0 0
      %981 = vmatpush1.bf16.msra.mxu0 0
      %982 = vmatprep.subr.bf16.mxu0 0
      %983 = vmatpush1.bf16.msra.mxu0 0
      %984 = vmatprep.subr.bf16.mxu0 0
      %985 = vmatpush1.bf16.msra.mxu0 0
      %986 = vmatprep.subr.bf16.mxu0 0
      %987 = vmatpush1.bf16.msra.mxu0 0
      %988 = vmatprep.mubr.bf16.mxu0 0
      %989 = vmatmul.mubr.bf16.gmra.mrb[0].mxu0 %v125
      %v990 = vpop.f32.mrb[0].mxu0
      %v991 = vadd.f32 0.0, %v990
      %v992 = vpop.f32.mrb[0].mxu0
      %v993 = vpop.f32.mrb[0].mxu0
      %v994 = vadd.f32 0.0, %v993
      %v995 = vpop.f32.mrb[0].mxu0
      %996 = vdwg.mxu0
      %v997 = vpack.c.bf16 %v994, %v991
      %998 = vmatprep.subr.bf16.mxu0 0
      %999 = vmatpush1.bf16.msra.mxu0 %v84
      %1000 = vmatprep.subr.bf16.mxu0 0
      %1001 = vmatpush1.bf16.msra.mxu0 %v85
      %1002 = vmatprep.subr.bf16.mxu0 0
      %1003 = vmatpush1.bf16.msra.mxu0 %v86
      %1004 = vmatprep.subr.bf16.mxu0 0
      %1005 = vmatpush1.bf16.msra.mxu0 %v87
      %1006 = vmatprep.subr.bf16.mxu0 0
      %1007 = vmatpush1.bf16.msra.mxu0 %v88
      %1008 = vmatprep.subr.bf16.mxu0 0
      %1009 = vmatpush1.bf16.msra.mxu0 %v89
      %1010 = vmatprep.subr.bf16.mxu0 0
      %1011 = vmatpush1.bf16.msra.mxu0 %v90
      %1012 = vmatprep.subr.bf16.mxu0 0
      %1013 = vmatpush1.bf16.msra.mxu0 %v91
      %1014 = vmatprep.subr.bf16.mxu0 0
      %1015 = vmatpush1.bf16.msra.mxu0 0
      %1016 = vmatprep.subr.bf16.mxu0 0
      %1017 = vmatpush1.bf16.msra.mxu0 0
      %1018 = vmatprep.subr.bf16.mxu0 0
      %1019 = vmatpush1.bf16.msra.mxu0 0
      %1020 = vmatprep.subr.bf16.mxu0 0
      %1021 = vmatpush1.bf16.msra.mxu0 0
      %1022 = vmatprep.subr.bf16.mxu0 0
      %1023 = vmatpush1.bf16.msra.mxu0 0
      %1024 = vmatprep.subr.bf16.mxu0 0
      %1025 = vmatpush1.bf16.msra.mxu0 0
      %1026 = vmatprep.subr.bf16.mxu0 0
      %1027 = vmatpush1.bf16.msra.mxu0 0
      %1028 = vmatprep.subr.bf16.mxu0 0
      %1029 = vmatpush1.bf16.msra.mxu0 0
      %1030 = vmatprep.mubr.bf16.mxu0 0
      %1031 = vmatmul.mubr.bf16.gmra.mrb[0].mxu0 %v997
      %v1032 = vpop.f32.mrb[0].mxu0
      %v1033 = vadd.f32 %v97, %v1032
      %v1034 = vpop.f32.mrb[0].mxu0
      %v1035 = vpop.f32.mrb[0].mxu0
      %v1036 = vadd.f32 %v97, %v1035
      %v1037 = vpop.f32.mrb[0].mxu0
      %1038 = vdwg.mxu0
      %v1039 = vtanh.pop %v1033
      %v1040 = vtanh.pop %v1036
      %v1041 = vmul.f32 %v212, %v1039
      %v1042 = vmul.f32 %v212, %v1040
      %v1043 = vadd.f32 %v863, %v1041
      %v1044 = vadd.f32 %v864, %v1042
      %v1045 = vpack.c.bf16 %v1044, %v1043
      %1046 = vmatprep.subr.bf16.mxu0 0
      %1047 = vmatpush1.bf16.msra.mxu0 %v1045
      %1048 = vmatprep.subr.bf16.mxu0 0
      %1049 = vmatpush1.bf16.msra.mxu0 0
      %1050 = vmatprep.subr.bf16.mxu0 0
      %1051 = vmatpush1.bf16.msra.mxu0 0
      %1052 = vmatprep.subr.bf16.mxu0 0
      %1053 = vmatpush1.bf16.msra.mxu0 0
      %1054 = vmatprep.subr.bf16.mxu0 0
      %1055 = vmatpush1.bf16.msra.mxu0 0
      %1056 = vmatprep.subr.bf16.mxu0 0
      %1057 = vmatpush1.bf16.msra.mxu0 0
      %1058 = vmatprep.subr.bf16.mxu0 0
      %1059 = vmatpush1.bf16.msra.mxu0 0
      %1060 = vmatprep.subr.bf16.mxu0 0
      %1061 = vmatpush1.bf16.msra.mxu0 0
      %1062 = vmatprep.subr.bf16.mxu0 0
      %1063 = vmatpush1.bf16.msra.mxu0 0
      %1064 = vmatprep.subr.bf16.mxu0 0
      %1065 = vmatpush1.bf16.msra.mxu0 0
      %1066 = vmatprep.subr.bf16.mxu0 0
      %1067 = vmatpush1.bf16.msra.mxu0 0
      %1068 = vmatprep.subr.bf16.mxu0 0
      %1069 = vmatpush1.bf16.msra.mxu0 0
      %1070 = vmatprep.subr.bf16.mxu0 0
      %1071 = vmatpush1.bf16.msra.mxu0 0
      %1072 = vmatprep.subr.bf16.mxu0 0
      %1073 = vmatpush1.bf16.msra.mxu0 0
      %1074 = vmatprep.subr.bf16.mxu0 0
      %1075 = vmatpush1.bf16.msra.mxu0 0
      %1076 = vmatprep.subr.bf16.mxu0 0
      %1077 = vmatpush1.bf16.msra.mxu0 0
      %1078 = vmatprep.mubr.bf16.mxu0 0
      %1079 = vmatmul.mubr.bf16.gmra.mrb[0].mxu0 %v125
      %v1080 = vpop.f32.mrb[0].mxu0
      %v1081 = vadd.f32 0.0, %v1080
      %v1082 = vpop.f32.mrb[0].mxu0
      %v1083 = vpop.f32.mrb[0].mxu0
      %v1084 = vadd.f32 0.0, %v1083
      %v1085 = vpop.f32.mrb[0].mxu0
      %1086 = vdwg.mxu0
      %v1087 = vpack.c.bf16 %v1084, %v1081
      %1088 = vmatprep.subr.bf16.mxu0 0
      %1089 = vmatpush1.bf16.msra.mxu0 %v84
      %1090 = vmatprep.subr.bf16.mxu0 0
      %1091 = vmatpush1.bf16.msra.mxu0 %v85
      %1092 = vmatprep.subr.bf16.mxu0 0
      %1093 = vmatpush1.bf16.msra.mxu0 %v86
      %1094 = vmatprep.subr.bf16.mxu0 0
      %1095 = vmatpush1.bf16.msra.mxu0 %v87
      %1096 = vmatprep.subr.bf16.mxu0 0
      %1097 = vmatpush1.bf16.msra.mxu0 %v88
      %1098 = vmatprep.subr.bf16.mxu0 0
      %1099 = vmatpush1.bf16.msra.mxu0 %v89
      %1100 = vmatprep.subr.bf16.mxu0 0
      %1101 = vmatpush1.bf16.msra.mxu0 %v90
      %1102 = vmatprep.subr.bf16.mxu0 0
      %1103 = vmatpush1.bf16.msra.mxu0 %v91
      %1104 = vmatprep.subr.bf16.mxu0 0
      %1105 = vmatpush1.bf16.msra.mxu0 0
      %1106 = vmatprep.subr.bf16.mxu0 0
      %1107 = vmatpush1.bf16.msra.mxu0 0
      %1108 = vmatprep.subr.bf16.mxu0 0
      %1109 = vmatpush1.bf16.msra.mxu0 0
      %1110 = vmatprep.subr.bf16.mxu0 0
      %1111 = vmatpush1.bf16.msra.mxu0 0
      %1112 = vmatprep.subr.bf16.mxu0 0
      %1113 = vmatpush1.bf16.msra.mxu0 0
      %1114 = vmatprep.subr.bf16.mxu0 0
      %1115 = vmatpush1.bf16.msra.mxu0 0
      %1116 = vmatprep.subr.bf16.mxu0 0
      %1117 = vmatpush1.bf16.msra.mxu0 0
      %1118 = vmatprep.subr.bf16.mxu0 0
      %1119 = vmatpush1.bf16.msra.mxu0 0
      %1120 = vmatprep.mubr.bf16.mxu0 0
      %1121 = vmatmul.mubr.bf16.gmra.mrb[0].mxu0 %v1087
      %v1122 = vpop.f32.mrb[0].mxu0
      %v1123 = vadd.f32 %v97, %v1122
      %v1124 = vpop.f32.mrb[0].mxu0
      %v1125 = vpop.f32.mrb[0].mxu0
      %v1126 = vadd.f32 %v97, %v1125
      %v1127 = vpop.f32.mrb[0].mxu0
      %1128 = vdwg.mxu0
      %v1129 = vtanh.pop %v1123
      %v1130 = vtanh.pop %v1126
      %v1131 = vmul.f32 %v393, %v1129
      %v1132 = vmul.f32 %v393, %v1130
      %v1133 = vadd.f32 %v863, %v1131
      %v1134 = vadd.f32 %v864, %v1132
      %v1135 = vpack.c.bf16 %v1134, %v1133
      %1136 = vmatprep.subr.bf16.mxu0 0
      %1137 = vmatpush1.bf16.msra.mxu0 %v1135
      %1138 = vmatprep.subr.bf16.mxu0 0
      %1139 = vmatpush1.bf16.msra.mxu0 0
      %1140 = vmatprep.subr.bf16.mxu0 0
      %1141 = vmatpush1.bf16.msra.mxu0 0
      %1142 = vmatprep.subr.bf16.mxu0 0
      %1143 = vmatpush1.bf16.msra.mxu0 0
      %1144 = vmatprep.subr.bf16.mxu0 0
      %1145 = vmatpush1.bf16.msra.mxu0 0
      %1146 = vmatprep.subr.bf16.mxu0 0
      %1147 = vmatpush1.bf16.msra.mxu0 0
      %1148 = vmatprep.subr.bf16.mxu0 0
      %1149 = vmatpush1.bf16.msra.mxu0 0
      %1150 = vmatprep.subr.bf16.mxu0 0
      %1151 = vmatpush1.bf16.msra.mxu0 0
      %1152 = vmatprep.subr.bf16.mxu0 0
      %1153 = vmatpush1.bf16.msra.mxu0 0
      %1154 = vmatprep.subr.bf16.mxu0 0
      %1155 = vmatpush1.bf16.msra.mxu0 0
      %1156 = vmatprep.subr.bf16.mxu0 0
      %1157 = vmatpush1.bf16.msra.mxu0 0
      %1158 = vmatprep.subr.bf16.mxu0 0
      %1159 = vmatpush1.bf16.msra.mxu0 0
      %1160 = vmatprep.subr.bf16.mxu0 0
      %1161 = vmatpush1.bf16.msra.mxu0 0
      %1162 = vmatprep.subr.bf16.mxu0 0
      %1163 = vmatpush1.bf16.msra.mxu0 0
      %1164 = vmatprep.subr.bf16.mxu0 0
      %1165 = vmatpush1.bf16.msra.mxu0 0
      %1166 = vmatprep.subr.bf16.mxu0 0
      %1167 = vmatpush1.bf16.msra.mxu0 0
      %1168 = vmatprep.mubr.bf16.mxu0 0
      %1169 = vmatmul.mubr.bf16.gmra.mrb[0].mxu0 %v125
      %v1170 = vpop.f32.mrb[0].mxu0
      %v1171 = vadd.f32 0.0, %v1170
      %v1172 = vpop.f32.mrb[0].mxu0
      %v1173 = vpop.f32.mrb[0].mxu0
      %v1174 = vadd.f32 0.0, %v1173
      %v1175 = vpop.f32.mrb[0].mxu0
      %1176 = vdwg.mxu0
      %v1177 = vpack.c.bf16 %v1174, %v1171
      %1178 = vmatprep.subr.bf16.mxu0 0
      %1179 = vmatpush1.bf16.msra.mxu0 %v84
      %1180 = vmatprep.subr.bf16.mxu0 0
      %1181 = vmatpush1.bf16.msra.mxu0 %v85
      %1182 = vmatprep.subr.bf16.mxu0 0
      %1183 = vmatpush1.bf16.msra.mxu0 %v86
      %1184 = vmatprep.subr.bf16.mxu0 0
      %1185 = vmatpush1.bf16.msra.mxu0 %v87
      %1186 = vmatprep.subr.bf16.mxu0 0
      %1187 = vmatpush1.bf16.msra.mxu0 %v88
      %1188 = vmatprep.subr.bf16.mxu0 0
      %1189 = vmatpush1.bf16.msra.mxu0 %v89
      %1190 = vmatprep.subr.bf16.mxu0 0
      %1191 = vmatpush1.bf16.msra.mxu0 %v90
      %1192 = vmatprep.subr.bf16.mxu0 0
      %1193 = vmatpush1.bf16.msra.mxu0 %v91
      %1194 = vmatprep.subr.bf16.mxu0 0
      %1195 = vmatpush1.bf16.msra.mxu0 0
      %1196 = vmatprep.subr.bf16.mxu0 0
      %1197 = vmatpush1.bf16.msra.mxu0 0
      %1198 = vmatprep.subr.bf16.mxu0 0
      %1199 = vmatpush1.bf16.msra.mxu0 0
      %1200 = vmatprep.subr.bf16.mxu0 0
      %1201 = vmatpush1.bf16.msra.mxu0 0
      %1202 = vmatprep.subr.bf16.mxu0 0
      %1203 = vmatpush1.bf16.msra.mxu0 0
      %1204 = vmatprep.subr.bf16.mxu0 0
      %1205 = vmatpush1.bf16.msra.mxu0 0
      %1206 = vmatprep.subr.bf16.mxu0 0
      %1207 = vmatpush1.bf16.msra.mxu0 0
      %1208 = vmatprep.subr.bf16.mxu0 0
      %1209 = vmatpush1.bf16.msra.mxu0 0
      %1210 = vmatprep.mubr.bf16.mxu0 0
      %1211 = vmatmul.mubr.bf16.gmra.mrb[0].mxu0 %v1177
      %v1212 = vpop.f32.mrb[0].mxu0
      %v1213 = vadd.f32 %v97, %v1212
      %v1214 = vpop.f32.mrb[0].mxu0
      %v1215 = vpop.f32.mrb[0].mxu0
      %v1216 = vadd.f32 %v97, %v1215
      %v1217 = vpop.f32.mrb[0].mxu0
      %1218 = vdwg.mxu0
      %v1219 = vtanh.pop %v1213
      %v1220 = vtanh.pop %v1216
      %v1221 = vadd.f32 %v1039, %v1129
      %v1222 = vadd.f32 %v1040, %v1130
      %v1223 = vmul.f32 %v1221, 2.0
      %v1224 = vmul.f32 %v1222, 2.0
      %v1225 = vadd.f32 %v949, %v1223
      %v1226 = vadd.f32 %v950, %v1224
      %v1227 = vadd.f32 %v1225, %v1219
      %v1228 = vadd.f32 %v1226, %v1220
      %v1229 = vmul.f32 %v492, %v1227
      %v1230 = vmul.f32 %v492, %v1228
      %v1231 = vadd.f32 %v863, %v1229
      %v1232 = vadd.f32 %v864, %v1230
      %v1233 = vpack.c.bf16 %v1232, %v1231
      %1234 = vmatprep.subr.bf16.mxu0 0
      %1235 = vmatpush1.bf16.msra.mxu0 %v1233
      %1236 = vmatprep.subr.bf16.mxu0 0
      %1237 = vmatpush1.bf16.msra.mxu0 0
      %1238 = vmatprep.subr.bf16.mxu0 0
      %1239 = vmatpush1.bf16.msra.mxu0 0
      %1240 = vmatprep.subr.bf16.mxu0 0
      %1241 = vmatpush1.bf16.msra.mxu0 0
      %1242 = vmatprep.subr.bf16.mxu0 0
      %1243 = vmatpush1.bf16.msra.mxu0 0
      %1244 = vmatprep.subr.bf16.mxu0 0
      %1245 = vmatpush1.bf16.msra.mxu0 0
      %1246 = vmatprep.subr.bf16.mxu0 0
      %1247 = vmatpush1.bf16.msra.mxu0 0
      %1248 = vmatprep.subr.bf16.mxu0 0
      %1249 = vmatpush1.bf16.msra.mxu0 0
      %1250 = vmatprep.subr.bf16.mxu0 0
      %1251 = vmatpush1.bf16.msra.mxu0 0
      %1252 = vmatprep.subr.bf16.mxu0 0
      %1253 = vmatpush1.bf16.msra.mxu0 0
      %1254 = vmatprep.subr.bf16.mxu0 0
      %1255 = vmatpush1.bf16.msra.mxu0 0
      %1256 = vmatprep.subr.bf16.mxu0 0
      %1257 = vmatpush1.bf16.msra.mxu0 0
      %1258 = vmatprep.subr.bf16.mxu0 0
      %1259 = vmatpush1.bf16.msra.mxu0 0
      %1260 = vmatprep.subr.bf16.mxu0 0
      %1261 = vmatpush1.bf16.msra.mxu0 0
      %1262 = vmatprep.subr.bf16.mxu0 0
      %1263 = vmatpush1.bf16.msra.mxu0 0
      %1264 = vmatprep.subr.bf16.mxu0 0
      %1265 = vmatpush1.bf16.msra.mxu0 0
      %1266 = vmatprep.mubr.bf16.mxu0 0
      %1267 = vmatmul.mubr.bf16.gmra.mrb[0].mxu0 %v125
      %v1268 = vpop.f32.mrb[0].mxu0
      %v1269 = vadd.f32 0.0, %v1268
      %v1270 = vpop.f32.mrb[0].mxu0
      %v1271 = vpop.f32.mrb[0].mxu0
      %v1272 = vadd.f32 0.0, %v1271
      %v1273 = vpop.f32.mrb[0].mxu0
      %1274 = vdwg.mxu0
      %v1275 = vpack.c.bf16 %v1272, %v1269
      %1276 = vmatprep.subr.bf16.mxu0 0
      %1277 = vmatpush1.bf16.msra.mxu0 %v84
      %1278 = vmatprep.subr.bf16.mxu0 0
      %1279 = vmatpush1.bf16.msra.mxu0 %v85
      %1280 = vmatprep.subr.bf16.mxu0 0
      %1281 = vmatpush1.bf16.msra.mxu0 %v86
      %1282 = vmatprep.subr.bf16.mxu0 0
      %1283 = vmatpush1.bf16.msra.mxu0 %v87
      %1284 = vmatprep.subr.bf16.mxu0 0
      %1285 = vmatpush1.bf16.msra.mxu0 %v88
      %1286 = vmatprep.subr.bf16.mxu0 0
      %1287 = vmatpush1.bf16.msra.mxu0 %v89
      %1288 = vmatprep.subr.bf16.mxu0 0
      %1289 = vmatpush1.bf16.msra.mxu0 %v90
      %1290 = vmatprep.subr.bf16.mxu0 0
      %1291 = vmatpush1.bf16.msra.mxu0 %v91
      %1292 = vmatprep.subr.bf16.mxu0 0
      %1293 = vmatpush1.bf16.msra.mxu0 0
      %1294 = vmatprep.subr.bf16.mxu0 0
      %1295 = vmatpush1.bf16.msra.mxu0 0
      %1296 = vmatprep.subr.bf16.mxu0 0
      %1297 = vmatpush1.bf16.msra.mxu0 0
      %1298 = vmatprep.subr.bf16.mxu0 0
      %1299 = vmatpush1.bf16.msra.mxu0 0
      %1300 = vmatprep.subr.bf16.mxu0 0
      %1301 = vmatpush1.bf16.msra.mxu0 0
      %1302 = vmatprep.subr.bf16.mxu0 0
      %1303 = vmatpush1.bf16.msra.mxu0 0
      %1304 = vmatprep.subr.bf16.mxu0 0
      %1305 = vmatpush1.bf16.msra.mxu0 0
      %1306 = vmatprep.subr.bf16.mxu0 0
      %1307 = vmatpush1.bf16.msra.mxu0 0
      %1308 = vmatprep.mubr.bf16.mxu0 0
      %1309 = vmatmul.mubr.bf16.gmra.mrb[0].mxu0 %v1275
      %v1310 = vpop.f32.mrb[0].mxu0
      %v1311 = vadd.f32 %v97, %v1310
      %v1312 = vpop.f32.mrb[0].mxu0
      %v1313 = vpop.f32.mrb[0].mxu0
      %v1314 = vadd.f32 %v97, %v1313
      %v1315 = vpop.f32.mrb[0].mxu0
      %1316 = vdwg.mxu0
      %v1317 = vtanh.pop %v1311
      %v1318 = vtanh.pop %v1314
      %v1319 = vmul.f32 %v212, %v1317
      %v1320 = vmul.f32 %v212, %v1318
      %v1321 = vadd.f32 %v1231, %v1319
      %v1322 = vadd.f32 %v1232, %v1320
      %v1323 = vpack.c.bf16 %v1322, %v1321
      %1324 = vmatprep.subr.bf16.mxu0 0
      %1325 = vmatpush1.bf16.msra.mxu0 %v1323
      %1326 = vmatprep.subr.bf16.mxu0 0
      %1327 = vmatpush1.bf16.msra.mxu0 0
      %1328 = vmatprep.subr.bf16.mxu0 0
      %1329 = vmatpush1.bf16.msra.mxu0 0
      %1330 = vmatprep.subr.bf16.mxu0 0
      %1331 = vmatpush1.bf16.msra.mxu0 0
      %1332 = vmatprep.subr.bf16.mxu0 0
      %1333 = vmatpush1.bf16.msra.mxu0 0
      %1334 = vmatprep.subr.bf16.mxu0 0
      %1335 = vmatpush1.bf16.msra.mxu0 0
      %1336 = vmatprep.subr.bf16.mxu0 0
      %1337 = vmatpush1.bf16.msra.mxu0 0
      %1338 = vmatprep.subr.bf16.mxu0 0
      %1339 = vmatpush1.bf16.msra.mxu0 0
      %1340 = vmatprep.subr.bf16.mxu0 0
      %1341 = vmatpush1.bf16.msra.mxu0 0
      %1342 = vmatprep.subr.bf16.mxu0 0
      %1343 = vmatpush1.bf16.msra.mxu0 0
      %1344 = vmatprep.subr.bf16.mxu0 0
      %1345 = vmatpush1.bf16.msra.mxu0 0
      %1346 = vmatprep.subr.bf16.mxu0 0
      %1347 = vmatpush1.bf16.msra.mxu0 0
      %1348 = vmatprep.subr.bf16.mxu0 0
      %1349 = vmatpush1.bf16.msra.mxu0 0
      %1350 = vmatprep.subr.bf16.mxu0 0
      %1351 = vmatpush1.bf16.msra.mxu0 0
      %1352 = vmatprep.subr.bf16.mxu0 0
      %1353 = vmatpush1.bf16.msra.mxu0 0
      %1354 = vmatprep.subr.bf16.mxu0 0
      %1355 = vmatpush1.bf16.msra.mxu0 0
      %1356 = vmatprep.mubr.bf16.mxu0 0
      %1357 = vmatmul.mubr.bf16.gmra.mrb[0].mxu0 %v125
      %v1358 = vpop.f32.mrb[0].mxu0
      %v1359 = vadd.f32 0.0, %v1358
      %v1360 = vpop.f32.mrb[0].mxu0
      %v1361 = vpop.f32.mrb[0].mxu0
      %v1362 = vadd.f32 0.0, %v1361
      %v1363 = vpop.f32.mrb[0].mxu0
      %1364 = vdwg.mxu0
      %v1365 = vpack.c.bf16 %v1362, %v1359
      %1366 = vmatprep.subr.bf16.mxu0 0
      %1367 = vmatpush1.bf16.msra.mxu0 %v84
      %1368 = vmatprep.subr.bf16.mxu0 0
      %1369 = vmatpush1.bf16.msra.mxu0 %v85
      %1370 = vmatprep.subr.bf16.mxu0 0
      %1371 = vmatpush1.bf16.msra.mxu0 %v86
      %1372 = vmatprep.subr.bf16.mxu0 0
      %1373 = vmatpush1.bf16.msra.mxu0 %v87
      %1374 = vmatprep.subr.bf16.mxu0 0
      %1375 = vmatpush1.bf16.msra.mxu0 %v88
      %1376 = vmatprep.subr.bf16.mxu0 0
      %1377 = vmatpush1.bf16.msra.mxu0 %v89
      %1378 = vmatprep.subr.bf16.mxu0 0
      %1379 = vmatpush1.bf16.msra.mxu0 %v90
      %1380 = vmatprep.subr.bf16.mxu0 0
      %1381 = vmatpush1.bf16.msra.mxu0 %v91
      %1382 = vmatprep.subr.bf16.mxu0 0
      %1383 = vmatpush1.bf16.msra.mxu0 0
      %1384 = vmatprep.subr.bf16.mxu0 0
      %1385 = vmatpush1.bf16.msra.mxu0 0
      %1386 = vmatprep.subr.bf16.mxu0 0
      %1387 = vmatpush1.bf16.msra.mxu0 0
      %1388 = vmatprep.subr.bf16.mxu0 0
      %1389 = vmatpush1.bf16.msra.mxu0 0
      %1390 = vmatprep.subr.bf16.mxu0 0
      %1391 = vmatpush1.bf16.msra.mxu0 0
      %1392 = vmatprep.subr.bf16.mxu0 0
      %1393 = vmatpush1.bf16.msra.mxu0 0
      %1394 = vmatprep.subr.bf16.mxu0 0
      %1395 = vmatpush1.bf16.msra.mxu0 0
      %1396 = vmatprep.subr.bf16.mxu0 0
      %1397 = vmatpush1.bf16.msra.mxu0 0
      %1398 = vmatprep.mubr.bf16.mxu0 0
      %1399 = vmatmul.mubr.bf16.gmra.mrb[0].mxu0 %v1365
      %v1400 = vpop.f32.mrb[0].mxu0
      %v1401 = vadd.f32 %v97, %v1400
      %v1402 = vpop.f32.mrb[0].mxu0
      %v1403 = vpop.f32.mrb[0].mxu0
      %v1404 = vadd.f32 %v97, %v1403
      %v1405 = vpop.f32.mrb[0].mxu0
      %1406 = vdwg.mxu0
      %v1407 = vtanh.pop %v1401
      %v1408 = vtanh.pop %v1404
      %v1409 = vmul.f32 %v212, %v1407
      %v1410 = vmul.f32 %v212, %v1408
      %v1411 = vadd.f32 %v1231, %v1409
      %v1412 = vadd.f32 %v1232, %v1410
      %v1413 = vpack.c.bf16 %v1412, %v1411
      %1414 = vmatprep.subr.bf16.mxu0 0
      %1415 = vmatpush1.bf16.msra.mxu0 %v1413
      %1416 = vmatprep.subr.bf16.mxu0 0
      %1417 = vmatpush1.bf16.msra.mxu0 0
      %1418 = vmatprep.subr.bf16.mxu0 0
      %1419 = vmatpush1.bf16.msra.mxu0 0
      %1420 = vmatprep.subr.bf16.mxu0 0
      %1421 = vmatpush1.bf16.msra.mxu0 0
      %1422 = vmatprep.subr.bf16.mxu0 0
      %1423 = vmatpush1.bf16.msra.mxu0 0
      %1424 = vmatprep.subr.bf16.mxu0 0
      %1425 = vmatpush1.bf16.msra.mxu0 0
      %1426 = vmatprep.subr.bf16.mxu0 0
      %1427 = vmatpush1.bf16.msra.mxu0 0
      %1428 = vmatprep.subr.bf16.mxu0 0
      %1429 = vmatpush1.bf16.msra.mxu0 0
      %1430 = vmatprep.subr.bf16.mxu0 0
      %1431 = vmatpush1.bf16.msra.mxu0 0
      %1432 = vmatprep.subr.bf16.mxu0 0
      %1433 = vmatpush1.bf16.msra.mxu0 0
      %1434 = vmatprep.subr.bf16.mxu0 0
      %1435 = vmatpush1.bf16.msra.mxu0 0
      %1436 = vmatprep.subr.bf16.mxu0 0
      %1437 = vmatpush1.bf16.msra.mxu0 0
      %1438 = vmatprep.subr.bf16.mxu0 0
      %1439 = vmatpush1.bf16.msra.mxu0 0
      %1440 = vmatprep.subr.bf16.mxu0 0
      %1441 = vmatpush1.bf16.msra.mxu0 0
      %1442 = vmatprep.subr.bf16.mxu0 0
      %1443 = vmatpush1.bf16.msra.mxu0 0
      %1444 = vmatprep.subr.bf16.mxu0 0
      %1445 = vmatpush1.bf16.msra.mxu0 0
      %1446 = vmatprep.mubr.bf16.mxu0 0
      %1447 = vmatmul.mubr.bf16.gmra.mrb[0].mxu0 %v125
      %v1448 = vpop.f32.mrb[0].mxu0
      %v1449 = vadd.f32 0.0, %v1448
      %v1450 = vpop.f32.mrb[0].mxu0
      %v1451 = vpop.f32.mrb[0].mxu0
      %v1452 = vadd.f32 0.0, %v1451
      %v1453 = vpop.f32.mrb[0].mxu0
      %1454 = vdwg.mxu0
      %v1455 = vpack.c.bf16 %v1452, %v1449
      %1456 = vmatprep.subr.bf16.mxu0 0
      %1457 = vmatpush1.bf16.msra.mxu0 %v84
      %1458 = vmatprep.subr.bf16.mxu0 0
      %1459 = vmatpush1.bf16.msra.mxu0 %v85
      %1460 = vmatprep.subr.bf16.mxu0 0
      %1461 = vmatpush1.bf16.msra.mxu0 %v86
      %1462 = vmatprep.subr.bf16.mxu0 0
      %1463 = vmatpush1.bf16.msra.mxu0 %v87
      %1464 = vmatprep.subr.bf16.mxu0 0
      %1465 = vmatpush1.bf16.msra.mxu0 %v88
      %1466 = vmatprep.subr.bf16.mxu0 0
      %1467 = vmatpush1.bf16.msra.mxu0 %v89
      %1468 = vmatprep.subr.bf16.mxu0 0
      %1469 = vmatpush1.bf16.msra.mxu0 %v90
      %1470 = vmatprep.subr.bf16.mxu0 0
      %1471 = vmatpush1.bf16.msra.mxu0 %v91
      %1472 = vmatprep.subr.bf16.mxu0 0
      %1473 = vmatpush1.bf16.msra.mxu0 0
      %1474 = vmatprep.subr.bf16.mxu0 0
      %1475 = vmatpush1.bf16.msra.mxu0 0
      %1476 = vmatprep.subr.bf16.mxu0 0
      %1477 = vmatpush1.bf16.msra.mxu0 0
      %1478 = vmatprep.subr.bf16.mxu0 0
      %1479 = vmatpush1.bf16.msra.mxu0 0
      %1480 = vmatprep.subr.bf16.mxu0 0
      %1481 = vmatpush1.bf16.msra.mxu0 0
      %1482 = vmatprep.subr.bf16.mxu0 0
      %1483 = vmatpush1.bf16.msra.mxu0 0
      %1484 = vmatprep.subr.bf16.mxu0 0
      %1485 = vmatpush1.bf16.msra.mxu0 0
      %1486 = vmatprep.subr.bf16.mxu0 0
      %1487 = vmatpush1.bf16.msra.mxu0 0
      %1488 = vmatprep.mubr.bf16.mxu0 0
      %1489 = vmatmul.mubr.bf16.gmra.mrb[0].mxu0 %v1455
      %v1490 = vpop.f32.mrb[0].mxu0
      %v1491 = vadd.f32 %v97, %v1490
      %v1492 = vpop.f32.mrb[0].mxu0
      %v1493 = vpop.f32.mrb[0].mxu0
      %v1494 = vadd.f32 %v97, %v1493
      %v1495 = vpop.f32.mrb[0].mxu0
      %1496 = vdwg.mxu0
      %v1497 = vtanh.pop %v1491
      %v1498 = vtanh.pop %v1494
      %v1499 = vmul.f32 %v393, %v1497
      %v1500 = vmul.f32 %v393, %v1498
      %v1501 = vadd.f32 %v1231, %v1499
      %v1502 = vadd.f32 %v1232, %v1500
      %v1503 = vpack.c.bf16 %v1502, %v1501
      %1504 = vmatprep.subr.bf16.mxu0 0
      %1505 = vmatpush1.bf16.msra.mxu0 %v1503
      %1506 = vmatprep.subr.bf16.mxu0 0
      %1507 = vmatpush1.bf16.msra.mxu0 0
      %1508 = vmatprep.subr.bf16.mxu0 0
      %1509 = vmatpush1.bf16.msra.mxu0 0
      %1510 = vmatprep.subr.bf16.mxu0 0
      %1511 = vmatpush1.bf16.msra.mxu0 0
      %1512 = vmatprep.subr.bf16.mxu0 0
      %1513 = vmatpush1.bf16.msra.mxu0 0
      %1514 = vmatprep.subr.bf16.mxu0 0
      %1515 = vmatpush1.bf16.msra.mxu0 0
      %1516 = vmatprep.subr.bf16.mxu0 0
      %1517 = vmatpush1.bf16.msra.mxu0 0
      %1518 = vmatprep.subr.bf16.mxu0 0
      %1519 = vmatpush1.bf16.msra.mxu0 0
      %1520 = vmatprep.subr.bf16.mxu0 0
      %1521 = vmatpush1.bf16.msra.mxu0 0
      %1522 = vmatprep.subr.bf16.mxu0 0
      %1523 = vmatpush1.bf16.msra.mxu0 0
      %1524 = vmatprep.subr.bf16.mxu0 0
      %1525 = vmatpush1.bf16.msra.mxu0 0
      %1526 = vmatprep.subr.bf16.mxu0 0
      %1527 = vmatpush1.bf16.msra.mxu0 0
      %1528 = vmatprep.subr.bf16.mxu0 0
      %1529 = vmatpush1.bf16.msra.mxu0 0
      %1530 = vmatprep.subr.bf16.mxu0 0
      %1531 = vmatpush1.bf16.msra.mxu0 0
      %1532 = vmatprep.subr.bf16.mxu0 0
      %1533 = vmatpush1.bf16.msra.mxu0 0
      %1534 = vmatprep.subr.bf16.mxu0 0
      %1535 = vmatpush1.bf16.msra.mxu0 0
      %1536 = vmatprep.mubr.bf16.mxu0 0
      %1537 = vmatmul.mubr.bf16.gmra.mrb[0].mxu0 %v125
      %v1538 = vpop.f32.mrb[0].mxu0
      %v1539 = vadd.f32 0.0, %v1538
      %v1540 = vpop.f32.mrb[0].mxu0
      %v1541 = vpop.f32.mrb[0].mxu0
      %v1542 = vadd.f32 0.0, %v1541
      %v1543 = vpop.f32.mrb[0].mxu0
      %1544 = vdwg.mxu0
      %v1545 = vpack.c.bf16 %v1542, %v1539
      %1546 = vmatprep.subr.bf16.mxu0 0
      %1547 = vmatpush1.bf16.msra.mxu0 %v84
      %1548 = vmatprep.subr.bf16.mxu0 0
      %1549 = vmatpush1.bf16.msra.mxu0 %v85
      %1550 = vmatprep.subr.bf16.mxu0 0
      %1551 = vmatpush1.bf16.msra.mxu0 %v86
      %1552 = vmatprep.subr.bf16.mxu0 0
      %1553 = vmatpush1.bf16.msra.mxu0 %v87
      %1554 = vmatprep.subr.bf16.mxu0 0
      %1555 = vmatpush1.bf16.msra.mxu0 %v88
      %1556 = vmatprep.subr.bf16.mxu0 0
      %1557 = vmatpush1.bf16.msra.mxu0 %v89
      %1558 = vmatprep.subr.bf16.mxu0 0
      %1559 = vmatpush1.bf16.msra.mxu0 %v90
      %1560 = vmatprep.subr.bf16.mxu0 0
      %1561 = vmatpush1.bf16.msra.mxu0 %v91
      %1562 = vmatprep.subr.bf16.mxu0 0
      %1563 = vmatpush1.bf16.msra.mxu0 0
      %1564 = vmatprep.subr.bf16.mxu0 0
      %1565 = vmatpush1.bf16.msra.mxu0 0
      %1566 = vmatprep.subr.bf16.mxu0 0
      %1567 = vmatpush1.bf16.msra.mxu0 0
      %1568 = vmatprep.subr.bf16.mxu0 0
      %1569 = vmatpush1.bf16.msra.mxu0 0
      %1570 = vmatprep.subr.bf16.mxu0 0
      %1571 = vmatpush1.bf16.msra.mxu0 0
      %1572 = vmatprep.subr.bf16.mxu0 0
      %1573 = vmatpush1.bf16.msra.mxu0 0
      %1574 = vmatprep.subr.bf16.mxu0 0
      %1575 = vmatpush1.bf16.msra.mxu0 0
      %1576 = vmatprep.subr.bf16.mxu0 0
      %1577 = vmatpush1.bf16.msra.mxu0 0
      %1578 = vmatprep.mubr.bf16.mxu0 0
      %1579 = vmatmul.mubr.bf16.gmra.mrb[0].mxu0 %v1545
      %v1580 = vpop.f32.mrb[0].mxu0
      %v1581 = vadd.f32 %v97, %v1580
      %v1582 = vpop.f32.mrb[0].mxu0
      %v1583 = vpop.f32.mrb[0].mxu0
      %v1584 = vadd.f32 %v97, %v1583
      %v1585 = vpop.f32.mrb[0].mxu0
      %1586 = vdwg.mxu0
      %v1587 = vtanh.pop %v1581
      %v1588 = vtanh.pop %v1584
      %v1589 = vadd.f32 %v1407, %v1497
      %v1590 = vadd.f32 %v1408, %v1498
      %v1591 = vmul.f32 %v1589, 2.0
      %v1592 = vmul.f32 %v1590, 2.0
      %v1593 = vadd.f32 %v1317, %v1591
      %v1594 = vadd.f32 %v1318, %v1592
      %v1595 = vadd.f32 %v1593, %v1587
      %v1596 = vadd.f32 %v1594, %v1588
      %v1597 = vmul.f32 %v492, %v1595
      %v1598 = vmul.f32 %v492, %v1596
      %v1599 = vadd.f32 %v1231, %v1597
      %v1600 = vadd.f32 %v1232, %v1598
      %v1601 = vpack.c.bf16 %v1600, %v1599
      %1602 = vmatprep.subr.bf16.mxu0 0
      %1603 = vmatpush1.bf16.msra.mxu0 %v1601
      %1604 = vmatprep.subr.bf16.mxu0 0
      %1605 = vmatpush1.bf16.msra.mxu0 0
      %1606 = vmatprep.subr.bf16.mxu0 0
      %1607 = vmatpush1.bf16.msra.mxu0 0
      %1608 = vmatprep.subr.bf16.mxu0 0
      %1609 = vmatpush1.bf16.msra.mxu0 0
      %1610 = vmatprep.subr.bf16.mxu0 0
      %1611 = vmatpush1.bf16.msra.mxu0 0
      %1612 = vmatprep.subr.bf16.mxu0 0
      %1613 = vmatpush1.bf16.msra.mxu0 0
      %1614 = vmatprep.subr.bf16.mxu0 0
      %1615 = vmatpush1.bf16.msra.mxu0 0
      %1616 = vmatprep.subr.bf16.mxu0 0
      %1617 = vmatpush1.bf16.msra.mxu0 0
      %1618 = vmatprep.subr.bf16.mxu0 0
      %1619 = vmatpush1.bf16.msra.mxu0 0
      %1620 = vmatprep.subr.bf16.mxu0 0
      %1621 = vmatpush1.bf16.msra.mxu0 0
      %1622 = vmatprep.subr.bf16.mxu0 0
      %1623 = vmatpush1.bf16.msra.mxu0 0
      %1624 = vmatprep.subr.bf16.mxu0 0
      %1625 = vmatpush1.bf16.msra.mxu0 0
      %1626 = vmatprep.subr.bf16.mxu0 0
      %1627 = vmatpush1.bf16.msra.mxu0 0
      %1628 = vmatprep.subr.bf16.mxu0 0
      %1629 = vmatpush1.bf16.msra.mxu0 0
      %1630 = vmatprep.subr.bf16.mxu0 0
      %1631 = vmatpush1.bf16.msra.mxu0 0
      %1632 = vmatprep.subr.bf16.mxu0 0
      %1633 = vmatpush1.bf16.msra.mxu0 0
      %1634 = vmatprep.mubr.bf16.mxu0 0
      %1635 = vmatmul.mubr.bf16.gmra.mrb[0].mxu0 %v125
      %v1636 = vpop.f32.mrb[0].mxu0
      %v1637 = vadd.f32 0.0, %v1636
      %v1638 = vpop.f32.mrb[0].mxu0
      %v1639 = vpop.f32.mrb[0].mxu0
      %v1640 = vadd.f32 0.0, %v1639
      %v1641 = vpop.f32.mrb[0].mxu0
      %1642 = vdwg.mxu0
      %v1643 = vpack.c.bf16 %v1640, %v1637
      %1644 = vmatprep.subr.bf16.mxu0 0
      %1645 = vmatpush1.bf16.msra.mxu0 %v84
      %1646 = vmatprep.subr.bf16.mxu0 0
      %1647 = vmatpush1.bf16.msra.mxu0 %v85
      %1648 = vmatprep.subr.bf16.mxu0 0
      %1649 = vmatpush1.bf16.msra.mxu0 %v86
      %1650 = vmatprep.subr.bf16.mxu0 0
      %1651 = vmatpush1.bf16.msra.mxu0 %v87
      %1652 = vmatprep.subr.bf16.mxu0 0
      %1653 = vmatpush1.bf16.msra.mxu0 %v88
      %1654 = vmatprep.subr.bf16.mxu0 0
      %1655 = vmatpush1.bf16.msra.mxu0 %v89
      %1656 = vmatprep.subr.bf16.mxu0 0
      %1657 = vmatpush1.bf16.msra.mxu0 %v90
      %1658 = vmatprep.subr.bf16.mxu0 0
      %1659 = vmatpush1.bf16.msra.mxu0 %v91
      %1660 = vmatprep.subr.bf16.mxu0 0
      %1661 = vmatpush1.bf16.msra.mxu0 0
      %1662 = vmatprep.subr.bf16.mxu0 0
      %1663 = vmatpush1.bf16.msra.mxu0 0
      %1664 = vmatprep.subr.bf16.mxu0 0
      %1665 = vmatpush1.bf16.msra.mxu0 0
      %1666 = vmatprep.subr.bf16.mxu0 0
      %1667 = vmatpush1.bf16.msra.mxu0 0
      %1668 = vmatprep.subr.bf16.mxu0 0
      %1669 = vmatpush1.bf16.msra.mxu0 0
      %1670 = vmatprep.subr.bf16.mxu0 0
      %1671 = vmatpush1.bf16.msra.mxu0 0
      %1672 = vmatprep.subr.bf16.mxu0 0
      %1673 = vmatpush1.bf16.msra.mxu0 0
      %1674 = vmatprep.subr.bf16.mxu0 0
      %1675 = vmatpush1.bf16.msra.mxu0 0
      %1676 = vmatprep.mubr.bf16.mxu0 0
      %1677 = vmatmul.mubr.bf16.gmra.mrb[0].mxu0 %v1643
      %v1678 = vpop.f32.mrb[0].mxu0
      %v1679 = vadd.f32 %v97, %v1678
      %v1680 = vpop.f32.mrb[0].mxu0
      %v1681 = vpop.f32.mrb[0].mxu0
      %v1682 = vadd.f32 %v97, %v1681
      %v1683 = vpop.f32.mrb[0].mxu0
      %1684 = vdwg.mxu0
      %v1685 = vtanh.pop %v1679
      %v1686 = vtanh.pop %v1682
      %v1687 = vmul.f32 %v212, %v1685
      %v1688 = vmul.f32 %v212, %v1686
      %v1689 = vadd.f32 %v1599, %v1687
      %v1690 = vadd.f32 %v1600, %v1688
      %v1691 = vpack.c.bf16 %v1690, %v1689
      %1692 = vmatprep.subr.bf16.mxu0 0
      %1693 = vmatpush1.bf16.msra.mxu0 %v1691
      %1694 = vmatprep.subr.bf16.mxu0 0
      %1695 = vmatpush1.bf16.msra.mxu0 0
      %1696 = vmatprep.subr.bf16.mxu0 0
      %1697 = vmatpush1.bf16.msra.mxu0 0
      %1698 = vmatprep.subr.bf16.mxu0 0
      %1699 = vmatpush1.bf16.msra.mxu0 0
      %1700 = vmatprep.subr.bf16.mxu0 0
      %1701 = vmatpush1.bf16.msra.mxu0 0
      %1702 = vmatprep.subr.bf16.mxu0 0
      %1703 = vmatpush1.bf16.msra.mxu0 0
      %1704 = vmatprep.subr.bf16.mxu0 0
      %1705 = vmatpush1.bf16.msra.mxu0 0
      %1706 = vmatprep.subr.bf16.mxu0 0
      %1707 = vmatpush1.bf16.msra.mxu0 0
      %1708 = vmatprep.subr.bf16.mxu0 0
      %1709 = vmatpush1.bf16.msra.mxu0 0
      %1710 = vmatprep.subr.bf16.mxu0 0
      %1711 = vmatpush1.bf16.msra.mxu0 0
      %1712 = vmatprep.subr.bf16.mxu0 0
      %1713 = vmatpush1.bf16.msra.mxu0 0
      %1714 = vmatprep.subr.bf16.mxu0 0
      %1715 = vmatpush1.bf16.msra.mxu0 0
      %1716 = vmatprep.subr.bf16.mxu0 0
      %1717 = vmatpush1.bf16.msra.mxu0 0
      %1718 = vmatprep.subr.bf16.mxu0 0
      %1719 = vmatpush1.bf16.msra.mxu0 0
      %1720 = vmatprep.subr.bf16.mxu0 0
      %1721 = vmatpush1.bf16.msra.mxu0 0
      %1722 = vmatprep.subr.bf16.mxu0 0
      %1723 = vmatpush1.bf16.msra.mxu0 0
      %1724 = vmatprep.mubr.bf16.mxu0 0
      %1725 = vmatmul.mubr.bf16.gmra.mrb[0].mxu0 %v125
      %v1726 = vpop.f32.mrb[0].mxu0
      %v1727 = vadd.f32 0.0, %v1726
      %v1728 = vpop.f32.mrb[0].mxu0
      %v1729 = vpop.f32.mrb[0].mxu0
      %v1730 = vadd.f32 0.0, %v1729
      %v1731 = vpop.f32.mrb[0].mxu0
      %1732 = vdwg.mxu0
      %v1733 = vpack.c.bf16 %v1730, %v1727
      %1734 = vmatprep.subr.bf16.mxu0 0
      %1735 = vmatpush1.bf16.msra.mxu0 %v84
      %1736 = vmatprep.subr.bf16.mxu0 0
      %1737 = vmatpush1.bf16.msra.mxu0 %v85
      %1738 = vmatprep.subr.bf16.mxu0 0
      %1739 = vmatpush1.bf16.msra.mxu0 %v86
      %1740 = vmatprep.subr.bf16.mxu0 0
      %1741 = vmatpush1.bf16.msra.mxu0 %v87
      %1742 = vmatprep.subr.bf16.mxu0 0
      %1743 = vmatpush1.bf16.msra.mxu0 %v88
      %1744 = vmatprep.subr.bf16.mxu0 0
      %1745 = vmatpush1.bf16.msra.mxu0 %v89
      %1746 = vmatprep.subr.bf16.mxu0 0
      %1747 = vmatpush1.bf16.msra.mxu0 %v90
      %1748 = vmatprep.subr.bf16.mxu0 0
      %1749 = vmatpush1.bf16.msra.mxu0 %v91
      %1750 = vmatprep.subr.bf16.mxu0 0
      %1751 = vmatpush1.bf16.msra.mxu0 0
      %1752 = vmatprep.subr.bf16.mxu0 0
      %1753 = vmatpush1.bf16.msra.mxu0 0
      %1754 = vmatprep.subr.bf16.mxu0 0
      %1755 = vmatpush1.bf16.msra.mxu0 0
      %1756 = vmatprep.subr.bf16.mxu0 0
      %1757 = vmatpush1.bf16.msra.mxu0 0
      %1758 = vmatprep.subr.bf16.mxu0 0
      %1759 = vmatpush1.bf16.msra.mxu0 0
      %1760 = vmatprep.subr.bf16.mxu0 0
      %1761 = vmatpush1.bf16.msra.mxu0 0
      %1762 = vmatprep.subr.bf16.mxu0 0
      %1763 = vmatpush1.bf16.msra.mxu0 0
      %1764 = vmatprep.subr.bf16.mxu0 0
      %1765 = vmatpush1.bf16.msra.mxu0 0
      %1766 = vmatprep.mubr.bf16.mxu0 0
      %1767 = vmatmul.mubr.bf16.gmra.mrb[0].mxu0 %v1733
      %v1768 = vpop.f32.mrb[0].mxu0
      %v1769 = vadd.f32 %v97, %v1768
      %v1770 = vpop.f32.mrb[0].mxu0
      %v1771 = vpop.f32.mrb[0].mxu0
      %v1772 = vadd.f32 %v97, %v1771
      %v1773 = vpop.f32.mrb[0].mxu0
      %1774 = vdwg.mxu0
      %v1775 = vtanh.pop %v1769
      %v1776 = vtanh.pop %v1772
      %v1777 = vmul.f32 %v212, %v1775
      %v1778 = vmul.f32 %v212, %v1776
      %v1779 = vadd.f32 %v1599, %v1777
      %v1780 = vadd.f32 %v1600, %v1778
      %v1781 = vpack.c.bf16 %v1780, %v1779
      %1782 = vmatprep.subr.bf16.mxu0 0
      %1783 = vmatpush1.bf16.msra.mxu0 %v1781
      %1784 = vmatprep.subr.bf16.mxu0 0
      %1785 = vmatpush1.bf16.msra.mxu0 0
      %1786 = vmatprep.subr.bf16.mxu0 0
      %1787 = vmatpush1.bf16.msra.mxu0 0
      %1788 = vmatprep.subr.bf16.mxu0 0
      %1789 = vmatpush1.bf16.msra.mxu0 0
      %1790 = vmatprep.subr.bf16.mxu0 0
      %1791 = vmatpush1.bf16.msra.mxu0 0
      %1792 = vmatprep.subr.bf16.mxu0 0
      %1793 = vmatpush1.bf16.msra.mxu0 0
      %1794 = vmatprep.subr.bf16.mxu0 0
      %1795 = vmatpush1.bf16.msra.mxu0 0
      %1796 = vmatprep.subr.bf16.mxu0 0
      %1797 = vmatpush1.bf16.msra.mxu0 0
      %1798 = vmatprep.subr.bf16.mxu0 0
      %1799 = vmatpush1.bf16.msra.mxu0 0
      %1800 = vmatprep.subr.bf16.mxu0 0
      %1801 = vmatpush1.bf16.msra.mxu0 0
      %1802 = vmatprep.subr.bf16.mxu0 0
      %1803 = vmatpush1.bf16.msra.mxu0 0
      %1804 = vmatprep.subr.bf16.mxu0 0
      %1805 = vmatpush1.bf16.msra.mxu0 0
      %1806 = vmatprep.subr.bf16.mxu0 0
      %1807 = vmatpush1.bf16.msra.mxu0 0
      %1808 = vmatprep.subr.bf16.mxu0 0
      %1809 = vmatpush1.bf16.msra.mxu0 0
      %1810 = vmatprep.subr.bf16.mxu0 0
      %1811 = vmatpush1.bf16.msra.mxu0 0
      %1812 = vmatprep.subr.bf16.mxu0 0
      %1813 = vmatpush1.bf16.msra.mxu0 0
      %1814 = vmatprep.mubr.bf16.mxu0 0
      %1815 = vmatmul.mubr.bf16.gmra.mrb[0].mxu0 %v125
      %v1816 = vpop.f32.mrb[0].mxu0
      %v1817 = vadd.f32 0.0, %v1816
      %v1818 = vpop.f32.mrb[0].mxu0
      %v1819 = vpop.f32.mrb[0].mxu0
      %v1820 = vadd.f32 0.0, %v1819
      %v1821 = vpop.f32.mrb[0].mxu0
      %1822 = vdwg.mxu0
      %v1823 = vpack.c.bf16 %v1820, %v1817
      %1824 = vmatprep.subr.bf16.mxu0 0
      %1825 = vmatpush1.bf16.msra.mxu0 %v84
      %1826 = vmatprep.subr.bf16.mxu0 0
      %1827 = vmatpush1.bf16.msra.mxu0 %v85
      %1828 = vmatprep.subr.bf16.mxu0 0
      %1829 = vmatpush1.bf16.msra.mxu0 %v86
      %1830 = vmatprep.subr.bf16.mxu0 0
      %1831 = vmatpush1.bf16.msra.mxu0 %v87
      %1832 = vmatprep.subr.bf16.mxu0 0
      %1833 = vmatpush1.bf16.msra.mxu0 %v88
      %1834 = vmatprep.subr.bf16.mxu0 0
      %1835 = vmatpush1.bf16.msra.mxu0 %v89
      %1836 = vmatprep.subr.bf16.mxu0 0
      %1837 = vmatpush1.bf16.msra.mxu0 %v90
      %1838 = vmatprep.subr.bf16.mxu0 0
      %1839 = vmatpush1.bf16.msra.mxu0 %v91
      %1840 = vmatprep.subr.bf16.mxu0 0
      %1841 = vmatpush1.bf16.msra.mxu0 0
      %1842 = vmatprep.subr.bf16.mxu0 0
      %1843 = vmatpush1.bf16.msra.mxu0 0
      %1844 = vmatprep.subr.bf16.mxu0 0
      %1845 = vmatpush1.bf16.msra.mxu0 0
      %1846 = vmatprep.subr.bf16.mxu0 0
      %1847 = vmatpush1.bf16.msra.mxu0 0
      %1848 = vmatprep.subr.bf16.mxu0 0
      %1849 = vmatpush1.bf16.msra.mxu0 0
      %1850 = vmatprep.subr.bf16.mxu0 0
      %1851 = vmatpush1.bf16.msra.mxu0 0
      %1852 = vmatprep.subr.bf16.mxu0 0
      %1853 = vmatpush1.bf16.msra.mxu0 0
      %1854 = vmatprep.subr.bf16.mxu0 0
      %1855 = vmatpush1.bf16.msra.mxu0 0
      %1856 = vmatprep.mubr.bf16.mxu0 0
      %1857 = vmatmul.mubr.bf16.gmra.mrb[0].mxu0 %v1823
      %v1858 = vpop.f32.mrb[0].mxu0
      %v1859 = vadd.f32 %v97, %v1858
      %v1860 = vpop.f32.mrb[0].mxu0
      %v1861 = vpop.f32.mrb[0].mxu0
      %v1862 = vadd.f32 %v97, %v1861
      %v1863 = vpop.f32.mrb[0].mxu0
      %1864 = vdwg.mxu0
      %v1865 = vtanh.pop %v1859
      %v1866 = vtanh.pop %v1862
      %v1867 = vmul.f32 %v393, %v1865
      %v1868 = vmul.f32 %v393, %v1866
      %v1869 = vadd.f32 %v1599, %v1867
      %v1870 = vadd.f32 %v1600, %v1868
      %v1871 = vpack.c.bf16 %v1870, %v1869
      %1872 = vmatprep.subr.bf16.mxu0 0
      %1873 = vmatpush1.bf16.msra.mxu0 %v1871
      %1874 = vmatprep.subr.bf16.mxu0 0
      %1875 = vmatpush1.bf16.msra.mxu0 0
      %1876 = vmatprep.subr.bf16.mxu0 0
      %1877 = vmatpush1.bf16.msra.mxu0 0
      %1878 = vmatprep.subr.bf16.mxu0 0
      %1879 = vmatpush1.bf16.msra.mxu0 0
      %1880 = vmatprep.subr.bf16.mxu0 0
      %1881 = vmatpush1.bf16.msra.mxu0 0
      %1882 = vmatprep.subr.bf16.mxu0 0
      %1883 = vmatpush1.bf16.msra.mxu0 0
      %1884 = vmatprep.subr.bf16.mxu0 0
      %1885 = vmatpush1.bf16.msra.mxu0 0
      %1886 = vmatprep.subr.bf16.mxu0 0
      %1887 = vmatpush1.bf16.msra.mxu0 0
      %1888 = vmatprep.subr.bf16.mxu0 0
      %1889 = vmatpush1.bf16.msra.mxu0 0
      %1890 = vmatprep.subr.bf16.mxu0 0
      %1891 = vmatpush1.bf16.msra.mxu0 0
      %1892 = vmatprep.subr.bf16.mxu0 0
      %1893 = vmatpush1.bf16.msra.mxu0 0
      %1894 = vmatprep.subr.bf16.mxu0 0
      %1895 = vmatpush1.bf16.msra.mxu0 0
      %1896 = vmatprep.subr.bf16.mxu0 0
      %1897 = vmatpush1.bf16.msra.mxu0 0
      %1898 = vmatprep.subr.bf16.mxu0 0
      %1899 = vmatpush1.bf16.msra.mxu0 0
      %1900 = vmatprep.subr.bf16.mxu0 0
      %1901 = vmatpush1.bf16.msra.mxu0 0
      %1902 = vmatprep.subr.bf16.mxu0 0
      %1903 = vmatpush1.bf16.msra.mxu0 0
      %1904 = vmatprep.mubr.bf16.mxu0 0
      %1905 = vmatmul.mubr.bf16.gmra.mrb[0].mxu0 %v125
      %v1906 = vpop.f32.mrb[0].mxu0
      %v1907 = vadd.f32 0.0, %v1906
      %v1908 = vpop.f32.mrb[0].mxu0
      %v1909 = vpop.f32.mrb[0].mxu0
      %v1910 = vadd.f32 0.0, %v1909
      %v1911 = vpop.f32.mrb[0].mxu0
      %1912 = vdwg.mxu0
      %v1913 = vpack.c.bf16 %v1910, %v1907
      %1914 = vmatprep.subr.bf16.mxu0 0
      %1915 = vmatpush1.bf16.msra.mxu0 %v84
      %1916 = vmatprep.subr.bf16.mxu0 0
      %1917 = vmatpush1.bf16.msra.mxu0 %v85
      %1918 = vmatprep.subr.bf16.mxu0 0
      %1919 = vmatpush1.bf16.msra.mxu0 %v86
      %1920 = vmatprep.subr.bf16.mxu0 0
      %1921 = vmatpush1.bf16.msra.mxu0 %v87
      %1922 = vmatprep.subr.bf16.mxu0 0
      %1923 = vmatpush1.bf16.msra.mxu0 %v88
      %1924 = vmatprep.subr.bf16.mxu0 0
      %1925 = vmatpush1.bf16.msra.mxu0 %v89
      %1926 = vmatprep.subr.bf16.mxu0 0
      %1927 = vmatpush1.bf16.msra.mxu0 %v90
      %1928 = vmatprep.subr.bf16.mxu0 0
      %1929 = vmatpush1.bf16.msra.mxu0 %v91
      %1930 = vmatprep.subr.bf16.mxu0 0
      %1931 = vmatpush1.bf16.msra.mxu0 0
      %1932 = vmatprep.subr.bf16.mxu0 0
      %1933 = vmatpush1.bf16.msra.mxu0 0
      %1934 = vmatprep.subr.bf16.mxu0 0
      %1935 = vmatpush1.bf16.msra.mxu0 0
      %1936 = vmatprep.subr.bf16.mxu0 0
      %1937 = vmatpush1.bf16.msra.mxu0 0
      %1938 = vmatprep.subr.bf16.mxu0 0
      %1939 = vmatpush1.bf16.msra.mxu0 0
      %1940 = vmatprep.subr.bf16.mxu0 0
      %1941 = vmatpush1.bf16.msra.mxu0 0
      %1942 = vmatprep.subr.bf16.mxu0 0
      %1943 = vmatpush1.bf16.msra.mxu0 0
      %1944 = vmatprep.subr.bf16.mxu0 0
      %1945 = vmatpush1.bf16.msra.mxu0 0
      %1946 = vmatprep.mubr.bf16.mxu0 0
      %1947 = vmatmul.mubr.bf16.gmra.mrb[0].mxu0 %v1913
      %v1948 = vpop.f32.mrb[0].mxu0
      %v1949 = vadd.f32 %v97, %v1948
      %v1950 = vpop.f32.mrb[0].mxu0
      %v1951 = vpop.f32.mrb[0].mxu0
      %v1952 = vadd.f32 %v97, %v1951
      %v1953 = vpop.f32.mrb[0].mxu0
      %1954 = vdwg.mxu0
      %v1955 = vtanh.pop %v1949
      %v1956 = vtanh.pop %v1952
      %v1957 = vadd.f32 %v1775, %v1865
      %v1958 = vadd.f32 %v1776, %v1866
      %v1959 = vmul.f32 %v1957, 2.0
      %v1960 = vmul.f32 %v1958, 2.0
      %v1961 = vadd.f32 %v1685, %v1959
      %v1962 = vadd.f32 %v1686, %v1960
      %v1963 = vadd.f32 %v1961, %v1955
      %v1964 = vadd.f32 %v1962, %v1956
      %v1965 = vmul.f32 %v492, %v1963
      %v1966 = vmul.f32 %v492, %v1964
      %v1967 = vadd.f32 %v1599, %v1965
      %v1968 = vadd.f32 %v1600, %v1966
      %v1969 = vpack.c.bf16 %v1968, %v1967
      %1970 = vmatprep.subr.bf16.mxu0 0
      %1971 = vmatpush1.bf16.msra.mxu0 %v1969
      %1972 = vmatprep.subr.bf16.mxu0 0
      %1973 = vmatpush1.bf16.msra.mxu0 0
      %1974 = vmatprep.subr.bf16.mxu0 0
      %1975 = vmatpush1.bf16.msra.mxu0 0
      %1976 = vmatprep.subr.bf16.mxu0 0
      %1977 = vmatpush1.bf16.msra.mxu0 0
      %1978 = vmatprep.subr.bf16.mxu0 0
      %1979 = vmatpush1.bf16.msra.mxu0 0
      %1980 = vmatprep.subr.bf16.mxu0 0
      %1981 = vmatpush1.bf16.msra.mxu0 0
      %1982 = vmatprep.subr.bf16.mxu0 0
      %1983 = vmatpush1.bf16.msra.mxu0 0
      %1984 = vmatprep.subr.bf16.mxu0 0
      %1985 = vmatpush1.bf16.msra.mxu0 0
      %1986 = vmatprep.subr.bf16.mxu0 0
      %1987 = vmatpush1.bf16.msra.mxu0 0
      %1988 = vmatprep.subr.bf16.mxu0 0
      %1989 = vmatpush1.bf16.msra.mxu0 0
      %1990 = vmatprep.subr.bf16.mxu0 0
      %1991 = vmatpush1.bf16.msra.mxu0 0
      %1992 = vmatprep.subr.bf16.mxu0 0
      %1993 = vmatpush1.bf16.msra.mxu0 0
      %1994 = vmatprep.subr.bf16.mxu0 0
      %1995 = vmatpush1.bf16.msra.mxu0 0
      %1996 = vmatprep.subr.bf16.mxu0 0
      %1997 = vmatpush1.bf16.msra.mxu0 0
      %1998 = vmatprep.subr.bf16.mxu0 0
      %1999 = vmatpush1.bf16.msra.mxu0 0
      %2000 = vmatprep.subr.bf16.mxu0 0
      %2001 = vmatpush1.bf16.msra.mxu0 0
      %2002 = vmatprep.mubr.bf16.mxu0 0
      %2003 = vmatmul.mubr.bf16.gmra.mrb[0].mxu0 %v125
      %v2004 = vpop.f32.mrb[0].mxu0
      %v2005 = vadd.f32 0.0, %v2004
      %v2006 = vpop.f32.mrb[0].mxu0
      %v2007 = vpop.f32.mrb[0].mxu0
      %v2008 = vadd.f32 0.0, %v2007
      %v2009 = vpop.f32.mrb[0].mxu0
      %2010 = vdwg.mxu0
      %v2011 = vpack.c.bf16 %v2008, %v2005
      %2012 = vmatprep.subr.bf16.mxu0 0
      %2013 = vmatpush1.bf16.msra.mxu0 %v84
      %2014 = vmatprep.subr.bf16.mxu0 0
      %2015 = vmatpush1.bf16.msra.mxu0 %v85
      %2016 = vmatprep.subr.bf16.mxu0 0
      %2017 = vmatpush1.bf16.msra.mxu0 %v86
      %2018 = vmatprep.subr.bf16.mxu0 0
      %2019 = vmatpush1.bf16.msra.mxu0 %v87
      %2020 = vmatprep.subr.bf16.mxu0 0
      %2021 = vmatpush1.bf16.msra.mxu0 %v88
      %2022 = vmatprep.subr.bf16.mxu0 0
      %2023 = vmatpush1.bf16.msra.mxu0 %v89
      %2024 = vmatprep.subr.bf16.mxu0 0
      %2025 = vmatpush1.bf16.msra.mxu0 %v90
      %2026 = vmatprep.subr.bf16.mxu0 0
      %2027 = vmatpush1.bf16.msra.mxu0 %v91
      %2028 = vmatprep.subr.bf16.mxu0 0
      %2029 = vmatpush1.bf16.msra.mxu0 0
      %2030 = vmatprep.subr.bf16.mxu0 0
      %2031 = vmatpush1.bf16.msra.mxu0 0
      %2032 = vmatprep.subr.bf16.mxu0 0
      %2033 = vmatpush1.bf16.msra.mxu0 0
      %2034 = vmatprep.subr.bf16.mxu0 0
      %2035 = vmatpush1.bf16.msra.mxu0 0
      %2036 = vmatprep.subr.bf16.mxu0 0
      %2037 = vmatpush1.bf16.msra.mxu0 0
      %2038 = vmatprep.subr.bf16.mxu0 0
      %2039 = vmatpush1.bf16.msra.mxu0 0
      %2040 = vmatprep.subr.bf16.mxu0 0
      %2041 = vmatpush1.bf16.msra.mxu0 0
      %2042 = vmatprep.subr.bf16.mxu0 0
      %2043 = vmatpush1.bf16.msra.mxu0 0
      %2044 = vmatprep.mubr.bf16.mxu0 0
      %2045 = vmatmul.mubr.bf16.gmra.mrb[0].mxu0 %v2011
      %v2046 = vpop.f32.mrb[0].mxu0
      %v2047 = vadd.f32 %v97, %v2046
      %v2048 = vpop.f32.mrb[0].mxu0
      %v2049 = vpop.f32.mrb[0].mxu0
      %v2050 = vadd.f32 %v97, %v2049
      %v2051 = vpop.f32.mrb[0].mxu0
      %2052 = vdwg.mxu0
      %v2053 = vtanh.pop %v2047
      %v2054 = vtanh.pop %v2050
      %v2055 = vmul.f32 %v212, %v2053
      %v2056 = vmul.f32 %v212, %v2054
      %v2057 = vadd.f32 %v1967, %v2055
      %v2058 = vadd.f32 %v1968, %v2056
      %v2059 = vpack.c.bf16 %v2058, %v2057
      %2060 = vmatprep.subr.bf16.mxu0 0
      %2061 = vmatpush1.bf16.msra.mxu0 %v2059
      %2062 = vmatprep.subr.bf16.mxu0 0
      %2063 = vmatpush1.bf16.msra.mxu0 0
      %2064 = vmatprep.subr.bf16.mxu0 0
      %2065 = vmatpush1.bf16.msra.mxu0 0
      %2066 = vmatprep.subr.bf16.mxu0 0
      %2067 = vmatpush1.bf16.msra.mxu0 0
      %2068 = vmatprep.subr.bf16.mxu0 0
      %2069 = vmatpush1.bf16.msra.mxu0 0
      %2070 = vmatprep.subr.bf16.mxu0 0
      %2071 = vmatpush1.bf16.msra.mxu0 0
      %2072 = vmatprep.subr.bf16.mxu0 0
      %2073 = vmatpush1.bf16.msra.mxu0 0
      %2074 = vmatprep.subr.bf16.mxu0 0
      %2075 = vmatpush1.bf16.msra.mxu0 0
      %2076 = vmatprep.subr.bf16.mxu0 0
      %2077 = vmatpush1.bf16.msra.mxu0 0
      %2078 = vmatprep.subr.bf16.mxu0 0
      %2079 = vmatpush1.bf16.msra.mxu0 0
      %2080 = vmatprep.subr.bf16.mxu0 0
      %2081 = vmatpush1.bf16.msra.mxu0 0
      %2082 = vmatprep.subr.bf16.mxu0 0
      %2083 = vmatpush1.bf16.msra.mxu0 0
      %2084 = vmatprep.subr.bf16.mxu0 0
      %2085 = vmatpush1.bf16.msra.mxu0 0
      %2086 = vmatprep.subr.bf16.mxu0 0
      %2087 = vmatpush1.bf16.msra.mxu0 0
      %2088 = vmatprep.subr.bf16.mxu0 0
      %2089 = vmatpush1.bf16.msra.mxu0 0
      %2090 = vmatprep.subr.bf16.mxu0 0
      %2091 = vmatpush1.bf16.msra.mxu0 0
      %2092 = vmatprep.mubr.bf16.mxu0 0
      %2093 = vmatmul.mubr.bf16.gmra.mrb[0].mxu0 %v125
      %v2094 = vpop.f32.mrb[0].mxu0
      %v2095 = vadd.f32 0.0, %v2094
      %v2096 = vpop.f32.mrb[0].mxu0
      %v2097 = vpop.f32.mrb[0].mxu0
      %v2098 = vadd.f32 0.0, %v2097
      %v2099 = vpop.f32.mrb[0].mxu0
      %2100 = vdwg.mxu0
      %v2101 = vpack.c.bf16 %v2098, %v2095
      %2102 = vmatprep.subr.bf16.mxu0 0
      %2103 = vmatpush1.bf16.msra.mxu0 %v84
      %2104 = vmatprep.subr.bf16.mxu0 0
      %2105 = vmatpush1.bf16.msra.mxu0 %v85
      %2106 = vmatprep.subr.bf16.mxu0 0
      %2107 = vmatpush1.bf16.msra.mxu0 %v86
      %2108 = vmatprep.subr.bf16.mxu0 0
      %2109 = vmatpush1.bf16.msra.mxu0 %v87
      %2110 = vmatprep.subr.bf16.mxu0 0
      %2111 = vmatpush1.bf16.msra.mxu0 %v88
      %2112 = vmatprep.subr.bf16.mxu0 0
      %2113 = vmatpush1.bf16.msra.mxu0 %v89
      %2114 = vmatprep.subr.bf16.mxu0 0
      %2115 = vmatpush1.bf16.msra.mxu0 %v90
      %2116 = vmatprep.subr.bf16.mxu0 0
      %2117 = vmatpush1.bf16.msra.mxu0 %v91
      %2118 = vmatprep.subr.bf16.mxu0 0
      %2119 = vmatpush1.bf16.msra.mxu0 0
      %2120 = vmatprep.subr.bf16.mxu0 0
      %2121 = vmatpush1.bf16.msra.mxu0 0
      %2122 = vmatprep.subr.bf16.mxu0 0
      %2123 = vmatpush1.bf16.msra.mxu0 0
      %2124 = vmatprep.subr.bf16.mxu0 0
      %2125 = vmatpush1.bf16.msra.mxu0 0
      %2126 = vmatprep.subr.bf16.mxu0 0
      %2127 = vmatpush1.bf16.msra.mxu0 0
      %2128 = vmatprep.subr.bf16.mxu0 0
      %2129 = vmatpush1.bf16.msra.mxu0 0
      %2130 = vmatprep.subr.bf16.mxu0 0
      %2131 = vmatpush1.bf16.msra.mxu0 0
      %2132 = vmatprep.subr.bf16.mxu0 0
      %2133 = vmatpush1.bf16.msra.mxu0 0
      %2134 = vmatprep.mubr.bf16.mxu0 0
      %2135 = vmatmul.mubr.bf16.gmra.mrb[0].mxu0 %v2101
      %v2136 = vpop.f32.mrb[0].mxu0
      %v2137 = vadd.f32 %v97, %v2136
      %v2138 = vpop.f32.mrb[0].mxu0
      %v2139 = vpop.f32.mrb[0].mxu0
      %v2140 = vadd.f32 %v97, %v2139
      %v2141 = vpop.f32.mrb[0].mxu0
      %2142 = vdwg.mxu0
      %v2143 = vtanh.pop %v2137
      %v2144 = vtanh.pop %v2140
      %v2145 = vmul.f32 %v212, %v2143
      %v2146 = vmul.f32 %v212, %v2144
      %v2147 = vadd.f32 %v1967, %v2145
      %v2148 = vadd.f32 %v1968, %v2146
      %v2149 = vpack.c.bf16 %v2148, %v2147
      %2150 = vmatprep.subr.bf16.mxu0 0
      %2151 = vmatpush1.bf16.msra.mxu0 %v2149
      %2152 = vmatprep.subr.bf16.mxu0 0
      %2153 = vmatpush1.bf16.msra.mxu0 0
      %2154 = vmatprep.subr.bf16.mxu0 0
      %2155 = vmatpush1.bf16.msra.mxu0 0
      %2156 = vmatprep.subr.bf16.mxu0 0
      %2157 = vmatpush1.bf16.msra.mxu0 0
      %2158 = vmatprep.subr.bf16.mxu0 0
      %2159 = vmatpush1.bf16.msra.mxu0 0
      %2160 = vmatprep.subr.bf16.mxu0 0
      %2161 = vmatpush1.bf16.msra.mxu0 0
      %2162 = vmatprep.subr.bf16.mxu0 0
      %2163 = vmatpush1.bf16.msra.mxu0 0
      %2164 = vmatprep.subr.bf16.mxu0 0
      %2165 = vmatpush1.bf16.msra.mxu0 0
      %2166 = vmatprep.subr.bf16.mxu0 0
      %2167 = vmatpush1.bf16.msra.mxu0 0
      %2168 = vmatprep.subr.bf16.mxu0 0
      %2169 = vmatpush1.bf16.msra.mxu0 0
      %2170 = vmatprep.subr.bf16.mxu0 0
      %2171 = vmatpush1.bf16.msra.mxu0 0
      %2172 = vmatprep.subr.bf16.mxu0 0
      %2173 = vmatpush1.bf16.msra.mxu0 0
      %2174 = vmatprep.subr.bf16.mxu0 0
      %2175 = vmatpush1.bf16.msra.mxu0 0
      %2176 = vmatprep.subr.bf16.mxu0 0
      %2177 = vmatpush1.bf16.msra.mxu0 0
      %2178 = vmatprep.subr.bf16.mxu0 0
      %2179 = vmatpush1.bf16.msra.mxu0 0
      %2180 = vmatprep.subr.bf16.mxu0 0
      %2181 = vmatpush1.bf16.msra.mxu0 0
      %2182 = vmatprep.mubr.bf16.mxu0 0
      %2183 = vmatmul.mubr.bf16.gmra.mrb[0].mxu0 %v125
      %v2184 = vpop.f32.mrb[0].mxu0
      %v2185 = vadd.f32 0.0, %v2184
      %v2186 = vpop.f32.mrb[0].mxu0
      %v2187 = vpop.f32.mrb[0].mxu0
      %v2188 = vadd.f32 0.0, %v2187
      %v2189 = vpop.f32.mrb[0].mxu0
      %2190 = vdwg.mxu0
      %v2191 = vpack.c.bf16 %v2188, %v2185
      %2192 = vmatprep.subr.bf16.mxu0 0
      %2193 = vmatpush1.bf16.msra.mxu0 %v84
      %2194 = vmatprep.subr.bf16.mxu0 0
      %2195 = vmatpush1.bf16.msra.mxu0 %v85
      %2196 = vmatprep.subr.bf16.mxu0 0
      %2197 = vmatpush1.bf16.msra.mxu0 %v86
      %2198 = vmatprep.subr.bf16.mxu0 0
      %2199 = vmatpush1.bf16.msra.mxu0 %v87
      %2200 = vmatprep.subr.bf16.mxu0 0
      %2201 = vmatpush1.bf16.msra.mxu0 %v88
      %2202 = vmatprep.subr.bf16.mxu0 0
      %2203 = vmatpush1.bf16.msra.mxu0 %v89
      %2204 = vmatprep.subr.bf16.mxu0 0
      %2205 = vmatpush1.bf16.msra.mxu0 %v90
      %2206 = vmatprep.subr.bf16.mxu0 0
      %2207 = vmatpush1.bf16.msra.mxu0 %v91
      %2208 = vmatprep.subr.bf16.mxu0 0
      %2209 = vmatpush1.bf16.msra.mxu0 0
      %2210 = vmatprep.subr.bf16.mxu0 0
      %2211 = vmatpush1.bf16.msra.mxu0 0
      %2212 = vmatprep.subr.bf16.mxu0 0
      %2213 = vmatpush1.bf16.msra.mxu0 0
      %2214 = vmatprep.subr.bf16.mxu0 0
      %2215 = vmatpush1.bf16.msra.mxu0 0
      %2216 = vmatprep.subr.bf16.mxu0 0
      %2217 = vmatpush1.bf16.msra.mxu0 0
      %2218 = vmatprep.subr.bf16.mxu0 0
      %2219 = vmatpush1.bf16.msra.mxu0 0
      %2220 = vmatprep.subr.bf16.mxu0 0
      %2221 = vmatpush1.bf16.msra.mxu0 0
      %2222 = vmatprep.subr.bf16.mxu0 0
      %2223 = vmatpush1.bf16.msra.mxu0 0
      %2224 = vmatprep.mubr.bf16.mxu0 0
      %2225 = vmatmul.mubr.bf16.gmra.mrb[0].mxu0 %v2191
      %v2226 = vpop.f32.mrb[0].mxu0
      %v2227 = vadd.f32 %v97, %v2226
      %v2228 = vpop.f32.mrb[0].mxu0
      %v2229 = vpop.f32.mrb[0].mxu0
      %v2230 = vadd.f32 %v97, %v2229
      %v2231 = vpop.f32.mrb[0].mxu0
      %2232 = vdwg.mxu0
      %v2233 = vtanh.pop %v2227
      %v2234 = vtanh.pop %v2230
      %v2235 = vmul.f32 %v393, %v2233
      %v2236 = vmul.f32 %v393, %v2234
      %v2237 = vadd.f32 %v1967, %v2235
      %v2238 = vadd.f32 %v1968, %v2236
      %v2239 = vpack.c.bf16 %v2238, %v2237
      %2240 = vmatprep.subr.bf16.mxu0 0
      %2241 = vmatpush1.bf16.msra.mxu0 %v2239
      %2242 = vmatprep.subr.bf16.mxu0 0
      %2243 = vmatpush1.bf16.msra.mxu0 0
      %2244 = vmatprep.subr.bf16.mxu0 0
      %2245 = vmatpush1.bf16.msra.mxu0 0
      %2246 = vmatprep.subr.bf16.mxu0 0
      %2247 = vmatpush1.bf16.msra.mxu0 0
      %2248 = vmatprep.subr.bf16.mxu0 0
      %2249 = vmatpush1.bf16.msra.mxu0 0
      %2250 = vmatprep.subr.bf16.mxu0 0
      %2251 = vmatpush1.bf16.msra.mxu0 0
      %2252 = vmatprep.subr.bf16.mxu0 0
      %2253 = vmatpush1.bf16.msra.mxu0 0
      %2254 = vmatprep.subr.bf16.mxu0 0
      %2255 = vmatpush1.bf16.msra.mxu0 0
      %2256 = vmatprep.subr.bf16.mxu0 0
      %2257 = vmatpush1.bf16.msra.mxu0 0
      %2258 = vmatprep.subr.bf16.mxu0 0
      %2259 = vmatpush1.bf16.msra.mxu0 0
      %2260 = vmatprep.subr.bf16.mxu0 0
      %2261 = vmatpush1.bf16.msra.mxu0 0
      %2262 = vmatprep.subr.bf16.mxu0 0
      %2263 = vmatpush1.bf16.msra.mxu0 0
      %2264 = vmatprep.subr.bf16.mxu0 0
      %2265 = vmatpush1.bf16.msra.mxu0 0
      %2266 = vmatprep.subr.bf16.mxu0 0
      %2267 = vmatpush1.bf16.msra.mxu0 0
      %2268 = vmatprep.subr.bf16.mxu0 0
      %2269 = vmatpush1.bf16.msra.mxu0 0
      %2270 = vmatprep.subr.bf16.mxu0 0
      %2271 = vmatpush1.bf16.msra.mxu0 0
      %2272 = vmatprep.mubr.bf16.mxu0 0
      %2273 = vmatmul.mubr.bf16.gmra.mrb[0].mxu0 %v125
      %v2274 = vpop.f32.mrb[0].mxu0
      %v2275 = vadd.f32 0.0, %v2274
      %v2276 = vpop.f32.mrb[0].mxu0
      %v2277 = vpop.f32.mrb[0].mxu0
      %v2278 = vadd.f32 0.0, %v2277
      %v2279 = vpop.f32.mrb[0].mxu0
      %2280 = vdwg.mxu0
      %v2281 = vpack.c.bf16 %v2278, %v2275
      %2282 = vmatprep.subr.bf16.mxu0 0
      %2283 = vmatpush1.bf16.msra.mxu0 %v84
      %2284 = vmatprep.subr.bf16.mxu0 0
      %2285 = vmatpush1.bf16.msra.mxu0 %v85
      %2286 = vmatprep.subr.bf16.mxu0 0
      %2287 = vmatpush1.bf16.msra.mxu0 %v86
      %2288 = vmatprep.subr.bf16.mxu0 0
      %2289 = vmatpush1.bf16.msra.mxu0 %v87
      %2290 = vmatprep.subr.bf16.mxu0 0
      %2291 = vmatpush1.bf16.msra.mxu0 %v88
      %2292 = vmatprep.subr.bf16.mxu0 0
      %2293 = vmatpush1.bf16.msra.mxu0 %v89
      %2294 = vmatprep.subr.bf16.mxu0 0
      %2295 = vmatpush1.bf16.msra.mxu0 %v90
      %2296 = vmatprep.subr.bf16.mxu0 0
      %2297 = vmatpush1.bf16.msra.mxu0 %v91
      %2298 = vmatprep.subr.bf16.mxu0 0
      %2299 = vmatpush1.bf16.msra.mxu0 0
      %2300 = vmatprep.subr.bf16.mxu0 0
      %2301 = vmatpush1.bf16.msra.mxu0 0
      %2302 = vmatprep.subr.bf16.mxu0 0
      %2303 = vmatpush1.bf16.msra.mxu0 0
      %2304 = vmatprep.subr.bf16.mxu0 0
      %2305 = vmatpush1.bf16.msra.mxu0 0
      %2306 = vmatprep.subr.bf16.mxu0 0
      %2307 = vmatpush1.bf16.msra.mxu0 0
      %2308 = vmatprep.subr.bf16.mxu0 0
      %2309 = vmatpush1.bf16.msra.mxu0 0
      %2310 = vmatprep.subr.bf16.mxu0 0
      %2311 = vmatpush1.bf16.msra.mxu0 0
      %2312 = vmatprep.subr.bf16.mxu0 0
      %2313 = vmatpush1.bf16.msra.mxu0 0
      %2314 = vmatprep.mubr.bf16.mxu0 0
      %2315 = vmatmul.mubr.bf16.gmra.mrb[0].mxu0 %v2281
      %v2316 = vpop.f32.mrb[0].mxu0
      %v2317 = vadd.f32 %v97, %v2316
      %v2318 = vpop.f32.mrb[0].mxu0
      %v2319 = vpop.f32.mrb[0].mxu0
      %v2320 = vadd.f32 %v97, %v2319
      %v2321 = vpop.f32.mrb[0].mxu0
      %2322 = vdwg.mxu0
      %v2323 = vtanh.pop %v2317
      %v2324 = vtanh.pop %v2320
      %v2325 = vadd.f32 %v2143, %v2233
      %v2326 = vadd.f32 %v2144, %v2234
      %v2327 = vmul.f32 %v2325, 2.0
      %v2328 = vmul.f32 %v2326, 2.0
      %v2329 = vadd.f32 %v2053, %v2327
      %v2330 = vadd.f32 %v2054, %v2328
      %v2331 = vadd.f32 %v2329, %v2323
      %v2332 = vadd.f32 %v2330, %v2324
      %v2333 = vmul.f32 %v492, %v2331
      %v2334 = vmul.f32 %v492, %v2332
      %v2335 = vadd.f32 %v1967, %v2333
      %v2336 = vadd.f32 %v1968, %v2334
      %v2337 = vpack.c.bf16 %v2336, %v2335
      %2338 = vmatprep.subr.bf16.mxu0 0
      %2339 = vmatpush1.bf16.msra.mxu0 %v2337
      %2340 = vmatprep.subr.bf16.mxu0 0
      %2341 = vmatpush1.bf16.msra.mxu0 0
      %2342 = vmatprep.subr.bf16.mxu0 0
      %2343 = vmatpush1.bf16.msra.mxu0 0
      %2344 = vmatprep.subr.bf16.mxu0 0
      %2345 = vmatpush1.bf16.msra.mxu0 0
      %2346 = vmatprep.subr.bf16.mxu0 0
      %2347 = vmatpush1.bf16.msra.mxu0 0
      %2348 = vmatprep.subr.bf16.mxu0 0
      %2349 = vmatpush1.bf16.msra.mxu0 0
      %2350 = vmatprep.subr.bf16.mxu0 0
      %2351 = vmatpush1.bf16.msra.mxu0 0
      %2352 = vmatprep.subr.bf16.mxu0 0
      %2353 = vmatpush1.bf16.msra.mxu0 0
      %2354 = vmatprep.subr.bf16.mxu0 0
      %2355 = vmatpush1.bf16.msra.mxu0 0
      %2356 = vmatprep.subr.bf16.mxu0 0
      %2357 = vmatpush1.bf16.msra.mxu0 0
      %2358 = vmatprep.subr.bf16.mxu0 0
      %2359 = vmatpush1.bf16.msra.mxu0 0
      %2360 = vmatprep.subr.bf16.mxu0 0
      %2361 = vmatpush1.bf16.msra.mxu0 0
      %2362 = vmatprep.subr.bf16.mxu0 0
      %2363 = vmatpush1.bf16.msra.mxu0 0
      %2364 = vmatprep.subr.bf16.mxu0 0
      %2365 = vmatpush1.bf16.msra.mxu0 0
      %2366 = vmatprep.subr.bf16.mxu0 0
      %2367 = vmatpush1.bf16.msra.mxu0 0
      %2368 = vmatprep.subr.bf16.mxu0 0
      %2369 = vmatpush1.bf16.msra.mxu0 0
      %2370 = vmatprep.mubr.bf16.mxu0 0
      %2371 = vmatmul.mubr.bf16.gmra.mrb[0].mxu0 %v125
      %v2372 = vpop.f32.mrb[0].mxu0
      %v2373 = vadd.f32 0.0, %v2372
      %v2374 = vpop.f32.mrb[0].mxu0
      %v2375 = vpop.f32.mrb[0].mxu0
      %v2376 = vadd.f32 0.0, %v2375
      %v2377 = vpop.f32.mrb[0].mxu0
      %2378 = vdwg.mxu0
      %v2379 = vpack.c.bf16 %v2376, %v2373
      %2380 = vmatprep.subr.bf16.mxu0 0
      %2381 = vmatpush1.bf16.msra.mxu0 %v84
      %2382 = vmatprep.subr.bf16.mxu0 0
      %2383 = vmatpush1.bf16.msra.mxu0 %v85
      %2384 = vmatprep.subr.bf16.mxu0 0
      %2385 = vmatpush1.bf16.msra.mxu0 %v86
      %2386 = vmatprep.subr.bf16.mxu0 0
      %2387 = vmatpush1.bf16.msra.mxu0 %v87
      %2388 = vmatprep.subr.bf16.mxu0 0
      %2389 = vmatpush1.bf16.msra.mxu0 %v88
      %2390 = vmatprep.subr.bf16.mxu0 0
      %2391 = vmatpush1.bf16.msra.mxu0 %v89
      %2392 = vmatprep.subr.bf16.mxu0 0
      %2393 = vmatpush1.bf16.msra.mxu0 %v90
      %2394 = vmatprep.subr.bf16.mxu0 0
      %2395 = vmatpush1.bf16.msra.mxu0 %v91
      %2396 = vmatprep.subr.bf16.mxu0 0
      %2397 = vmatpush1.bf16.msra.mxu0 0
      %2398 = vmatprep.subr.bf16.mxu0 0
      %2399 = vmatpush1.bf16.msra.mxu0 0
      %2400 = vmatprep.subr.bf16.mxu0 0
      %2401 = vmatpush1.bf16.msra.mxu0 0
      %2402 = vmatprep.subr.bf16.mxu0 0
      %2403 = vmatpush1.bf16.msra.mxu0 0
      %2404 = vmatprep.subr.bf16.mxu0 0
      %2405 = vmatpush1.bf16.msra.mxu0 0
      %2406 = vmatprep.subr.bf16.mxu0 0
      %2407 = vmatpush1.bf16.msra.mxu0 0
      %2408 = vmatprep.subr.bf16.mxu0 0
      %2409 = vmatpush1.bf16.msra.mxu0 0
      %2410 = vmatprep.subr.bf16.mxu0 0
      %2411 = vmatpush1.bf16.msra.mxu0 0
      %2412 = vmatprep.mubr.bf16.mxu0 0
      %2413 = vmatmul.mubr.bf16.gmra.mrb[0].mxu0 %v2379
      %v2414 = vpop.f32.mrb[0].mxu0
      %v2415 = vadd.f32 %v97, %v2414
      %v2416 = vpop.f32.mrb[0].mxu0
      %v2417 = vpop.f32.mrb[0].mxu0
      %v2418 = vadd.f32 %v97, %v2417
      %v2419 = vpop.f32.mrb[0].mxu0
      %2420 = vdwg.mxu0
      %v2421 = vtanh.pop %v2415
      %v2422 = vtanh.pop %v2418
      %v2423 = vmul.f32 %v212, %v2421
      %v2424 = vmul.f32 %v212, %v2422
      %v2425 = vadd.f32 %v2335, %v2423
      %v2426 = vadd.f32 %v2336, %v2424
      %v2427 = vpack.c.bf16 %v2426, %v2425
      %2428 = vmatprep.subr.bf16.mxu0 0
      %2429 = vmatpush1.bf16.msra.mxu0 %v2427
      %2430 = vmatprep.subr.bf16.mxu0 0
      %2431 = vmatpush1.bf16.msra.mxu0 0
      %2432 = vmatprep.subr.bf16.mxu0 0
      %2433 = vmatpush1.bf16.msra.mxu0 0
      %2434 = vmatprep.subr.bf16.mxu0 0
      %2435 = vmatpush1.bf16.msra.mxu0 0
      %2436 = vmatprep.subr.bf16.mxu0 0
      %2437 = vmatpush1.bf16.msra.mxu0 0
      %2438 = vmatprep.subr.bf16.mxu0 0
      %2439 = vmatpush1.bf16.msra.mxu0 0
      %2440 = vmatprep.subr.bf16.mxu0 0
      %2441 = vmatpush1.bf16.msra.mxu0 0
      %2442 = vmatprep.subr.bf16.mxu0 0
      %2443 = vmatpush1.bf16.msra.mxu0 0
      %2444 = vmatprep.subr.bf16.mxu0 0
      %2445 = vmatpush1.bf16.msra.mxu0 0
      %2446 = vmatprep.subr.bf16.mxu0 0
      %2447 = vmatpush1.bf16.msra.mxu0 0
      %2448 = vmatprep.subr.bf16.mxu0 0
      %2449 = vmatpush1.bf16.msra.mxu0 0
      %2450 = vmatprep.subr.bf16.mxu0 0
      %2451 = vmatpush1.bf16.msra.mxu0 0
      %2452 = vmatprep.subr.bf16.mxu0 0
      %2453 = vmatpush1.bf16.msra.mxu0 0
      %2454 = vmatprep.subr.bf16.mxu0 0
      %2455 = vmatpush1.bf16.msra.mxu0 0
      %2456 = vmatprep.subr.bf16.mxu0 0
      %2457 = vmatpush1.bf16.msra.mxu0 0
      %2458 = vmatprep.subr.bf16.mxu0 0
      %2459 = vmatpush1.bf16.msra.mxu0 0
      %2460 = vmatprep.mubr.bf16.mxu0 0
      %2461 = vmatmul.mubr.bf16.gmra.mrb[0].mxu0 %v125
      %v2462 = vpop.f32.mrb[0].mxu0
      %v2463 = vadd.f32 0.0, %v2462
      %v2464 = vpop.f32.mrb[0].mxu0
      %v2465 = vpop.f32.mrb[0].mxu0
      %v2466 = vadd.f32 0.0, %v2465
      %v2467 = vpop.f32.mrb[0].mxu0
      %2468 = vdwg.mxu0
      %v2469 = vpack.c.bf16 %v2466, %v2463
      %2470 = vmatprep.subr.bf16.mxu0 0
      %2471 = vmatpush1.bf16.msra.mxu0 %v84
      %2472 = vmatprep.subr.bf16.mxu0 0
      %2473 = vmatpush1.bf16.msra.mxu0 %v85
      %2474 = vmatprep.subr.bf16.mxu0 0
      %2475 = vmatpush1.bf16.msra.mxu0 %v86
      %2476 = vmatprep.subr.bf16.mxu0 0
      %2477 = vmatpush1.bf16.msra.mxu0 %v87
      %2478 = vmatprep.subr.bf16.mxu0 0
      %2479 = vmatpush1.bf16.msra.mxu0 %v88
      %2480 = vmatprep.subr.bf16.mxu0 0
      %2481 = vmatpush1.bf16.msra.mxu0 %v89
      %2482 = vmatprep.subr.bf16.mxu0 0
      %2483 = vmatpush1.bf16.msra.mxu0 %v90
      %2484 = vmatprep.subr.bf16.mxu0 0
      %2485 = vmatpush1.bf16.msra.mxu0 %v91
      %2486 = vmatprep.subr.bf16.mxu0 0
      %2487 = vmatpush1.bf16.msra.mxu0 0
      %2488 = vmatprep.subr.bf16.mxu0 0
      %2489 = vmatpush1.bf16.msra.mxu0 0
      %2490 = vmatprep.subr.bf16.mxu0 0
      %2491 = vmatpush1.bf16.msra.mxu0 0
      %2492 = vmatprep.subr.bf16.mxu0 0
      %2493 = vmatpush1.bf16.msra.mxu0 0
      %2494 = vmatprep.subr.bf16.mxu0 0
      %2495 = vmatpush1.bf16.msra.mxu0 0
      %2496 = vmatprep.subr.bf16.mxu0 0
      %2497 = vmatpush1.bf16.msra.mxu0 0
      %2498 = vmatprep.subr.bf16.mxu0 0
      %2499 = vmatpush1.bf16.msra.mxu0 0
      %2500 = vmatprep.subr.bf16.mxu0 0
      %2501 = vmatpush1.bf16.msra.mxu0 0
      %2502 = vmatprep.mubr.bf16.mxu0 0
      %2503 = vmatmul.mubr.bf16.gmra.mrb[0].mxu0 %v2469
      %v2504 = vpop.f32.mrb[0].mxu0
      %v2505 = vadd.f32 %v97, %v2504
      %v2506 = vpop.f32.mrb[0].mxu0
      %v2507 = vpop.f32.mrb[0].mxu0
      %v2508 = vadd.f32 %v97, %v2507
      %v2509 = vpop.f32.mrb[0].mxu0
      %2510 = vdwg.mxu0
      %v2511 = vtanh.pop %v2505
      %v2512 = vtanh.pop %v2508
      %v2513 = vmul.f32 %v212, %v2511
      %v2514 = vmul.f32 %v212, %v2512
      %v2515 = vadd.f32 %v2335, %v2513
      %v2516 = vadd.f32 %v2336, %v2514
      %v2517 = vpack.c.bf16 %v2516, %v2515
      %2518 = vmatprep.subr.bf16.mxu0 0
      %2519 = vmatpush1.bf16.msra.mxu0 %v2517
      %2520 = vmatprep.subr.bf16.mxu0 0
      %2521 = vmatpush1.bf16.msra.mxu0 0
      %2522 = vmatprep.subr.bf16.mxu0 0
      %2523 = vmatpush1.bf16.msra.mxu0 0
      %2524 = vmatprep.subr.bf16.mxu0 0
      %2525 = vmatpush1.bf16.msra.mxu0 0
      %2526 = vmatprep.subr.bf16.mxu0 0
      %2527 = vmatpush1.bf16.msra.mxu0 0
      %2528 = vmatprep.subr.bf16.mxu0 0
      %2529 = vmatpush1.bf16.msra.mxu0 0
      %2530 = vmatprep.subr.bf16.mxu0 0
      %2531 = vmatpush1.bf16.msra.mxu0 0
      %2532 = vmatprep.subr.bf16.mxu0 0
      %2533 = vmatpush1.bf16.msra.mxu0 0
      %2534 = vmatprep.subr.bf16.mxu0 0
      %2535 = vmatpush1.bf16.msra.mxu0 0
      %2536 = vmatprep.subr.bf16.mxu0 0
      %2537 = vmatpush1.bf16.msra.mxu0 0
      %2538 = vmatprep.subr.bf16.mxu0 0
      %2539 = vmatpush1.bf16.msra.mxu0 0
      %2540 = vmatprep.subr.bf16.mxu0 0
      %2541 = vmatpush1.bf16.msra.mxu0 0
      %2542 = vmatprep.subr.bf16.mxu0 0
      %2543 = vmatpush1.bf16.msra.mxu0 0
      %2544 = vmatprep.subr.bf16.mxu0 0
      %2545 = vmatpush1.bf16.msra.mxu0 0
      %2546 = vmatprep.subr.bf16.mxu0 0
      %2547 = vmatpush1.bf16.msra.mxu0 0
      %2548 = vmatprep.subr.bf16.mxu0 0
      %2549 = vmatpush1.bf16.msra.mxu0 0
      %2550 = vmatprep.mubr.bf16.mxu0 0
      %2551 = vmatmul.mubr.bf16.gmra.mrb[0].mxu0 %v125
      %v2552 = vpop.f32.mrb[0].mxu0
      %v2553 = vadd.f32 0.0, %v2552
      %v2554 = vpop.f32.mrb[0].mxu0
      %v2555 = vpop.f32.mrb[0].mxu0
      %v2556 = vadd.f32 0.0, %v2555
      %v2557 = vpop.f32.mrb[0].mxu0
      %2558 = vdwg.mxu0
      %v2559 = vpack.c.bf16 %v2556, %v2553
      %2560 = vmatprep.subr.bf16.mxu0 0
      %2561 = vmatpush1.bf16.msra.mxu0 %v84
      %2562 = vmatprep.subr.bf16.mxu0 0
      %2563 = vmatpush1.bf16.msra.mxu0 %v85
      %2564 = vmatprep.subr.bf16.mxu0 0
      %2565 = vmatpush1.bf16.msra.mxu0 %v86
      %2566 = vmatprep.subr.bf16.mxu0 0
      %2567 = vmatpush1.bf16.msra.mxu0 %v87
      %2568 = vmatprep.subr.bf16.mxu0 0
      %2569 = vmatpush1.bf16.msra.mxu0 %v88
      %2570 = vmatprep.subr.bf16.mxu0 0
      %2571 = vmatpush1.bf16.msra.mxu0 %v89
      %2572 = vmatprep.subr.bf16.mxu0 0
      %2573 = vmatpush1.bf16.msra.mxu0 %v90
      %2574 = vmatprep.subr.bf16.mxu0 0
      %2575 = vmatpush1.bf16.msra.mxu0 %v91
      %2576 = vmatprep.subr.bf16.mxu0 0
      %2577 = vmatpush1.bf16.msra.mxu0 0
      %2578 = vmatprep.subr.bf16.mxu0 0
      %2579 = vmatpush1.bf16.msra.mxu0 0
      %2580 = vmatprep.subr.bf16.mxu0 0
      %2581 = vmatpush1.bf16.msra.mxu0 0
      %2582 = vmatprep.subr.bf16.mxu0 0
      %2583 = vmatpush1.bf16.msra.mxu0 0
      %2584 = vmatprep.subr.bf16.mxu0 0
      %2585 = vmatpush1.bf16.msra.mxu0 0
      %2586 = vmatprep.subr.bf16.mxu0 0
      %2587 = vmatpush1.bf16.msra.mxu0 0
      %2588 = vmatprep.subr.bf16.mxu0 0
      %2589 = vmatpush1.bf16.msra.mxu0 0
      %2590 = vmatprep.subr.bf16.mxu0 0
      %2591 = vmatpush1.bf16.msra.mxu0 0
      %2592 = vmatprep.mubr.bf16.mxu0 0
      %2593 = vmatmul.mubr.bf16.gmra.mrb[0].mxu0 %v2559
      %v2594 = vpop.f32.mrb[0].mxu0
      %v2595 = vadd.f32 %v97, %v2594
      %v2596 = vpop.f32.mrb[0].mxu0
      %v2597 = vpop.f32.mrb[0].mxu0
      %v2598 = vadd.f32 %v97, %v2597
      %v2599 = vpop.f32.mrb[0].mxu0
      %2600 = vdwg.mxu0
      %v2601 = vtanh.pop %v2595
      %v2602 = vtanh.pop %v2598
      %v2603 = vmul.f32 %v393, %v2601
      %v2604 = vmul.f32 %v393, %v2602
      %v2605 = vadd.f32 %v2335, %v2603
      %v2606 = vadd.f32 %v2336, %v2604
      %v2607 = vpack.c.bf16 %v2606, %v2605
      %2608 = vmatprep.subr.bf16.mxu0 0
      %2609 = vmatpush1.bf16.msra.mxu0 %v2607
      %2610 = vmatprep.subr.bf16.mxu0 0
      %2611 = vmatpush1.bf16.msra.mxu0 0
      %2612 = vmatprep.subr.bf16.mxu0 0
      %2613 = vmatpush1.bf16.msra.mxu0 0
      %2614 = vmatprep.subr.bf16.mxu0 0
      %2615 = vmatpush1.bf16.msra.mxu0 0
      %2616 = vmatprep.subr.bf16.mxu0 0
      %2617 = vmatpush1.bf16.msra.mxu0 0
      %2618 = vmatprep.subr.bf16.mxu0 0
      %2619 = vmatpush1.bf16.msra.mxu0 0
      %2620 = vmatprep.subr.bf16.mxu0 0
      %2621 = vmatpush1.bf16.msra.mxu0 0
      %2622 = vmatprep.subr.bf16.mxu0 0
      %2623 = vmatpush1.bf16.msra.mxu0 0
      %2624 = vmatprep.subr.bf16.mxu0 0
      %2625 = vmatpush1.bf16.msra.mxu0 0
      %2626 = vmatprep.subr.bf16.mxu0 0
      %2627 = vmatpush1.bf16.msra.mxu0 0
      %2628 = vmatprep.subr.bf16.mxu0 0
      %2629 = vmatpush1.bf16.msra.mxu0 0
      %2630 = vmatprep.subr.bf16.mxu0 0
      %2631 = vmatpush1.bf16.msra.mxu0 0
      %2632 = vmatprep.subr.bf16.mxu0 0
      %2633 = vmatpush1.bf16.msra.mxu0 0
      %2634 = vmatprep.subr.bf16.mxu0 0
      %2635 = vmatpush1.bf16.msra.mxu0 0
      %2636 = vmatprep.subr.bf16.mxu0 0
      %2637 = vmatpush1.bf16.msra.mxu0 0
      %2638 = vmatprep.subr.bf16.mxu0 0
      %2639 = vmatpush1.bf16.msra.mxu0 0
      %2640 = vmatprep.mubr.bf16.mxu0 0
      %2641 = vmatmul.mubr.bf16.gmra.mrb[0].mxu0 %v125
      %v2642 = vpop.f32.mrb[0].mxu0
      %v2643 = vadd.f32 0.0, %v2642
      %v2644 = vpop.f32.mrb[0].mxu0
      %v2645 = vpop.f32.mrb[0].mxu0
      %v2646 = vadd.f32 0.0, %v2645
      %v2647 = vpop.f32.mrb[0].mxu0
      %2648 = vdwg.mxu0
      %v2649 = vpack.c.bf16 %v2646, %v2643
      %2650 = vmatprep.subr.bf16.mxu0 0
      %2651 = vmatpush1.bf16.msra.mxu0 %v84
      %2652 = vmatprep.subr.bf16.mxu0 0
      %2653 = vmatpush1.bf16.msra.mxu0 %v85
      %2654 = vmatprep.subr.bf16.mxu0 0
      %2655 = vmatpush1.bf16.msra.mxu0 %v86
      %2656 = vmatprep.subr.bf16.mxu0 0
      %2657 = vmatpush1.bf16.msra.mxu0 %v87
      %2658 = vmatprep.subr.bf16.mxu0 0
      %2659 = vmatpush1.bf16.msra.mxu0 %v88
      %2660 = vmatprep.subr.bf16.mxu0 0
      %2661 = vmatpush1.bf16.msra.mxu0 %v89
      %2662 = vmatprep.subr.bf16.mxu0 0
      %2663 = vmatpush1.bf16.msra.mxu0 %v90
      %2664 = vmatprep.subr.bf16.mxu0 0
      %2665 = vmatpush1.bf16.msra.mxu0 %v91
      %2666 = vmatprep.subr.bf16.mxu0 0
      %2667 = vmatpush1.bf16.msra.mxu0 0
      %2668 = vmatprep.subr.bf16.mxu0 0
      %2669 = vmatpush1.bf16.msra.mxu0 0
      %2670 = vmatprep.subr.bf16.mxu0 0
      %2671 = vmatpush1.bf16.msra.mxu0 0
      %2672 = vmatprep.subr.bf16.mxu0 0
      %2673 = vmatpush1.bf16.msra.mxu0 0
      %2674 = vmatprep.subr.bf16.mxu0 0
      %2675 = vmatpush1.bf16.msra.mxu0 0
      %2676 = vmatprep.subr.bf16.mxu0 0
      %2677 = vmatpush1.bf16.msra.mxu0 0
      %2678 = vmatprep.subr.bf16.mxu0 0
      %2679 = vmatpush1.bf16.msra.mxu0 0
      %2680 = vmatprep.subr.bf16.mxu0 0
      %2681 = vmatpush1.bf16.msra.mxu0 0
      %2682 = vmatprep.mubr.bf16.mxu0 0
      %2683 = vmatmul.mubr.bf16.gmra.mrb[0].mxu0 %v2649
      %v2684 = vpop.f32.mrb[0].mxu0
      %v2685 = vadd.f32 %v97, %v2684
      %v2686 = vpop.f32.mrb[0].mxu0
      %v2687 = vpop.f32.mrb[0].mxu0
      %v2688 = vadd.f32 %v97, %v2687
      %v2689 = vpop.f32.mrb[0].mxu0
      %2690 = vdwg.mxu0
      %v2691 = vtanh.pop %v2685
      %v2692 = vtanh.pop %v2688
      %v2693 = vadd.f32 %v2511, %v2601
      %v2694 = vadd.f32 %v2512, %v2602
      %v2695 = vmul.f32 %v2693, 2.0
      %v2696 = vmul.f32 %v2694, 2.0
      %v2697 = vadd.f32 %v2421, %v2695
      %v2698 = vadd.f32 %v2422, %v2696
      %v2699 = vadd.f32 %v2697, %v2691
      %v2700 = vadd.f32 %v2698, %v2692
      %v2701 = vmul.f32 %v492, %v2699
      %v2702 = vmul.f32 %v492, %v2700
      %v2703 = vadd.f32 %v2335, %v2701
      %v2704 = vadd.f32 %v2336, %v2702
      %v2705 = vpack.c.bf16 %v2704, %v2703
      %2706 = vmatprep.subr.bf16.mxu0 0
      %2707 = vmatpush1.bf16.msra.mxu0 %v2705
      %2708 = vmatprep.subr.bf16.mxu0 0
      %2709 = vmatpush1.bf16.msra.mxu0 0
      %2710 = vmatprep.subr.bf16.mxu0 0
      %2711 = vmatpush1.bf16.msra.mxu0 0
      %2712 = vmatprep.subr.bf16.mxu0 0
      %2713 = vmatpush1.bf16.msra.mxu0 0
      %2714 = vmatprep.subr.bf16.mxu0 0
      %2715 = vmatpush1.bf16.msra.mxu0 0
      %2716 = vmatprep.subr.bf16.mxu0 0
      %2717 = vmatpush1.bf16.msra.mxu0 0
      %2718 = vmatprep.subr.bf16.mxu0 0
      %2719 = vmatpush1.bf16.msra.mxu0 0
      %2720 = vmatprep.subr.bf16.mxu0 0
      %2721 = vmatpush1.bf16.msra.mxu0 0
      %2722 = vmatprep.subr.bf16.mxu0 0
      %2723 = vmatpush1.bf16.msra.mxu0 0
      %2724 = vmatprep.subr.bf16.mxu0 0
      %2725 = vmatpush1.bf16.msra.mxu0 0
      %2726 = vmatprep.subr.bf16.mxu0 0
      %2727 = vmatpush1.bf16.msra.mxu0 0
      %2728 = vmatprep.subr.bf16.mxu0 0
      %2729 = vmatpush1.bf16.msra.mxu0 0
      %2730 = vmatprep.subr.bf16.mxu0 0
      %2731 = vmatpush1.bf16.msra.mxu0 0
      %2732 = vmatprep.subr.bf16.mxu0 0
      %2733 = vmatpush1.bf16.msra.mxu0 0
      %2734 = vmatprep.subr.bf16.mxu0 0
      %2735 = vmatpush1.bf16.msra.mxu0 0
      %2736 = vmatprep.subr.bf16.mxu0 0
      %2737 = vmatpush1.bf16.msra.mxu0 0
      %2738 = vmatprep.mubr.bf16.mxu0 0
      %2739 = vmatmul.mubr.bf16.gmra.mrb[0].mxu0 %v125
      %v2740 = vpop.f32.mrb[0].mxu0
      %v2741 = vadd.f32 0.0, %v2740
      %v2742 = vpop.f32.mrb[0].mxu0
      %v2743 = vpop.f32.mrb[0].mxu0
      %v2744 = vadd.f32 0.0, %v2743
      %v2745 = vpop.f32.mrb[0].mxu0
      %2746 = vdwg.mxu0
      %v2747 = vpack.c.bf16 %v2744, %v2741
      %2748 = vmatprep.subr.bf16.mxu0 0
      %2749 = vmatpush1.bf16.msra.mxu0 %v84
      %2750 = vmatprep.subr.bf16.mxu0 0
      %2751 = vmatpush1.bf16.msra.mxu0 %v85
      %2752 = vmatprep.subr.bf16.mxu0 0
      %2753 = vmatpush1.bf16.msra.mxu0 %v86
      %2754 = vmatprep.subr.bf16.mxu0 0
      %2755 = vmatpush1.bf16.msra.mxu0 %v87
      %2756 = vmatprep.subr.bf16.mxu0 0
      %2757 = vmatpush1.bf16.msra.mxu0 %v88
      %2758 = vmatprep.subr.bf16.mxu0 0
      %2759 = vmatpush1.bf16.msra.mxu0 %v89
      %2760 = vmatprep.subr.bf16.mxu0 0
      %2761 = vmatpush1.bf16.msra.mxu0 %v90
      %2762 = vmatprep.subr.bf16.mxu0 0
      %2763 = vmatpush1.bf16.msra.mxu0 %v91
      %2764 = vmatprep.subr.bf16.mxu0 0
      %2765 = vmatpush1.bf16.msra.mxu0 0
      %2766 = vmatprep.subr.bf16.mxu0 0
      %2767 = vmatpush1.bf16.msra.mxu0 0
      %2768 = vmatprep.subr.bf16.mxu0 0
      %2769 = vmatpush1.bf16.msra.mxu0 0
      %2770 = vmatprep.subr.bf16.mxu0 0
      %2771 = vmatpush1.bf16.msra.mxu0 0
      %2772 = vmatprep.subr.bf16.mxu0 0
      %2773 = vmatpush1.bf16.msra.mxu0 0
      %2774 = vmatprep.subr.bf16.mxu0 0
      %2775 = vmatpush1.bf16.msra.mxu0 0
      %2776 = vmatprep.subr.bf16.mxu0 0
      %2777 = vmatpush1.bf16.msra.mxu0 0
      %2778 = vmatprep.subr.bf16.mxu0 0
      %2779 = vmatpush1.bf16.msra.mxu0 0
      %2780 = vmatprep.mubr.bf16.mxu0 0
      %2781 = vmatmul.mubr.bf16.gmra.mrb[0].mxu0 %v2747
      %v2782 = vpop.f32.mrb[0].mxu0
      %v2783 = vadd.f32 %v97, %v2782
      %v2784 = vpop.f32.mrb[0].mxu0
      %v2785 = vpop.f32.mrb[0].mxu0
      %v2786 = vadd.f32 %v97, %v2785
      %v2787 = vpop.f32.mrb[0].mxu0
      %2788 = vdwg.mxu0
      %v2789 = vtanh.pop %v2783
      %v2790 = vtanh.pop %v2786
      %v2791 = vmul.f32 %v212, %v2789
      %v2792 = vmul.f32 %v212, %v2790
      %v2793 = vadd.f32 %v2703, %v2791
      %v2794 = vadd.f32 %v2704, %v2792
      %v2795 = vpack.c.bf16 %v2794, %v2793
      %2796 = vmatprep.subr.bf16.mxu0 0
      %2797 = vmatpush1.bf16.msra.mxu0 %v2795
      %2798 = vmatprep.subr.bf16.mxu0 0
      %2799 = vmatpush1.bf16.msra.mxu0 0
      %2800 = vmatprep.subr.bf16.mxu0 0
      %2801 = vmatpush1.bf16.msra.mxu0 0
      %2802 = vmatprep.subr.bf16.mxu0 0
      %2803 = vmatpush1.bf16.msra.mxu0 0
      %2804 = vmatprep.subr.bf16.mxu0 0
      %2805 = vmatpush1.bf16.msra.mxu0 0
      %2806 = vmatprep.subr.bf16.mxu0 0
      %2807 = vmatpush1.bf16.msra.mxu0 0
      %2808 = vmatprep.subr.bf16.mxu0 0
      %2809 = vmatpush1.bf16.msra.mxu0 0
      %2810 = vmatprep.subr.bf16.mxu0 0
      %2811 = vmatpush1.bf16.msra.mxu0 0
      %2812 = vmatprep.subr.bf16.mxu0 0
      %2813 = vmatpush1.bf16.msra.mxu0 0
      %2814 = vmatprep.subr.bf16.mxu0 0
      %2815 = vmatpush1.bf16.msra.mxu0 0
      %2816 = vmatprep.subr.bf16.mxu0 0
      %2817 = vmatpush1.bf16.msra.mxu0 0
      %2818 = vmatprep.subr.bf16.mxu0 0
      %2819 = vmatpush1.bf16.msra.mxu0 0
      %2820 = vmatprep.subr.bf16.mxu0 0
      %2821 = vmatpush1.bf16.msra.mxu0 0
      %2822 = vmatprep.subr.bf16.mxu0 0
      %2823 = vmatpush1.bf16.msra.mxu0 0
      %2824 = vmatprep.subr.bf16.mxu0 0
      %2825 = vmatpush1.bf16.msra.mxu0 0
      %2826 = vmatprep.subr.bf16.mxu0 0
      %2827 = vmatpush1.bf16.msra.mxu0 0
      %2828 = vmatprep.mubr.bf16.mxu0 0
      %2829 = vmatmul.mubr.bf16.gmra.mrb[0].mxu0 %v125
      %v2830 = vpop.f32.mrb[0].mxu0
      %v2831 = vadd.f32 0.0, %v2830
      %v2832 = vpop.f32.mrb[0].mxu0
      %v2833 = vpop.f32.mrb[0].mxu0
      %v2834 = vadd.f32 0.0, %v2833
      %v2835 = vpop.f32.mrb[0].mxu0
      %2836 = vdwg.mxu0
      %v2837 = vpack.c.bf16 %v2834, %v2831
      %2838 = vmatprep.subr.bf16.mxu0 0
      %2839 = vmatpush1.bf16.msra.mxu0 %v84
      %2840 = vmatprep.subr.bf16.mxu0 0
      %2841 = vmatpush1.bf16.msra.mxu0 %v85
      %2842 = vmatprep.subr.bf16.mxu0 0
      %2843 = vmatpush1.bf16.msra.mxu0 %v86
      %2844 = vmatprep.subr.bf16.mxu0 0
      %2845 = vmatpush1.bf16.msra.mxu0 %v87
      %2846 = vmatprep.subr.bf16.mxu0 0
      %2847 = vmatpush1.bf16.msra.mxu0 %v88
      %2848 = vmatprep.subr.bf16.mxu0 0
      %2849 = vmatpush1.bf16.msra.mxu0 %v89
      %2850 = vmatprep.subr.bf16.mxu0 0
      %2851 = vmatpush1.bf16.msra.mxu0 %v90
      %2852 = vmatprep.subr.bf16.mxu0 0
      %2853 = vmatpush1.bf16.msra.mxu0 %v91
      %2854 = vmatprep.subr.bf16.mxu0 0
      %2855 = vmatpush1.bf16.msra.mxu0 0
      %2856 = vmatprep.subr.bf16.mxu0 0
      %2857 = vmatpush1.bf16.msra.mxu0 0
      %2858 = vmatprep.subr.bf16.mxu0 0
      %2859 = vmatpush1.bf16.msra.mxu0 0
      %2860 = vmatprep.subr.bf16.mxu0 0
      %2861 = vmatpush1.bf16.msra.mxu0 0
      %2862 = vmatprep.subr.bf16.mxu0 0
      %2863 = vmatpush1.bf16.msra.mxu0 0
      %2864 = vmatprep.subr.bf16.mxu0 0
      %2865 = vmatpush1.bf16.msra.mxu0 0
      %2866 = vmatprep.subr.bf16.mxu0 0
      %2867 = vmatpush1.bf16.msra.mxu0 0
      %2868 = vmatprep.subr.bf16.mxu0 0
      %2869 = vmatpush1.bf16.msra.mxu0 0
      %2870 = vmatprep.mubr.bf16.mxu0 0
      %2871 = vmatmul.mubr.bf16.gmra.mrb[0].mxu0 %v2837
      %v2872 = vpop.f32.mrb[0].mxu0
      %v2873 = vadd.f32 %v97, %v2872
      %v2874 = vpop.f32.mrb[0].mxu0
      %v2875 = vpop.f32.mrb[0].mxu0
      %v2876 = vadd.f32 %v97, %v2875
      %v2877 = vpop.f32.mrb[0].mxu0
      %2878 = vdwg.mxu0
      %v2879 = vtanh.pop %v2873
      %v2880 = vtanh.pop %v2876
      %v2881 = vmul.f32 %v212, %v2879
      %v2882 = vmul.f32 %v212, %v2880
      %v2883 = vadd.f32 %v2703, %v2881
      %v2884 = vadd.f32 %v2704, %v2882
      %v2885 = vpack.c.bf16 %v2884, %v2883
      %2886 = vmatprep.subr.bf16.mxu0 0
      %2887 = vmatpush1.bf16.msra.mxu0 %v2885
      %2888 = vmatprep.subr.bf16.mxu0 0
      %2889 = vmatpush1.bf16.msra.mxu0 0
      %2890 = vmatprep.subr.bf16.mxu0 0
      %2891 = vmatpush1.bf16.msra.mxu0 0
      %2892 = vmatprep.subr.bf16.mxu0 0
      %2893 = vmatpush1.bf16.msra.mxu0 0
      %2894 = vmatprep.subr.bf16.mxu0 0
      %2895 = vmatpush1.bf16.msra.mxu0 0
      %2896 = vmatprep.subr.bf16.mxu0 0
      %2897 = vmatpush1.bf16.msra.mxu0 0
      %2898 = vmatprep.subr.bf16.mxu0 0
      %2899 = vmatpush1.bf16.msra.mxu0 0
      %2900 = vmatprep.subr.bf16.mxu0 0
      %2901 = vmatpush1.bf16.msra.mxu0 0
      %2902 = vmatprep.subr.bf16.mxu0 0
      %2903 = vmatpush1.bf16.msra.mxu0 0
      %2904 = vmatprep.subr.bf16.mxu0 0
      %2905 = vmatpush1.bf16.msra.mxu0 0
      %2906 = vmatprep.subr.bf16.mxu0 0
      %2907 = vmatpush1.bf16.msra.mxu0 0
      %2908 = vmatprep.subr.bf16.mxu0 0
      %2909 = vmatpush1.bf16.msra.mxu0 0
      %2910 = vmatprep.subr.bf16.mxu0 0
      %2911 = vmatpush1.bf16.msra.mxu0 0
      %2912 = vmatprep.subr.bf16.mxu0 0
      %2913 = vmatpush1.bf16.msra.mxu0 0
      %2914 = vmatprep.subr.bf16.mxu0 0
      %2915 = vmatpush1.bf16.msra.mxu0 0
      %2916 = vmatprep.subr.bf16.mxu0 0
      %2917 = vmatpush1.bf16.msra.mxu0 0
      %2918 = vmatprep.mubr.bf16.mxu0 0
      %2919 = vmatmul.mubr.bf16.gmra.mrb[0].mxu0 %v125
      %v2920 = vpop.f32.mrb[0].mxu0
      %v2921 = vadd.f32 0.0, %v2920
      %v2922 = vpop.f32.mrb[0].mxu0
      %v2923 = vpop.f32.mrb[0].mxu0
      %v2924 = vadd.f32 0.0, %v2923
      %v2925 = vpop.f32.mrb[0].mxu0
      %2926 = vdwg.mxu0
      %v2927 = vpack.c.bf16 %v2924, %v2921
      %2928 = vmatprep.subr.bf16.mxu0 0
      %2929 = vmatpush1.bf16.msra.mxu0 %v84
      %2930 = vmatprep.subr.bf16.mxu0 0
      %2931 = vmatpush1.bf16.msra.mxu0 %v85
      %2932 = vmatprep.subr.bf16.mxu0 0
      %2933 = vmatpush1.bf16.msra.mxu0 %v86
      %2934 = vmatprep.subr.bf16.mxu0 0
      %2935 = vmatpush1.bf16.msra.mxu0 %v87
      %2936 = vmatprep.subr.bf16.mxu0 0
      %2937 = vmatpush1.bf16.msra.mxu0 %v88
      %2938 = vmatprep.subr.bf16.mxu0 0
      %2939 = vmatpush1.bf16.msra.mxu0 %v89
      %2940 = vmatprep.subr.bf16.mxu0 0
      %2941 = vmatpush1.bf16.msra.mxu0 %v90
      %2942 = vmatprep.subr.bf16.mxu0 0
      %2943 = vmatpush1.bf16.msra.mxu0 %v91
      %2944 = vmatprep.subr.bf16.mxu0 0
      %2945 = vmatpush1.bf16.msra.mxu0 0
      %2946 = vmatprep.subr.bf16.mxu0 0
      %2947 = vmatpush1.bf16.msra.mxu0 0
      %2948 = vmatprep.subr.bf16.mxu0 0
      %2949 = vmatpush1.bf16.msra.mxu0 0
      %2950 = vmatprep.subr.bf16.mxu0 0
      %2951 = vmatpush1.bf16.msra.mxu0 0
      %2952 = vmatprep.subr.bf16.mxu0 0
      %2953 = vmatpush1.bf16.msra.mxu0 0
      %2954 = vmatprep.subr.bf16.mxu0 0
      %2955 = vmatpush1.bf16.msra.mxu0 0
      %2956 = vmatprep.subr.bf16.mxu0 0
      %2957 = vmatpush1.bf16.msra.mxu0 0
      %2958 = vmatprep.subr.bf16.mxu0 0
      %2959 = vmatpush1.bf16.msra.mxu0 0
      %2960 = vmatprep.mubr.bf16.mxu0 0
      %2961 = vmatmul.mubr.bf16.gmra.mrb[0].mxu0 %v2927
      %v2962 = vpop.f32.mrb[0].mxu0
      %v2963 = vadd.f32 %v97, %v2962
      %v2964 = vpop.f32.mrb[0].mxu0
      %v2965 = vpop.f32.mrb[0].mxu0
      %v2966 = vadd.f32 %v97, %v2965
      %v2967 = vpop.f32.mrb[0].mxu0
      %2968 = vdwg.mxu0
      %v2969 = vtanh.pop %v2963
      %v2970 = vtanh.pop %v2966
      %v2971 = vmul.f32 %v393, %v2969
      %v2972 = vmul.f32 %v393, %v2970
      %v2973 = vadd.f32 %v2703, %v2971
      %v2974 = vadd.f32 %v2704, %v2972
      %v2975 = vpack.c.bf16 %v2974, %v2973
      %2976 = vmatprep.subr.bf16.mxu0 0
      %2977 = vmatpush1.bf16.msra.mxu0 %v2975
      %2978 = vmatprep.subr.bf16.mxu0 0
      %2979 = vmatpush1.bf16.msra.mxu0 0
      %2980 = vmatprep.subr.bf16.mxu0 0
      %2981 = vmatpush1.bf16.msra.mxu0 0
      %2982 = vmatprep.subr.bf16.mxu0 0
      %2983 = vmatpush1.bf16.msra.mxu0 0
      %2984 = vmatprep.subr.bf16.mxu0 0
      %2985 = vmatpush1.bf16.msra.mxu0 0
      %2986 = vmatprep.subr.bf16.mxu0 0
      %2987 = vmatpush1.bf16.msra.mxu0 0
      %2988 = vmatprep.subr.bf16.mxu0 0
      %2989 = vmatpush1.bf16.msra.mxu0 0
      %2990 = vmatprep.subr.bf16.mxu0 0
      %2991 = vmatpush1.bf16.msra.mxu0 0
      %2992 = vmatprep.subr.bf16.mxu0 0
      %2993 = vmatpush1.bf16.msra.mxu0 0
      %2994 = vmatprep.subr.bf16.mxu0 0
      %2995 = vmatpush1.bf16.msra.mxu0 0
      %2996 = vmatprep.subr.bf16.mxu0 0
      %2997 = vmatpush1.bf16.msra.mxu0 0
      %2998 = vmatprep.subr.bf16.mxu0 0
      %2999 = vmatpush1.bf16.msra.mxu0 0
      %3000 = vmatprep.subr.bf16.mxu0 0
      %3001 = vmatpush1.bf16.msra.mxu0 0
      %3002 = vmatprep.subr.bf16.mxu0 0
      %3003 = vmatpush1.bf16.msra.mxu0 0
      %3004 = vmatprep.subr.bf16.mxu0 0
      %3005 = vmatpush1.bf16.msra.mxu0 0
      %3006 = vmatprep.subr.bf16.mxu0 0
      %3007 = vmatpush1.bf16.msra.mxu0 0
      %3008 = vmatprep.mubr.bf16.mxu0 0
      %3009 = vmatmul.mubr.bf16.gmra.mrb[0].mxu0 %v125
      %v3010 = vpop.f32.mrb[0].mxu0
      %v3011 = vadd.f32 0.0, %v3010
      %v3012 = vpop.f32.mrb[0].mxu0
      %v3013 = vpop.f32.mrb[0].mxu0
      %v3014 = vadd.f32 0.0, %v3013
      %v3015 = vpop.f32.mrb[0].mxu0
      %3016 = vdwg.mxu0
      %v3017 = vpack.c.bf16 %v3014, %v3011
      %3018 = vmatprep.subr.bf16.mxu0 0
      %3019 = vmatpush1.bf16.msra.mxu0 %v84
      %3020 = vmatprep.subr.bf16.mxu0 0
      %3021 = vmatpush1.bf16.msra.mxu0 %v85
      %3022 = vmatprep.subr.bf16.mxu0 0
      %3023 = vmatpush1.bf16.msra.mxu0 %v86
      %3024 = vmatprep.subr.bf16.mxu0 0
      %3025 = vmatpush1.bf16.msra.mxu0 %v87
      %3026 = vmatprep.subr.bf16.mxu0 0
      %3027 = vmatpush1.bf16.msra.mxu0 %v88
      %3028 = vmatprep.subr.bf16.mxu0 0
      %3029 = vmatpush1.bf16.msra.mxu0 %v89
      %3030 = vmatprep.subr.bf16.mxu0 0
      %3031 = vmatpush1.bf16.msra.mxu0 %v90
      %3032 = vmatprep.subr.bf16.mxu0 0
      %3033 = vmatpush1.bf16.msra.mxu0 %v91
      %3034 = vmatprep.subr.bf16.mxu0 0
      %3035 = vmatpush1.bf16.msra.mxu0 0
      %3036 = vmatprep.subr.bf16.mxu0 0
      %3037 = vmatpush1.bf16.msra.mxu0 0
      %3038 = vmatprep.subr.bf16.mxu0 0
      %3039 = vmatpush1.bf16.msra.mxu0 0
      %3040 = vmatprep.subr.bf16.mxu0 0
      %3041 = vmatpush1.bf16.msra.mxu0 0
      %3042 = vmatprep.subr.bf16.mxu0 0
      %3043 = vmatpush1.bf16.msra.mxu0 0
      %3044 = vmatprep.subr.bf16.mxu0 0
      %3045 = vmatpush1.bf16.msra.mxu0 0
      %3046 = vmatprep.subr.bf16.mxu0 0
      %3047 = vmatpush1.bf16.msra.mxu0 0
      %3048 = vmatprep.subr.bf16.mxu0 0
      %3049 = vmatpush1.bf16.msra.mxu0 0
      %3050 = vmatprep.mubr.bf16.mxu0 0
      %3051 = vmatmul.mubr.bf16.gmra.mrb[0].mxu0 %v3017
      %v3052 = vpop.f32.mrb[0].mxu0
      %v3053 = vadd.f32 %v97, %v3052
      %v3054 = vpop.f32.mrb[0].mxu0
      %v3055 = vpop.f32.mrb[0].mxu0
      %v3056 = vadd.f32 %v97, %v3055
      %v3057 = vpop.f32.mrb[0].mxu0
      %3058 = vdwg.mxu0
      %v3059 = vtanh.pop %v3053
      %v3060 = vtanh.pop %v3056
      %v3061 = vadd.f32 %v2879, %v2969
      %v3062 = vadd.f32 %v2880, %v2970
      %v3063 = vmul.f32 %v3061, 2.0
      %v3064 = vmul.f32 %v3062, 2.0
      %v3065 = vadd.f32 %v2789, %v3063
      %v3066 = vadd.f32 %v2790, %v3064
      %v3067 = vadd.f32 %v3065, %v3059
      %v3068 = vadd.f32 %v3066, %v3060
      %v3069 = vmul.f32 %v492, %v3067
      %v3070 = vmul.f32 %v492, %v3068
      %v3071 = vadd.f32 %v2703, %v3069
      %v3072 = vadd.f32 %v2704, %v3070
      %s3073 = smul.u32 %s112, 16
      %s3074 = scalar_lea.vmem [#allocation10], %s3073
      %3075 = vst [vmem:[%s3074] sm:$0xff] %v3071
      %3076 = vst [vmem:[%s3074 + $0x8] sm:$0xff] %v3072
    $region34: #{tpu_custom_call.1} parent=1 // loop_footer
      %s108 = sadd.s32 1, %s104
    $region35: #{tpu_custom_call.1} parent=1 // loop_footer_branch
      %103 = sbr.rel target = $region31
    $region36: #{tpu_custom_call.1} parent=1 // loop_exit
      _
    // Predicated region
    $region37: #{tpu_custom_call.1} parent=1 // pred_check
      _
    $region38: #{tpu_custom_call.1} parent=1 // pred_check_branch
      %3078 = sbr.rel (0) target = $region40
    $region39: #{tpu_custom_call.1} parent=1 // pred_region
      %s3080 = ssub.s32 2048, 2048
      %3081 = vsyncadd [#allocation6], %s3080
      %s3082 = sshll.u32 [#allocation10], 4
      %s3083 = int_to_ptr.vmem [resolvable:$true] %s3082
      %3088 = dma.vmem_to_hbm [thread:$0]  %s3083, 2048, %s5, [#allocation6], 128, 128, 8
    $region40: #{tpu_custom_call.1} parent=1 // pred_fallthru
      _
    // Predicated region
    $region41: #{tpu_custom_call.1} parent=1 // pred_check
      _
    $region42: #{tpu_custom_call.1} parent=1 // pred_check_branch
      %3090 = sbr.rel (0) target = $region44
    $region43: #{tpu_custom_call.1} parent=1 // pred_region
      %3091 = dma.done [#allocation6], 2048
    $region44: #{tpu_custom_call.1} parent=1 // pred_fallthru
      _
    %3092 = vsyncpa [#allocation5], 1
    %3093 = vsyncpa [#allocation8], 1
    %3094 = vsyncpa [#allocation6], 1

</llo_original>
